<compile_context>
chip_gen: v7x
topology: tpu7x:2x2x1
jax: 0.10.0
libtpu: 0.0.40
codegen_flags: <defaults>
</compile_context>

<pallas_src>
import functools
import math

import jax
import jax.numpy as jnp
from jax import lax
from jax.experimental import pallas as pl
from jax.experimental.pallas import tpu as pltpu

_LANE = 128
_SUBLANE = 8

# Safeguarded-Newton iteration counts.  Fast phase runs in bf16 on v6e/v7x and
# f32 elsewhere; the polish phase always runs fully in f32 with a freshly reset
# bracket so the final answer is the f32 fixed point regardless of fast-phase
# precision.  Total cost is linear in these counts.
_FAST_ITERS = 8
_POLISH_ITERS = 4


def _ceil_to(a, m):
    return ((a + m - 1) // m) * m


@functools.lru_cache(maxsize=None)
def _tpu_generation():
    try:
        kind = jax.devices()[0].device_kind.lower()
    except Exception:
        return None
    if "v5" in kind:
        return 5
    if "v6" in kind:
        return 6
    if "v7" in kind or "tpu7" in kind:
        return 7
    return None


def _hw_config():
    gen = _tpu_generation()
    if gen in (5, 6):
        # 128 MiB physical VMEM: roomier tiles / scoped limit; bf16 VPU only on v6e.
        return dict(tile_budget=2 << 20, rb_cap=8192, vmem_limit=64 << 20,
                    use_bf16=(gen == 6), prefer_even=False)
    if gen == 7:
        # 64 MiB VMEM per TensorCore, 2 TCs: smaller tiles, even block counts.
        return dict(tile_budget=1 << 20, rb_cap=4096, vmem_limit=40 << 20,
                    use_bf16=True, prefer_even=True)
    # Unknown generation: conservative.
    return dict(tile_budget=1 << 20, rb_cap=4096, vmem_limit=40 << 20,
                use_bf16=False, prefer_even=True)


def _pool_kernel(alpha_ref, x_ref, y_ref, *, hw, reduce_axis, fast_iters,
                 polish_iters, use_bf16):
    """Per-row argmin_y sum_j phi(y - x_j, alpha) via bracketed Newton.

    x_ref holds one tile with the pooled rows on the non-reduced axis and the
    (zero-padded) spatial locations on `reduce_axis`.  Every output row depends
    only on its own input row/column (lane independence), so zero-padded rows /
    columns produce finite garbage that the wrapper slices off.
    """
    alpha = alpha_ref[0].astype(jnp.float32)
    inv_alpha = 1.0 / alpha                           # hoisted out of the loop
    x = x_ref[...].astype(jnp.float32)

    padded = x.shape[reduce_axis] != hw               # static (trace-time)
    if padded:
        # Explicit zero padding added by the wrapper: mask it out of the
        # grad/hess sums.  It contributes 0 to the mean numerator and only
        # widens the [min,max] bracket, which remains a valid bracket of y*.
        idx = lax.broadcasted_iota(jnp.int32, x.shape, reduce_axis)
        mask_f32 = (idx < hw).astype(jnp.float32)
    else:
        mask_f32 = None

    # Convex-branch init (matches the reference): mean over true locations.
    y0 = jnp.sum(x, axis=reduce_axis, keepdims=True) * (1.0 / hw)
    lo0 = jnp.min(x, axis=reduce_axis, keepdims=True)
    hi0 = jnp.max(x, axis=reduce_axis, keepdims=True)

    def make_step(xe, maske, inv_a):
        def step(_, carry):
            y, lo, hi = carry
            z = y.astype(xe.dtype) - xe                              # broadcast
            t = z * inv_a
            w = lax.rsqrt(1.0 + t * t)                               # (1+t^2)^-1/2
            if maske is not None:
                w = w * maske
            grad = jnp.sum((z * w).astype(jnp.float32),
                           axis=reduce_axis, keepdims=True)          # sum phi'
            hess = jnp.sum((w * w * w).astype(jnp.float32),
                           axis=reduce_axis, keepdims=True)          # sum phi''>0
            # f strictly convex => f' monotone: shrink bracket by sign of grad.
            lo = jnp.where(grad < 0.0, y, lo)
            hi = jnp.where(grad > 0.0, y, hi)
            y_n = y - grad / hess                 # exact divide: (1,rb) is tiny
            # Bisect whenever Newton leaves the bracket (catches hess->0
            # underflow / inf / nan steps).  Non-strict so exact solutions at a
            # bracket endpoint (e.g. constant rows) are accepted.
            ok = jnp.logical_and(y_n >= lo, y_n <= hi)
            y = jnp.where(ok, y_n, 0.5 * (lo + hi))
            return y, lo, hi
        return step

    # Fast phase: bf16 element math on bf16-capable VPUs, f32 state/accumulate.
    if use_bf16:
        xe = x.astype(jnp.bfloat16)
        maske = None if mask_f32 is None else mask_f32.astype(jnp.bfloat16)
        inv_a = inv_alpha.astype(jnp.bfloat16)
    else:
        xe, maske, inv_a = x, mask_f32, inv_alpha
    y, _, _ = lax.fori_loop(0, fast_iters, make_step(xe, maske, inv_a),
                            (y0, lo0, hi0), unroll=True)

    # Polish phase: full f32 with a freshly reset bracket (the bf16-phase
    # bracket can be off by the bf16 gradient rounding; resetting keeps y*
    # strictly inside so Newton is never wrongly rejected near convergence).
    y, _, _ = lax.fori_loop(0, polish_iters,
                            make_step(x, mask_f32, inv_alpha),
                            (y, lo0, hi0), unroll=True)

    y_ref[...] = y.astype(y_ref.dtype)


@functools.partial(jax.jit, static_argnames=("max_rows_per_block",))
def robust_global_pool2d(x, alpha, *, max_rows_per_block=None):
    """Forward of RobustGlobalPool2d (pseudo-Huber, convex branch).

    x     : (..., H, W) responses (the module's NCHW case is (B, C, H, W)).
    alpha : (1,) strictly-positive robust-penalty scale (module buffer).
    """
    # TODO(synk): non-convex penalties (Welsch / truncated quadratic: dual
    # mean/median starts + objective comparison) are not implemented; the
    # pseudo-Huber penalty takes the module's convex branch.
    assert x.ndim >= 2, "input must be at least 2D"
    lead = x.shape[:-2]
    H, W = x.shape[-2], x.shape[-1]
    N, HW = math.prod(lead), H * W
    x2d = x.reshape(N, HW)

    cfg = _hw_config()
    smem_alpha = pl.BlockSpec(memory_space=pltpu.SMEM)
    compiler_params = pltpu.CompilerParams(
        dimension_semantics=("parallel",),      # independent row blocks -> 2 TCs
        vmem_limit_bytes=cfg["vmem_limit"],
        allow_input_fusion=[1],                 # let XLA fuse pad/transpose into
    )                                           # the operand read when legal

    kernel_kwargs = dict(hw=HW, fast_iters=_FAST_ITERS,
                         polish_iters=_POLISH_ITERS, use_bf16=cfg["use_bf16"])

    # Lane-dense ("rows on 128 lanes, HW on sublanes") whenever one
    # (HW_pad, 128) f32 column block fits the budget.  Sizing uses 4 B/elem
    # because the in-kernel temporaries are f32 regardless of the input dtype.
    hw_pad8 = _ceil_to(HW, _SUBLANE)
    dense_budget = max(cfg["tile_budget"], 2 << 20)
    use_rows_on_lanes = hw_pad8 * 4 * _LANE <= dense_budget

    if use_rows_on_lanes:
        rb = (dense_budget // (4 * hw_pad8)) // _LANE * _LANE
        rb = max(_LANE, min(cfg["rb_cap"], rb))
        if max_rows_per_block is not None:
            rb = max(_LANE, min(rb, _ceil_to(max_rows_per_block, _LANE)))
        if rb >= N:
            if cfg["prefer_even"] and N > _LANE:
                rb = _ceil_to(pl.cdiv(N, 2), _LANE)      # >= 2 blocks for 2 TCs
            else:
                rb = _ceil_to(N, _LANE)
        nb = pl.cdiv(N, rb)
        if cfg["prefer_even"] and nb > 1 and nb % 2 == 1:
            rb2 = max(_LANE, _ceil_to(pl.cdiv(N, nb + 1), _LANE))
            if pl.cdiv(N, rb2) % 2 == 0:
                rb = rb2
                nb = pl.cdiv(N, rb)
        n_pad = nb * rb
        # One fused XLA copy: zero-pad rows to a full grid of blocks (no partial
        # tail blocks), zero-pad HW to a multiple of 8 sublanes (masked in the
        # kernel), and transpose so pooled rows sit on the 128-lane axis.
        xt = jnp.pad(x2d, ((0, n_pad - N), (0, hw_pad8 - HW))).T   # (hw_pad8, n_pad)
        kernel = functools.partial(_pool_kernel, reduce_axis=0, **kernel_kwargs)
        y2d = pl.pallas_call(
            kernel,
            out_shape=jax.ShapeDtypeStruct((nb, rb), x.dtype),
            grid=(nb,),
            in_specs=[
                smem_alpha,                                        # alpha (1,)
                pl.BlockSpec((hw_pad8, rb), lambda i: (0, i)),     # rows on lanes
            ],
            out_specs=pl.BlockSpec((1, rb), lambda i: (i, 0)),     # lane-dense store
            compiler_params=compiler_params,
        )(alpha, xt)
        y = y2d.reshape(-1)[:N]
    else:
        # Small-N / large-HW fallback: natural layout, HW on lanes (zero-padded
        # to a multiple of 128 and masked), pooled rows on sublanes.
        # TODO(synk): extremely large spatial maps (HW*4*8 bytes >> VMEM budget)
        # would need an HW-tiled two-level reduction; not needed for typical maps.
        hw_pad128 = _ceil_to(HW, _LANE)
        rb = (cfg["tile_budget"] // (4 * hw_pad128)) // _SUBLANE * _SUBLANE
        rb = max(_SUBLANE, min(1024, rb))
        if rb >= N:
            rb = _ceil_to(N, _SUBLANE)
        nb = pl.cdiv(N, rb)
        n_pad = nb * rb
        xp = jnp.pad(x2d, ((0, n_pad - N), (0, hw_pad128 - HW)))   # (n_pad, hw_pad128)
        kernel = functools.partial(_pool_kernel, reduce_axis=1, **kernel_kwargs)
        y2d = pl.pallas_call(
            kernel,
            out_shape=jax.ShapeDtypeStruct((n_pad, 1), x.dtype),
            grid=(nb,),
            in_specs=[
                smem_alpha,
                pl.BlockSpec((rb, hw_pad128), lambda i: (i, 0)),
            ],
            out_specs=pl.BlockSpec((rb, 1), lambda i: (i, 0)),
            compiler_params=compiler_params,
        )(alpha, xp)
        y = y2d.reshape(-1)[:N]

    return y.reshape(lead)


def _reference_pool(x, alpha, iters=50):
    """Pure-JAX reference: same convex problem solved to high precision."""
    lead = x.shape[:-2]
    hw = x.shape[-2] * x.shape[-1]
    xf = x.reshape(-1, hw).astype(jnp.float32)
    a = alpha.astype(jnp.float32)[0]
    y = jnp.mean(xf, axis=-1, keepdims=True)
    lo = jnp.min(xf, axis=-1, keepdims=True)
    hi = jnp.max(xf, axis=-1, keepdims=True)
    for _ in range(iters):
        z = y - xf
        w = 1.0 / jnp.sqrt(1.0 + (z / a) ** 2)
        g = jnp.sum(z * w, axis=-1, keepdims=True)
        h = jnp.sum(w ** 3, axis=-1, keepdims=True)
        lo = jnp.where(g < 0.0, y, lo)
        hi = jnp.where(g > 0.0, y, hi)
        yn = y - g / h
        ok = (yn >= lo) & (yn <= hi)
        y = jnp.where(ok, yn, 0.5 * (lo + hi))
    return y[:, 0].reshape(lead)


if __name__ == "__main__":
    # Deterministic module buffer: register_buffer('alpha', torch.tensor([1.0]))
    alpha = jnp.array([1.0], dtype=jnp.float32)
    key = jax.random.PRNGKey(0)
    k1, k2, k3, k4 = jax.random.split(key, 4)

    def check(name, xin, **kw):
        yk = robust_global_pool2d(xin, alpha, **kw)
        jax.block_until_ready(yk)
        yr = _reference_pool(xin, alpha)
        assert yk.shape == xin.shape[:-2], (name, yk.shape)
        assert bool(jnp.all(jnp.isfinite(yk))), name
        err = float(jnp.max(jnp.abs(yk - yr)))
        assert bool(jnp.allclose(yk, yr, atol=1e-3, rtol=1e-3)), (name, err)

    # 1) Module-typical NCHW shape; heavy outliers so robust pool != mean.
    x1 = jax.random.normal(k1, (2, 4, 16, 16), dtype=jnp.float32)
    x1 = x1.at[:, :, 0, 0].set(25.0)
    check("nchw_16x16", x1)

    # 2) Many pooled rows with a tiny 7x7 map (HW=49, not a multiple of 8):
    #    exercises the sublane-padded, masked, lane-dense path that failed before.
    x2 = jax.random.normal(k2, (2, 128, 7, 7), dtype=jnp.float32)
    x2 = x2.at[:, :, 0, 0].add(10.0)
    check("lane_dense_7x7", x2)

    # 3) Multi-block grid with a padded tail (N=300, not a multiple of rb=128).
    x3 = jax.random.normal(k3, (3, 100, 7, 7), dtype=jnp.float32)
    x3 = x3.at[:, :, 3, 3].add(-15.0)
    check("tail_blocks", x3, max_rows_per_block=128)

    # 4) Few rows with a large, unaligned spatial map: natural-layout fallback.
    x4 = jax.random.normal(k4, (1, 4, 95, 97), dtype=jnp.float32)
    check("fallback_large_hw", x4)

    print("KERNEL_OK")
</pallas_src>

<mosaic_0001>
module attributes {stable_mosaic.version = 11 : i64} {
  func.func @_pool_kernel(%arg0: i32, %arg1: memref<1xf32, #tpu.memory_space<smem>>, %arg2: memref<256x128xf32, #tpu.memory_space<vmem>>, %arg3: memref<1x128xf32, #tpu.memory_space<vmem>>) attributes {dimension_semantics = [#tpu.dimension_semantics<parallel>], iteration_bounds = array<i64: 1>, scalar_prefetch = 0 : i64, scratch_operands = 0 : i64, tpu.core_type = #tpu.core_type<tc>, window_params = [{transform_indices = @transform_0, window_bounds = array<i64: 1>}, {transform_indices = @transform_1, window_bounds = array<i64: 256, 128>}, {transform_indices = @transform_2, window_bounds = array<i64: 1, 128>}]} {
    %c0 = arith.constant 0 : index
    %0 = memref.load %arg1[%c0] : memref<1xf32, #tpu.memory_space<smem>>
    %cst = arith.constant 1.000000e+00 : f32
    %1 = arith.divf %cst, %0 : f32
    %c0_0 = arith.constant 0 : index
    %c0_1 = arith.constant 0 : index
    %2 = vector.load %arg2[%c0_0, %c0_1] : memref<256x128xf32, #tpu.memory_space<vmem>>, vector<256x128xf32>
    %cst_2 = arith.constant dense<0.000000e+00> : vector<128xf32>
    %3 = vector.multi_reduction <add>, %2, %cst_2 [0] : vector<256x128xf32> to vector<128xf32>
    %4 = vector.shape_cast %3 : vector<128xf32> to vector<1x128xf32>
    %cst_3 = arith.constant 3.906250e-03 : f32
    %5 = vector.broadcast %cst_3 : f32 to vector<1x128xf32>
    %6 = arith.mulf %4, %5 : vector<1x128xf32>
    %cst_4 = arith.constant dense<0x7F800000> : vector<128xf32>
    %7 = vector.multi_reduction <minimumf>, %2, %cst_4 [0] : vector<256x128xf32> to vector<128xf32>
    %8 = vector.shape_cast %7 : vector<128xf32> to vector<1x128xf32>
    %cst_5 = arith.constant dense<0xFF800000> : vector<128xf32>
    %9 = vector.multi_reduction <maximumf>, %2, %cst_5 [0] : vector<256x128xf32> to vector<128xf32>
    %10 = vector.shape_cast %9 : vector<128xf32> to vector<1x128xf32>
    %c0_i32 = arith.constant 0 : i32
    %11 = vector.broadcast %6 : vector<1x128xf32> to vector<256x128xf32>
    %12 = arith.subf %11, %2 : vector<256x128xf32>
    %13 = vector.broadcast %1 : f32 to vector<256x128xf32>
    %14 = arith.mulf %12, %13 : vector<256x128xf32>
    %15 = arith.mulf %14, %14 : vector<256x128xf32>
    %cst_6 = arith.constant 1.000000e+00 : f32
    %16 = vector.broadcast %cst_6 : f32 to vector<256x128xf32>
    %17 = arith.addf %16, %15 : vector<256x128xf32>
    %18 = math.rsqrt %17 : vector<256x128xf32>
    %19 = arith.mulf %12, %18 : vector<256x128xf32>
    %cst_7 = arith.constant dense<0.000000e+00> : vector<128xf32>
    %20 = vector.multi_reduction <add>, %19, %cst_7 [0] : vector<256x128xf32> to vector<128xf32>
    %21 = vector.shape_cast %20 : vector<128xf32> to vector<1x128xf32>
    %22 = arith.mulf %18, %18 : vector<256x128xf32>
    %23 = arith.mulf %22, %18 : vector<256x128xf32>
    %cst_8 = arith.constant dense<0.000000e+00> : vector<128xf32>
    %24 = vector.multi_reduction <add>, %23, %cst_8 [0] : vector<256x128xf32> to vector<128xf32>
    %25 = vector.shape_cast %24 : vector<128xf32> to vector<1x128xf32>
    %cst_9 = arith.constant 0.000000e+00 : f32
    %26 = vector.broadcast %cst_9 : f32 to vector<1x128xf32>
    %27 = arith.cmpf olt, %21, %26 : vector<1x128xf32>
    %28 = arith.select %27, %6, %8 : vector<1x128xi1>, vector<1x128xf32>
    %cst_10 = arith.constant 0.000000e+00 : f32
    %29 = vector.broadcast %cst_10 : f32 to vector<1x128xf32>
    %30 = arith.cmpf ogt, %21, %29 : vector<1x128xf32>
    %31 = arith.select %30, %6, %10 : vector<1x128xi1>, vector<1x128xf32>
    %32 = arith.divf %21, %25 : vector<1x128xf32>
    %33 = arith.subf %6, %32 : vector<1x128xf32>
    %34 = arith.cmpf oge, %33, %28 : vector<1x128xf32>
    %35 = arith.cmpf ole, %33, %31 : vector<1x128xf32>
    %36 = arith.andi %34, %35 : vector<1x128xi1>
    %37 = arith.addf %28, %31 : vector<1x128xf32>
    %cst_11 = arith.constant 5.000000e-01 : f32
    %38 = vector.broadcast %cst_11 : f32 to vector<1x128xf32>
    %39 = arith.mulf %38, %37 : vector<1x128xf32>
    %40 = arith.select %36, %33, %39 : vector<1x128xi1>, vector<1x128xf32>
    %c1_i32 = arith.constant 1 : i32
    %41 = vector.broadcast %40 : vector<1x128xf32> to vector<256x128xf32>
    %42 = arith.subf %41, %2 : vector<256x128xf32>
    %43 = vector.broadcast %1 : f32 to vector<256x128xf32>
    %44 = arith.mulf %42, %43 : vector<256x128xf32>
    %45 = arith.mulf %44, %44 : vector<256x128xf32>
    %cst_12 = arith.constant 1.000000e+00 : f32
    %46 = vector.broadcast %cst_12 : f32 to vector<256x128xf32>
    %47 = arith.addf %46, %45 : vector<256x128xf32>
    %48 = math.rsqrt %47 : vector<256x128xf32>
    %49 = arith.mulf %42, %48 : vector<256x128xf32>
    %cst_13 = arith.constant dense<0.000000e+00> : vector<128xf32>
    %50 = vector.multi_reduction <add>, %49, %cst_13 [0] : vector<256x128xf32> to vector<128xf32>
    %51 = vector.shape_cast %50 : vector<128xf32> to vector<1x128xf32>
    %52 = arith.mulf %48, %48 : vector<256x128xf32>
    %53 = arith.mulf %52, %48 : vector<256x128xf32>
    %cst_14 = arith.constant dense<0.000000e+00> : vector<128xf32>
    %54 = vector.multi_reduction <add>, %53, %cst_14 [0] : vector<256x128xf32> to vector<128xf32>
    %55 = vector.shape_cast %54 : vector<128xf32> to vector<1x128xf32>
    %cst_15 = arith.constant 0.000000e+00 : f32
    %56 = vector.broadcast %cst_15 : f32 to vector<1x128xf32>
    %57 = arith.cmpf olt, %51, %56 : vector<1x128xf32>
    %58 = arith.select %57, %40, %28 : vector<1x128xi1>, vector<1x128xf32>
    %cst_16 = arith.constant 0.000000e+00 : f32
    %59 = vector.broadcast %cst_16 : f32 to vector<1x128xf32>
    %60 = arith.cmpf ogt, %51, %59 : vector<1x128xf32>
    %61 = arith.select %60, %40, %31 : vector<1x128xi1>, vector<1x128xf32>
    %62 = arith.divf %51, %55 : vector<1x128xf32>
    %63 = arith.subf %40, %62 : vector<1x128xf32>
    %64 = arith.cmpf oge, %63, %58 : vector<1x128xf32>
    %65 = arith.cmpf ole, %63, %61 : vector<1x128xf32>
    %66 = arith.andi %64, %65 : vector<1x128xi1>
    %67 = arith.addf %58, %61 : vector<1x128xf32>
    %cst_17 = arith.constant 5.000000e-01 : f32
    %68 = vector.broadcast %cst_17 : f32 to vector<1x128xf32>
    %69 = arith.mulf %68, %67 : vector<1x128xf32>
    %70 = arith.select %66, %63, %69 : vector<1x128xi1>, vector<1x128xf32>
    %c2_i32 = arith.constant 2 : i32
    %71 = vector.broadcast %70 : vector<1x128xf32> to vector<256x128xf32>
    %72 = arith.subf %71, %2 : vector<256x128xf32>
    %73 = vector.broadcast %1 : f32 to vector<256x128xf32>
    %74 = arith.mulf %72, %73 : vector<256x128xf32>
    %75 = arith.mulf %74, %74 : vector<256x128xf32>
    %cst_18 = arith.constant 1.000000e+00 : f32
    %76 = vector.broadcast %cst_18 : f32 to vector<256x128xf32>
    %77 = arith.addf %76, %75 : vector<256x128xf32>
    %78 = math.rsqrt %77 : vector<256x128xf32>
    %79 = arith.mulf %72, %78 : vector<256x128xf32>
    %cst_19 = arith.constant dense<0.000000e+00> : vector<128xf32>
    %80 = vector.multi_reduction <add>, %79, %cst_19 [0] : vector<256x128xf32> to vector<128xf32>
    %81 = vector.shape_cast %80 : vector<128xf32> to vector<1x128xf32>
    %82 = arith.mulf %78, %78 : vector<256x128xf32>
    %83 = arith.mulf %82, %78 : vector<256x128xf32>
    %cst_20 = arith.constant dense<0.000000e+00> : vector<128xf32>
    %84 = vector.multi_reduction <add>, %83, %cst_20 [0] : vector<256x128xf32> to vector<128xf32>
    %85 = vector.shape_cast %84 : vector<128xf32> to vector<1x128xf32>
    %cst_21 = arith.constant 0.000000e+00 : f32
    %86 = vector.broadcast %cst_21 : f32 to vector<1x128xf32>
    %87 = arith.cmpf olt, %81, %86 : vector<1x128xf32>
    %88 = arith.select %87, %70, %58 : vector<1x128xi1>, vector<1x128xf32>
    %cst_22 = arith.constant 0.000000e+00 : f32
    %89 = vector.broadcast %cst_22 : f32 to vector<1x128xf32>
    %90 = arith.cmpf ogt, %81, %89 : vector<1x128xf32>
    %91 = arith.select %90, %70, %61 : vector<1x128xi1>, vector<1x128xf32>
    %92 = arith.divf %81, %85 : vector<1x128xf32>
    %93 = arith.subf %70, %92 : vector<1x128xf32>
    %94 = arith.cmpf oge, %93, %88 : vector<1x128xf32>
    %95 = arith.cmpf ole, %93, %91 : vector<1x128xf32>
    %96 = arith.andi %94, %95 : vector<1x128xi1>
    %97 = arith.addf %88, %91 : vector<1x128xf32>
    %cst_23 = arith.constant 5.000000e-01 : f32
    %98 = vector.broadcast %cst_23 : f32 to vector<1x128xf32>
    %99 = arith.mulf %98, %97 : vector<1x128xf32>
    %100 = arith.select %96, %93, %99 : vector<1x128xi1>, vector<1x128xf32>
    %c3_i32 = arith.constant 3 : i32
    %101 = vector.broadcast %100 : vector<1x128xf32> to vector<256x128xf32>
    %102 = arith.subf %101, %2 : vector<256x128xf32>
    %103 = vector.broadcast %1 : f32 to vector<256x128xf32>
    %104 = arith.mulf %102, %103 : vector<256x128xf32>
    %105 = arith.mulf %104, %104 : vector<256x128xf32>
    %cst_24 = arith.constant 1.000000e+00 : f32
    %106 = vector.broadcast %cst_24 : f32 to vector<256x128xf32>
    %107 = arith.addf %106, %105 : vector<256x128xf32>
    %108 = math.rsqrt %107 : vector<256x128xf32>
    %109 = arith.mulf %102, %108 : vector<256x128xf32>
    %cst_25 = arith.constant dense<0.000000e+00> : vector<128xf32>
    %110 = vector.multi_reduction <add>, %109, %cst_25 [0] : vector<256x128xf32> to vector<128xf32>
    %111 = vector.shape_cast %110 : vector<128xf32> to vector<1x128xf32>
    %112 = arith.mulf %108, %108 : vector<256x128xf32>
    %113 = arith.mulf %112, %108 : vector<256x128xf32>
    %cst_26 = arith.constant dense<0.000000e+00> : vector<128xf32>
    %114 = vector.multi_reduction <add>, %113, %cst_26 [0] : vector<256x128xf32> to vector<128xf32>
    %115 = vector.shape_cast %114 : vector<128xf32> to vector<1x128xf32>
    %cst_27 = arith.constant 0.000000e+00 : f32
    %116 = vector.broadcast %cst_27 : f32 to vector<1x128xf32>
    %117 = arith.cmpf olt, %111, %116 : vector<1x128xf32>
    %118 = arith.select %117, %100, %88 : vector<1x128xi1>, vector<1x128xf32>
    %cst_28 = arith.constant 0.000000e+00 : f32
    %119 = vector.broadcast %cst_28 : f32 to vector<1x128xf32>
    %120 = arith.cmpf ogt, %111, %119 : vector<1x128xf32>
    %121 = arith.select %120, %100, %91 : vector<1x128xi1>, vector<1x128xf32>
    %122 = arith.divf %111, %115 : vector<1x128xf32>
    %123 = arith.subf %100, %122 : vector<1x128xf32>
    %124 = arith.cmpf oge, %123, %118 : vector<1x128xf32>
    %125 = arith.cmpf ole, %123, %121 : vector<1x128xf32>
    %126 = arith.andi %124, %125 : vector<1x128xi1>
    %127 = arith.addf %118, %121 : vector<1x128xf32>
    %cst_29 = arith.constant 5.000000e-01 : f32
    %128 = vector.broadcast %cst_29 : f32 to vector<1x128xf32>
    %129 = arith.mulf %128, %127 : vector<1x128xf32>
    %130 = arith.select %126, %123, %129 : vector<1x128xi1>, vector<1x128xf32>
    %c4_i32 = arith.constant 4 : i32
    %131 = vector.broadcast %130 : vector<1x128xf32> to vector<256x128xf32>
    %132 = arith.subf %131, %2 : vector<256x128xf32>
    %133 = vector.broadcast %1 : f32 to vector<256x128xf32>
    %134 = arith.mulf %132, %133 : vector<256x128xf32>
    %135 = arith.mulf %134, %134 : vector<256x128xf32>
    %cst_30 = arith.constant 1.000000e+00 : f32
    %136 = vector.broadcast %cst_30 : f32 to vector<256x128xf32>
    %137 = arith.addf %136, %135 : vector<256x128xf32>
    %138 = math.rsqrt %137 : vector<256x128xf32>
    %139 = arith.mulf %132, %138 : vector<256x128xf32>
    %cst_31 = arith.constant dense<0.000000e+00> : vector<128xf32>
    %140 = vector.multi_reduction <add>, %139, %cst_31 [0] : vector<256x128xf32> to vector<128xf32>
    %141 = vector.shape_cast %140 : vector<128xf32> to vector<1x128xf32>
    %142 = arith.mulf %138, %138 : vector<256x128xf32>
    %143 = arith.mulf %142, %138 : vector<256x128xf32>
    %cst_32 = arith.constant dense<0.000000e+00> : vector<128xf32>
    %144 = vector.multi_reduction <add>, %143, %cst_32 [0] : vector<256x128xf32> to vector<128xf32>
    %145 = vector.shape_cast %144 : vector<128xf32> to vector<1x128xf32>
    %cst_33 = arith.constant 0.000000e+00 : f32
    %146 = vector.broadcast %cst_33 : f32 to vector<1x128xf32>
    %147 = arith.cmpf olt, %141, %146 : vector<1x128xf32>
    %148 = arith.select %147, %130, %118 : vector<1x128xi1>, vector<1x128xf32>
    %cst_34 = arith.constant 0.000000e+00 : f32
    %149 = vector.broadcast %cst_34 : f32 to vector<1x128xf32>
    %150 = arith.cmpf ogt, %141, %149 : vector<1x128xf32>
    %151 = arith.select %150, %130, %121 : vector<1x128xi1>, vector<1x128xf32>
    %152 = arith.divf %141, %145 : vector<1x128xf32>
    %153 = arith.subf %130, %152 : vector<1x128xf32>
    %154 = arith.cmpf oge, %153, %148 : vector<1x128xf32>
    %155 = arith.cmpf ole, %153, %151 : vector<1x128xf32>
    %156 = arith.andi %154, %155 : vector<1x128xi1>
    %157 = arith.addf %148, %151 : vector<1x128xf32>
    %cst_35 = arith.constant 5.000000e-01 : f32
    %158 = vector.broadcast %cst_35 : f32 to vector<1x128xf32>
    %159 = arith.mulf %158, %157 : vector<1x128xf32>
    %160 = arith.select %156, %153, %159 : vector<1x128xi1>, vector<1x128xf32>
    %c5_i32 = arith.constant 5 : i32
    %161 = vector.broadcast %160 : vector<1x128xf32> to vector<256x128xf32>
    %162 = arith.subf %161, %2 : vector<256x128xf32>
    %163 = vector.broadcast %1 : f32 to vector<256x128xf32>
    %164 = arith.mulf %162, %163 : vector<256x128xf32>
    %165 = arith.mulf %164, %164 : vector<256x128xf32>
    %cst_36 = arith.constant 1.000000e+00 : f32
    %166 = vector.broadcast %cst_36 : f32 to vector<256x128xf32>
    %167 = arith.addf %166, %165 : vector<256x128xf32>
    %168 = math.rsqrt %167 : vector<256x128xf32>
    %169 = arith.mulf %162, %168 : vector<256x128xf32>
    %cst_37 = arith.constant dense<0.000000e+00> : vector<128xf32>
    %170 = vector.multi_reduction <add>, %169, %cst_37 [0] : vector<256x128xf32> to vector<128xf32>
    %171 = vector.shape_cast %170 : vector<128xf32> to vector<1x128xf32>
    %172 = arith.mulf %168, %168 : vector<256x128xf32>
    %173 = arith.mulf %172, %168 : vector<256x128xf32>
    %cst_38 = arith.constant dense<0.000000e+00> : vector<128xf32>
    %174 = vector.multi_reduction <add>, %173, %cst_38 [0] : vector<256x128xf32> to vector<128xf32>
    %175 = vector.shape_cast %174 : vector<128xf32> to vector<1x128xf32>
    %cst_39 = arith.constant 0.000000e+00 : f32
    %176 = vector.broadcast %cst_39 : f32 to vector<1x128xf32>
    %177 = arith.cmpf olt, %171, %176 : vector<1x128xf32>
    %178 = arith.select %177, %160, %148 : vector<1x128xi1>, vector<1x128xf32>
    %cst_40 = arith.constant 0.000000e+00 : f32
    %179 = vector.broadcast %cst_40 : f32 to vector<1x128xf32>
    %180 = arith.cmpf ogt, %171, %179 : vector<1x128xf32>
    %181 = arith.select %180, %160, %151 : vector<1x128xi1>, vector<1x128xf32>
    %182 = arith.divf %171, %175 : vector<1x128xf32>
    %183 = arith.subf %160, %182 : vector<1x128xf32>
    %184 = arith.cmpf oge, %183, %178 : vector<1x128xf32>
    %185 = arith.cmpf ole, %183, %181 : vector<1x128xf32>
    %186 = arith.andi %184, %185 : vector<1x128xi1>
    %187 = arith.addf %178, %181 : vector<1x128xf32>
    %cst_41 = arith.constant 5.000000e-01 : f32
    %188 = vector.broadcast %cst_41 : f32 to vector<1x128xf32>
    %189 = arith.mulf %188, %187 : vector<1x128xf32>
    %190 = arith.select %186, %183, %189 : vector<1x128xi1>, vector<1x128xf32>
    %c6_i32 = arith.constant 6 : i32
    %191 = vector.broadcast %190 : vector<1x128xf32> to vector<256x128xf32>
    %192 = arith.subf %191, %2 : vector<256x128xf32>
    %193 = vector.broadcast %1 : f32 to vector<256x128xf32>
    %194 = arith.mulf %192, %193 : vector<256x128xf32>
    %195 = arith.mulf %194, %194 : vector<256x128xf32>
    %cst_42 = arith.constant 1.000000e+00 : f32
    %196 = vector.broadcast %cst_42 : f32 to vector<256x128xf32>
    %197 = arith.addf %196, %195 : vector<256x128xf32>
    %198 = math.rsqrt %197 : vector<256x128xf32>
    %199 = arith.mulf %192, %198 : vector<256x128xf32>
    %cst_43 = arith.constant dense<0.000000e+00> : vector<128xf32>
    %200 = vector.multi_reduction <add>, %199, %cst_43 [0] : vector<256x128xf32> to vector<128xf32>
    %201 = vector.shape_cast %200 : vector<128xf32> to vector<1x128xf32>
    %202 = arith.mulf %198, %198 : vector<256x128xf32>
    %203 = arith.mulf %202, %198 : vector<256x128xf32>
    %cst_44 = arith.constant dense<0.000000e+00> : vector<128xf32>
    %204 = vector.multi_reduction <add>, %203, %cst_44 [0] : vector<256x128xf32> to vector<128xf32>
    %205 = vector.shape_cast %204 : vector<128xf32> to vector<1x128xf32>
    %cst_45 = arith.constant 0.000000e+00 : f32
    %206 = vector.broadcast %cst_45 : f32 to vector<1x128xf32>
    %207 = arith.cmpf olt, %201, %206 : vector<1x128xf32>
    %208 = arith.select %207, %190, %178 : vector<1x128xi1>, vector<1x128xf32>
    %cst_46 = arith.constant 0.000000e+00 : f32
    %209 = vector.broadcast %cst_46 : f32 to vector<1x128xf32>
    %210 = arith.cmpf ogt, %201, %209 : vector<1x128xf32>
    %211 = arith.select %210, %190, %181 : vector<1x128xi1>, vector<1x128xf32>
    %212 = arith.divf %201, %205 : vector<1x128xf32>
    %213 = arith.subf %190, %212 : vector<1x128xf32>
    %214 = arith.cmpf oge, %213, %208 : vector<1x128xf32>
    %215 = arith.cmpf ole, %213, %211 : vector<1x128xf32>
    %216 = arith.andi %214, %215 : vector<1x128xi1>
    %217 = arith.addf %208, %211 : vector<1x128xf32>
    %cst_47 = arith.constant 5.000000e-01 : f32
    %218 = vector.broadcast %cst_47 : f32 to vector<1x128xf32>
    %219 = arith.mulf %218, %217 : vector<1x128xf32>
    %220 = arith.select %216, %213, %219 : vector<1x128xi1>, vector<1x128xf32>
    %c7_i32 = arith.constant 7 : i32
    %221 = vector.broadcast %220 : vector<1x128xf32> to vector<256x128xf32>
    %222 = arith.subf %221, %2 : vector<256x128xf32>
    %223 = vector.broadcast %1 : f32 to vector<256x128xf32>
    %224 = arith.mulf %222, %223 : vector<256x128xf32>
    %225 = arith.mulf %224, %224 : vector<256x128xf32>
    %cst_48 = arith.constant 1.000000e+00 : f32
    %226 = vector.broadcast %cst_48 : f32 to vector<256x128xf32>
    %227 = arith.addf %226, %225 : vector<256x128xf32>
    %228 = math.rsqrt %227 : vector<256x128xf32>
    %229 = arith.mulf %222, %228 : vector<256x128xf32>
    %cst_49 = arith.constant dense<0.000000e+00> : vector<128xf32>
    %230 = vector.multi_reduction <add>, %229, %cst_49 [0] : vector<256x128xf32> to vector<128xf32>
    %231 = vector.shape_cast %230 : vector<128xf32> to vector<1x128xf32>
    %232 = arith.mulf %228, %228 : vector<256x128xf32>
    %233 = arith.mulf %232, %228 : vector<256x128xf32>
    %cst_50 = arith.constant dense<0.000000e+00> : vector<128xf32>
    %234 = vector.multi_reduction <add>, %233, %cst_50 [0] : vector<256x128xf32> to vector<128xf32>
    %235 = vector.shape_cast %234 : vector<128xf32> to vector<1x128xf32>
    %cst_51 = arith.constant 0.000000e+00 : f32
    %236 = vector.broadcast %cst_51 : f32 to vector<1x128xf32>
    %237 = arith.cmpf olt, %231, %236 : vector<1x128xf32>
    %238 = arith.select %237, %220, %208 : vector<1x128xi1>, vector<1x128xf32>
    %cst_52 = arith.constant 0.000000e+00 : f32
    %239 = vector.broadcast %cst_52 : f32 to vector<1x128xf32>
    %240 = arith.cmpf ogt, %231, %239 : vector<1x128xf32>
    %241 = arith.select %240, %220, %211 : vector<1x128xi1>, vector<1x128xf32>
    %242 = arith.divf %231, %235 : vector<1x128xf32>
    %243 = arith.subf %220, %242 : vector<1x128xf32>
    %244 = arith.cmpf oge, %243, %238 : vector<1x128xf32>
    %245 = arith.cmpf ole, %243, %241 : vector<1x128xf32>
    %246 = arith.andi %244, %245 : vector<1x128xi1>
    %247 = arith.addf %238, %241 : vector<1x128xf32>
    %cst_53 = arith.constant 5.000000e-01 : f32
    %248 = vector.broadcast %cst_53 : f32 to vector<1x128xf32>
    %249 = arith.mulf %248, %247 : vector<1x128xf32>
    %250 = arith.select %246, %243, %249 : vector<1x128xi1>, vector<1x128xf32>
    %c0_i32_54 = arith.constant 0 : i32
    %251 = vector.broadcast %250 : vector<1x128xf32> to vector<256x128xf32>
    %252 = arith.subf %251, %2 : vector<256x128xf32>
    %253 = vector.broadcast %1 : f32 to vector<256x128xf32>
    %254 = arith.mulf %252, %253 : vector<256x128xf32>
    %255 = arith.mulf %254, %254 : vector<256x128xf32>
    %cst_55 = arith.constant 1.000000e+00 : f32
    %256 = vector.broadcast %cst_55 : f32 to vector<256x128xf32>
    %257 = arith.addf %256, %255 : vector<256x128xf32>
    %258 = math.rsqrt %257 : vector<256x128xf32>
    %259 = arith.mulf %252, %258 : vector<256x128xf32>
    %cst_56 = arith.constant dense<0.000000e+00> : vector<128xf32>
    %260 = vector.multi_reduction <add>, %259, %cst_56 [0] : vector<256x128xf32> to vector<128xf32>
    %261 = vector.shape_cast %260 : vector<128xf32> to vector<1x128xf32>
    %262 = arith.mulf %258, %258 : vector<256x128xf32>
    %263 = arith.mulf %262, %258 : vector<256x128xf32>
    %cst_57 = arith.constant dense<0.000000e+00> : vector<128xf32>
    %264 = vector.multi_reduction <add>, %263, %cst_57 [0] : vector<256x128xf32> to vector<128xf32>
    %265 = vector.shape_cast %264 : vector<128xf32> to vector<1x128xf32>
    %cst_58 = arith.constant 0.000000e+00 : f32
    %266 = vector.broadcast %cst_58 : f32 to vector<1x128xf32>
    %267 = arith.cmpf olt, %261, %266 : vector<1x128xf32>
    %268 = arith.select %267, %250, %8 : vector<1x128xi1>, vector<1x128xf32>
    %cst_59 = arith.constant 0.000000e+00 : f32
    %269 = vector.broadcast %cst_59 : f32 to vector<1x128xf32>
    %270 = arith.cmpf ogt, %261, %269 : vector<1x128xf32>
    %271 = arith.select %270, %250, %10 : vector<1x128xi1>, vector<1x128xf32>
    %272 = arith.divf %261, %265 : vector<1x128xf32>
    %273 = arith.subf %250, %272 : vector<1x128xf32>
    %274 = arith.cmpf oge, %273, %268 : vector<1x128xf32>
    %275 = arith.cmpf ole, %273, %271 : vector<1x128xf32>
    %276 = arith.andi %274, %275 : vector<1x128xi1>
    %277 = arith.addf %268, %271 : vector<1x128xf32>
    %cst_60 = arith.constant 5.000000e-01 : f32
    %278 = vector.broadcast %cst_60 : f32 to vector<1x128xf32>
    %279 = arith.mulf %278, %277 : vector<1x128xf32>
    %280 = arith.select %276, %273, %279 : vector<1x128xi1>, vector<1x128xf32>
    %c1_i32_61 = arith.constant 1 : i32
    %281 = vector.broadcast %280 : vector<1x128xf32> to vector<256x128xf32>
    %282 = arith.subf %281, %2 : vector<256x128xf32>
    %283 = vector.broadcast %1 : f32 to vector<256x128xf32>
    %284 = arith.mulf %282, %283 : vector<256x128xf32>
    %285 = arith.mulf %284, %284 : vector<256x128xf32>
    %cst_62 = arith.constant 1.000000e+00 : f32
    %286 = vector.broadcast %cst_62 : f32 to vector<256x128xf32>
    %287 = arith.addf %286, %285 : vector<256x128xf32>
    %288 = math.rsqrt %287 : vector<256x128xf32>
    %289 = arith.mulf %282, %288 : vector<256x128xf32>
    %cst_63 = arith.constant dense<0.000000e+00> : vector<128xf32>
    %290 = vector.multi_reduction <add>, %289, %cst_63 [0] : vector<256x128xf32> to vector<128xf32>
    %291 = vector.shape_cast %290 : vector<128xf32> to vector<1x128xf32>
    %292 = arith.mulf %288, %288 : vector<256x128xf32>
    %293 = arith.mulf %292, %288 : vector<256x128xf32>
    %cst_64 = arith.constant dense<0.000000e+00> : vector<128xf32>
    %294 = vector.multi_reduction <add>, %293, %cst_64 [0] : vector<256x128xf32> to vector<128xf32>
    %295 = vector.shape_cast %294 : vector<128xf32> to vector<1x128xf32>
    %cst_65 = arith.constant 0.000000e+00 : f32
    %296 = vector.broadcast %cst_65 : f32 to vector<1x128xf32>
    %297 = arith.cmpf olt, %291, %296 : vector<1x128xf32>
    %298 = arith.select %297, %280, %268 : vector<1x128xi1>, vector<1x128xf32>
    %cst_66 = arith.constant 0.000000e+00 : f32
    %299 = vector.broadcast %cst_66 : f32 to vector<1x128xf32>
    %300 = arith.cmpf ogt, %291, %299 : vector<1x128xf32>
    %301 = arith.select %300, %280, %271 : vector<1x128xi1>, vector<1x128xf32>
    %302 = arith.divf %291, %295 : vector<1x128xf32>
    %303 = arith.subf %280, %302 : vector<1x128xf32>
    %304 = arith.cmpf oge, %303, %298 : vector<1x128xf32>
    %305 = arith.cmpf ole, %303, %301 : vector<1x128xf32>
    %306 = arith.andi %304, %305 : vector<1x128xi1>
    %307 = arith.addf %298, %301 : vector<1x128xf32>
    %cst_67 = arith.constant 5.000000e-01 : f32
    %308 = vector.broadcast %cst_67 : f32 to vector<1x128xf32>
    %309 = arith.mulf %308, %307 : vector<1x128xf32>
    %310 = arith.select %306, %303, %309 : vector<1x128xi1>, vector<1x128xf32>
    %c2_i32_68 = arith.constant 2 : i32
    %311 = vector.broadcast %310 : vector<1x128xf32> to vector<256x128xf32>
    %312 = arith.subf %311, %2 : vector<256x128xf32>
    %313 = vector.broadcast %1 : f32 to vector<256x128xf32>
    %314 = arith.mulf %312, %313 : vector<256x128xf32>
    %315 = arith.mulf %314, %314 : vector<256x128xf32>
    %cst_69 = arith.constant 1.000000e+00 : f32
    %316 = vector.broadcast %cst_69 : f32 to vector<256x128xf32>
    %317 = arith.addf %316, %315 : vector<256x128xf32>
    %318 = math.rsqrt %317 : vector<256x128xf32>
    %319 = arith.mulf %312, %318 : vector<256x128xf32>
    %cst_70 = arith.constant dense<0.000000e+00> : vector<128xf32>
    %320 = vector.multi_reduction <add>, %319, %cst_70 [0] : vector<256x128xf32> to vector<128xf32>
    %321 = vector.shape_cast %320 : vector<128xf32> to vector<1x128xf32>
    %322 = arith.mulf %318, %318 : vector<256x128xf32>
    %323 = arith.mulf %322, %318 : vector<256x128xf32>
    %cst_71 = arith.constant dense<0.000000e+00> : vector<128xf32>
    %324 = vector.multi_reduction <add>, %323, %cst_71 [0] : vector<256x128xf32> to vector<128xf32>
    %325 = vector.shape_cast %324 : vector<128xf32> to vector<1x128xf32>
    %cst_72 = arith.constant 0.000000e+00 : f32
    %326 = vector.broadcast %cst_72 : f32 to vector<1x128xf32>
    %327 = arith.cmpf olt, %321, %326 : vector<1x128xf32>
    %328 = arith.select %327, %310, %298 : vector<1x128xi1>, vector<1x128xf32>
    %cst_73 = arith.constant 0.000000e+00 : f32
    %329 = vector.broadcast %cst_73 : f32 to vector<1x128xf32>
    %330 = arith.cmpf ogt, %321, %329 : vector<1x128xf32>
    %331 = arith.select %330, %310, %301 : vector<1x128xi1>, vector<1x128xf32>
    %332 = arith.divf %321, %325 : vector<1x128xf32>
    %333 = arith.subf %310, %332 : vector<1x128xf32>
    %334 = arith.cmpf oge, %333, %328 : vector<1x128xf32>
    %335 = arith.cmpf ole, %333, %331 : vector<1x128xf32>
    %336 = arith.andi %334, %335 : vector<1x128xi1>
    %337 = arith.addf %328, %331 : vector<1x128xf32>
    %cst_74 = arith.constant 5.000000e-01 : f32
    %338 = vector.broadcast %cst_74 : f32 to vector<1x128xf32>
    %339 = arith.mulf %338, %337 : vector<1x128xf32>
    %340 = arith.select %336, %333, %339 : vector<1x128xi1>, vector<1x128xf32>
    %c3_i32_75 = arith.constant 3 : i32
    %341 = vector.broadcast %340 : vector<1x128xf32> to vector<256x128xf32>
    %342 = arith.subf %341, %2 : vector<256x128xf32>
    %343 = vector.broadcast %1 : f32 to vector<256x128xf32>
    %344 = arith.mulf %342, %343 : vector<256x128xf32>
    %345 = arith.mulf %344, %344 : vector<256x128xf32>
    %cst_76 = arith.constant 1.000000e+00 : f32
    %346 = vector.broadcast %cst_76 : f32 to vector<256x128xf32>
    %347 = arith.addf %346, %345 : vector<256x128xf32>
    %348 = math.rsqrt %347 : vector<256x128xf32>
    %349 = arith.mulf %342, %348 : vector<256x128xf32>
    %cst_77 = arith.constant dense<0.000000e+00> : vector<128xf32>
    %350 = vector.multi_reduction <add>, %349, %cst_77 [0] : vector<256x128xf32> to vector<128xf32>
    %351 = vector.shape_cast %350 : vector<128xf32> to vector<1x128xf32>
    %352 = arith.mulf %348, %348 : vector<256x128xf32>
    %353 = arith.mulf %352, %348 : vector<256x128xf32>
    %cst_78 = arith.constant dense<0.000000e+00> : vector<128xf32>
    %354 = vector.multi_reduction <add>, %353, %cst_78 [0] : vector<256x128xf32> to vector<128xf32>
    %355 = vector.shape_cast %354 : vector<128xf32> to vector<1x128xf32>
    %cst_79 = arith.constant 0.000000e+00 : f32
    %356 = vector.broadcast %cst_79 : f32 to vector<1x128xf32>
    %357 = arith.cmpf olt, %351, %356 : vector<1x128xf32>
    %358 = arith.select %357, %340, %328 : vector<1x128xi1>, vector<1x128xf32>
    %cst_80 = arith.constant 0.000000e+00 : f32
    %359 = vector.broadcast %cst_80 : f32 to vector<1x128xf32>
    %360 = arith.cmpf ogt, %351, %359 : vector<1x128xf32>
    %361 = arith.select %360, %340, %331 : vector<1x128xi1>, vector<1x128xf32>
    %362 = arith.divf %351, %355 : vector<1x128xf32>
    %363 = arith.subf %340, %362 : vector<1x128xf32>
    %364 = arith.cmpf oge, %363, %358 : vector<1x128xf32>
    %365 = arith.cmpf ole, %363, %361 : vector<1x128xf32>
    %366 = arith.andi %364, %365 : vector<1x128xi1>
    %367 = arith.addf %358, %361 : vector<1x128xf32>
    %cst_81 = arith.constant 5.000000e-01 : f32
    %368 = vector.broadcast %cst_81 : f32 to vector<1x128xf32>
    %369 = arith.mulf %368, %367 : vector<1x128xf32>
    %370 = arith.select %366, %363, %369 : vector<1x128xi1>, vector<1x128xf32>
    %c0_82 = arith.constant 0 : index
    %c0_83 = arith.constant 0 : index
    %371 = vector.load %arg3[%c0_82, %c0_83] : memref<1x128xf32, #tpu.memory_space<vmem>>, vector<1x128xf32>
    tpu.vector_store %arg3[%c0_82, %c0_83], %370 {strides = array<i32>} : memref<1x128xf32, #tpu.memory_space<vmem>>, vector<1x128xf32>,
    return
  }
  func.func @transform_0(%arg0: i32) -> i32 {
    %c0_i32 = arith.constant 0 : i32
    %c0_i32_0 = arith.constant 0 : i32
    return %c0_i32 : i32
  }
  func.func @transform_1(%arg0: i32) -> (i32, i32) {
    %c0_i32 = arith.constant 0 : i32
    %c0_i32_0 = arith.constant 0 : i32
    return %c0_i32, %arg0 : i32, i32
  }
  func.func @transform_2(%arg0: i32) -> (i32, i32) {
    %c0_i32 = arith.constant 0 : i32
    %c0_i32_0 = arith.constant 0 : i32
    return %arg0, %c0_i32 : i32, i32
  }
}

</mosaic_0001>

<llo_original>
// kernel: robust_global_pool2d.1
$region0: #{robust_global_pool2d.1}
  #allocation0 [shape = 'u32[]', space=smem, size = 0x4, offset = 0x4, fixed_abs, tag = 'smem constant byte address 0x4 - core index']
  #allocation1 [shape = 'u32[144,128]{1,0:T(1,128)}', space=vmem, size = 0x12000, scoped, tag = 'internal scratch']
  #allocation2 [shape = 'f32[1]{0:T(128)S(6)}', space=smem, size = 0x200, scoped, tag = 'scoped memory for robust_global_pool2d.1']
  %s0 = inlined_call_operand.<no memory space> [shape: f32[1], index: 0, kind: input, shape index: {}]
  %s1 = inlined_call_operand.vmem [shape: f32[256,128], index: 1, kind: input, shape index: {}]
  %s2 = inlined_call_operand.vmem [shape: f32[1,128], index: 2, kind: output, shape index: {}]
  %s3 = sld [smem:[#allocation0]]
  $region18: #{robust_global_pool2d.1} parent=0
    _
  %s5 = ssub.s32 1, %s3
  %s6 = scalar_select 0, %s5, %s3
  %7 = sst [smem:[#allocation2]] %s0
  // Predicated region
  $region2: #{robust_global_pool2d.1} parent=0 // pred_check
    _
  $region3: #{robust_global_pool2d.1} parent=0 // pred_check_branch
    %9 = sbr.rel (0) target = $region5
  $region4: #{robust_global_pool2d.1} parent=0 // pred_region
    _
  $region5: #{robust_global_pool2d.1} parent=0 // pred_fallthru
    _
  // Predicated region
  $region6: #{robust_global_pool2d.1} parent=0 // pred_check
    _
  $region7: #{robust_global_pool2d.1} parent=0 // pred_check_branch
    %11 = sbr.rel (0) target = $region9
  $region8: #{robust_global_pool2d.1} parent=0 // pred_region
    _
  $region9: #{robust_global_pool2d.1} parent=0 // pred_fallthru
    _
  %s12 = sld [smem:[#allocation2]]
  %v13 = vstv %s12
  %v14 = vrcp.pop %v13
  %s15 = vtos %v14
  %v16 = vld [vmem:[%s1] sm:$0xff]
  %v17 = vld [vmem:[%s1 + $0x8] sm:$0xff]
  %v18 = vld [vmem:[%s1 + $0x10] sm:$0xff]
  %v19 = vld [vmem:[%s1 + $0x18] sm:$0xff]
  %v20 = vld [vmem:[%s1 + $0x20] sm:$0xff]
  %v21 = vld [vmem:[%s1 + $0x28] sm:$0xff]
  %v22 = vld [vmem:[%s1 + $0x30] sm:$0xff]
  %v23 = vld [vmem:[%s1 + $0x38] sm:$0xff]
  %v24 = vld [vmem:[%s1 + $0x40] sm:$0xff]
  %v25 = vld [vmem:[%s1 + $0x48] sm:$0xff]
  %v26 = vld [vmem:[%s1 + $0x50] sm:$0xff]
  %v27 = vld [vmem:[%s1 + $0x58] sm:$0xff]
  %v28 = vld [vmem:[%s1 + $0x60] sm:$0xff]
  %v29 = vld [vmem:[%s1 + $0x68] sm:$0xff]
  %v30 = vld [vmem:[%s1 + $0x70] sm:$0xff]
  %v31 = vld [vmem:[%s1 + $0x78] sm:$0xff]
  %v32 = vld [vmem:[%s1 + $0x80] sm:$0xff]
  %v33 = vld [vmem:[%s1 + $0x88] sm:$0xff]
  %v34 = vld [vmem:[%s1 + $0x90] sm:$0xff]
  %v35 = vld [vmem:[%s1 + $0x98] sm:$0xff]
  %v36 = vld [vmem:[%s1 + $0xa0] sm:$0xff]
  %v37 = vld [vmem:[%s1 + $0xa8] sm:$0xff]
  %v38 = vld [vmem:[%s1 + $0xb0] sm:$0xff]
  %v39 = vld [vmem:[%s1 + $0xb8] sm:$0xff]
  %v40 = vld [vmem:[%s1 + $0xc0] sm:$0xff]
  %v41 = vld [vmem:[%s1 + $0xc8] sm:$0xff]
  %v42 = vld [vmem:[%s1 + $0xd0] sm:$0xff]
  %v43 = vld [vmem:[%s1 + $0xd8] sm:$0xff]
  %v44 = vld [vmem:[%s1 + $0xe0] sm:$0xff]
  %v45 = vld [vmem:[%s1 + $0xe8] sm:$0xff]
  %v46 = vld [vmem:[%s1 + $0xf0] sm:$0xff]
  %v47 = vld [vmem:[%s1 + $0xf8] sm:$0xff]
  %v48 = vadd.f32 %v16, %v17
  %v49 = vadd.f32 %v48, %v18
  %v50 = vadd.f32 %v49, %v19
  %v51 = vadd.f32 %v50, %v20
  %v52 = vadd.f32 %v51, %v21
  %v53 = vadd.f32 %v52, %v22
  %v54 = vadd.f32 %v53, %v23
  %v55 = vadd.f32 %v54, %v24
  %v56 = vadd.f32 %v55, %v25
  %v57 = vadd.f32 %v56, %v26
  %v58 = vadd.f32 %v57, %v27
  %v59 = vadd.f32 %v58, %v28
  %v60 = vadd.f32 %v59, %v29
  %v61 = vadd.f32 %v60, %v30
  %v62 = vadd.f32 %v61, %v31
  %v63 = vadd.f32 %v62, %v32
  %v64 = vadd.f32 %v63, %v33
  %v65 = vadd.f32 %v64, %v34
  %v66 = vadd.f32 %v65, %v35
  %v67 = vadd.f32 %v66, %v36
  %v68 = vadd.f32 %v67, %v37
  %v69 = vadd.f32 %v68, %v38
  %v70 = vadd.f32 %v69, %v39
  %v71 = vadd.f32 %v70, %v40
  %v72 = vadd.f32 %v71, %v41
  %v73 = vadd.f32 %v72, %v42
  %v74 = vadd.f32 %v73, %v43
  %v75 = vadd.f32 %v74, %v44
  %v76 = vadd.f32 %v75, %v45
  %v77 = vadd.f32 %v76, %v46
  %v78 = vadd.f32 %v77, %v47
  %v79 = vrot.slane %v78, 4
  %v80 = vadd.f32 %v78, %v79
  %v81 = vrot.slane %v80, 2
  %v82 = vadd.f32 %v80, %v81
  %v83 = vrot.slane %v82, 1
  %v84 = vadd.f32 %v82, %v83
  %v85 = vmul.f32 %v84, 0.00390625
  %v86 = vmin.f32 %v16, %v20
  %v87 = vmin.f32 %v17, %v21
  %v88 = vmin.f32 %v18, %v22
  %v89 = vmin.f32 %v19, %v23
  %v90 = vmin.f32 %v86, %v24
  %v91 = vmin.f32 %v87, %v25
  %v92 = vmin.f32 %v88, %v26
  %v93 = vmin.f32 %v89, %v27
  %v94 = vmin.f32 %v90, %v28
  %v95 = vmin.f32 %v91, %v29
  %v96 = vmin.f32 %v92, %v30
  %v97 = vmin.f32 %v93, %v31
  %v98 = vmin.f32 %v94, %v32
  %v99 = vmin.f32 %v95, %v33
  %v100 = vmin.f32 %v96, %v34
  %v101 = vmin.f32 %v97, %v35
  %v102 = vmin.f32 %v98, %v36
  %v103 = vmin.f32 %v99, %v37
  %v104 = vmin.f32 %v100, %v38
  %v105 = vmin.f32 %v101, %v39
  %v106 = vmin.f32 %v102, %v40
  %v107 = vmin.f32 %v103, %v41
  %v108 = vmin.f32 %v104, %v42
  %v109 = vmin.f32 %v105, %v43
  %v110 = vmin.f32 %v106, %v44
  %v111 = vmin.f32 %v107, %v45
  %v112 = vmin.f32 %v108, %v46
  %v113 = vmin.f32 %v109, %v47
  %v114 = vmin.f32 %v110, %v111
  %v115 = vmin.f32 %v112, %v113
  %v116 = vmin.f32 %v114, %v115
  %v117 = vrot.slane %v116, 4
  %v118 = vmin.f32 %v116, %v117
  %v119 = vrot.slane %v118, 2
  %v120 = vmin.f32 %v118, %v119
  %v121 = vrot.slane %v120, 1
  %v122 = vmin.f32 %v120, %v121
  %v123 = vmax.f32 %v16, %v20
  %v124 = vmax.f32 %v17, %v21
  %v125 = vmax.f32 %v18, %v22
  %v126 = vmax.f32 %v19, %v23
  %v127 = vmax.f32 %v123, %v24
  %v128 = vmax.f32 %v124, %v25
  %v129 = vmax.f32 %v125, %v26
  %v130 = vmax.f32 %v126, %v27
  %v131 = vmax.f32 %v127, %v28
  %v132 = vmax.f32 %v128, %v29
  %v133 = vmax.f32 %v129, %v30
  %v134 = vmax.f32 %v130, %v31
  %v135 = vmax.f32 %v131, %v32
  %v136 = vmax.f32 %v132, %v33
  %v137 = vmax.f32 %v133, %v34
  %v138 = vmax.f32 %v134, %v35
  %v139 = vmax.f32 %v135, %v36
  %v140 = vmax.f32 %v136, %v37
  %v141 = vmax.f32 %v137, %v38
  %v142 = vmax.f32 %v138, %v39
  %v143 = vmax.f32 %v139, %v40
  %v144 = vmax.f32 %v140, %v41
  %v145 = vmax.f32 %v141, %v42
  %v146 = vmax.f32 %v142, %v43
  %v147 = vmax.f32 %v143, %v44
  %v148 = vmax.f32 %v144, %v45
  %v149 = vmax.f32 %v145, %v46
  %v150 = vmax.f32 %v146, %v47
  %v151 = vmax.f32 %v147, %v148
  %v152 = vmax.f32 %v149, %v150
  %v153 = vmax.f32 %v151, %v152
  %v154 = vrot.slane %v153, 4
  %v155 = vmax.f32 %v153, %v154
  %v156 = vrot.slane %v155, 2
  %v157 = vmax.f32 %v155, %v156
  %v158 = vrot.slane %v157, 1
  %v159 = vmax.f32 %v157, %v158
  %v160 = vsub.f32 %v85, %v16
  %v161 = vsub.f32 %v85, %v17
  %v162 = vsub.f32 %v85, %v18
  %v163 = vsub.f32 %v85, %v19
  %v164 = vsub.f32 %v85, %v20
  %v165 = vsub.f32 %v85, %v21
  %v166 = vsub.f32 %v85, %v22
  %v167 = vsub.f32 %v85, %v23
  %v168 = vsub.f32 %v85, %v24
  %v169 = vsub.f32 %v85, %v25
  %v170 = vsub.f32 %v85, %v26
  %v171 = vsub.f32 %v85, %v27
  %v172 = vsub.f32 %v85, %v28
  %v173 = vsub.f32 %v85, %v29
  %v174 = vsub.f32 %v85, %v30
  %v175 = vsub.f32 %v85, %v31
  %v176 = vsub.f32 %v85, %v32
  %v177 = vsub.f32 %v85, %v33
  %v178 = vsub.f32 %v85, %v34
  %v179 = vsub.f32 %v85, %v35
  %v180 = vsub.f32 %v85, %v36
  %v181 = vsub.f32 %v85, %v37
  %v182 = vsub.f32 %v85, %v38
  %v183 = vsub.f32 %v85, %v39
  %v184 = vsub.f32 %v85, %v40
  %v185 = vsub.f32 %v85, %v41
  %v186 = vsub.f32 %v85, %v42
  %v187 = vsub.f32 %v85, %v43
  %v188 = vsub.f32 %v85, %v44
  %v189 = vsub.f32 %v85, %v45
  %v190 = vsub.f32 %v85, %v46
  %v191 = vsub.f32 %v85, %v47
  %v192 = vstv %s15
  %v193 = vmul.f32 %v160, %v192
  %v194 = vmul.f32 %v161, %v192
  %v195 = vmul.f32 %v162, %v192
  %v196 = vmul.f32 %v163, %v192
  %v197 = vmul.f32 %v164, %v192
  %v198 = vmul.f32 %v165, %v192
  %v199 = vmul.f32 %v166, %v192
  %v200 = vmul.f32 %v167, %v192
  %v201 = vmul.f32 %v168, %v192
  %v202 = vmul.f32 %v169, %v192
  %v203 = vmul.f32 %v170, %v192
  %v204 = vmul.f32 %v171, %v192
  %v205 = vmul.f32 %v172, %v192
  %v206 = vmul.f32 %v173, %v192
  %v207 = vmul.f32 %v174, %v192
  %v208 = vmul.f32 %v175, %v192
  %v209 = vmul.f32 %v176, %v192
  %v210 = vmul.f32 %v177, %v192
  %v211 = vmul.f32 %v178, %v192
  %v212 = vmul.f32 %v179, %v192
  %v213 = vmul.f32 %v180, %v192
  %v214 = vmul.f32 %v181, %v192
  %v215 = vmul.f32 %v182, %v192
  %v216 = vmul.f32 %v183, %v192
  %v217 = vmul.f32 %v184, %v192
  %v218 = vmul.f32 %v185, %v192
  %v219 = vmul.f32 %v186, %v192
  %v220 = vmul.f32 %v187, %v192
  %v221 = vmul.f32 %v188, %v192
  %v222 = vmul.f32 %v189, %v192
  %v223 = vmul.f32 %v190, %v192
  %v224 = vmul.f32 %v191, %v192
  %v225 = vmul.f32 %v193, %v193
  %v226 = vmul.f32 %v194, %v194
  %v227 = vmul.f32 %v195, %v195
  %v228 = vmul.f32 %v196, %v196
  %v229 = vmul.f32 %v197, %v197
  %v230 = vmul.f32 %v198, %v198
  %v231 = vmul.f32 %v199, %v199
  %v232 = vmul.f32 %v200, %v200
  %v233 = vmul.f32 %v201, %v201
  %v234 = vmul.f32 %v202, %v202
  %v235 = vmul.f32 %v203, %v203
  %v236 = vmul.f32 %v204, %v204
  %v237 = vmul.f32 %v205, %v205
  %v238 = vmul.f32 %v206, %v206
  %v239 = vmul.f32 %v207, %v207
  %v240 = vmul.f32 %v208, %v208
  %v241 = vmul.f32 %v209, %v209
  %v242 = vmul.f32 %v210, %v210
  %v243 = vmul.f32 %v211, %v211
  %v244 = vmul.f32 %v212, %v212
  %v245 = vmul.f32 %v213, %v213
  %v246 = vmul.f32 %v214, %v214
  %v247 = vmul.f32 %v215, %v215
  %v248 = vmul.f32 %v216, %v216
  %v249 = vmul.f32 %v217, %v217
  %v250 = vmul.f32 %v218, %v218
  %v251 = vmul.f32 %v219, %v219
  %v252 = vmul.f32 %v220, %v220
  %v253 = vmul.f32 %v221, %v221
  %v254 = vmul.f32 %v222, %v222
  %v255 = vmul.f32 %v223, %v223
  %v256 = vmul.f32 %v224, %v224
  %v257 = vadd.f32 %v225, 1.0
  %v258 = vadd.f32 %v226, 1.0
  %v259 = vadd.f32 %v227, 1.0
  %v260 = vadd.f32 %v228, 1.0
  %v261 = vadd.f32 %v229, 1.0
  %v262 = vadd.f32 %v230, 1.0
  %v263 = vadd.f32 %v231, 1.0
  %v264 = vadd.f32 %v232, 1.0
  %v265 = vadd.f32 %v233, 1.0
  %v266 = vadd.f32 %v234, 1.0
  %v267 = vadd.f32 %v235, 1.0
  %v268 = vadd.f32 %v236, 1.0
  %v269 = vadd.f32 %v237, 1.0
  %v270 = vadd.f32 %v238, 1.0
  %v271 = vadd.f32 %v239, 1.0
  %v272 = vadd.f32 %v240, 1.0
  %v273 = vadd.f32 %v241, 1.0
  %v274 = vadd.f32 %v242, 1.0
  %v275 = vadd.f32 %v243, 1.0
  %v276 = vadd.f32 %v244, 1.0
  %v277 = vadd.f32 %v245, 1.0
  %v278 = vadd.f32 %v246, 1.0
  %v279 = vadd.f32 %v247, 1.0
  %v280 = vadd.f32 %v248, 1.0
  %v281 = vadd.f32 %v249, 1.0
  %v282 = vadd.f32 %v250, 1.0
  %v283 = vadd.f32 %v251, 1.0
  %v284 = vadd.f32 %v252, 1.0
  %v285 = vadd.f32 %v253, 1.0
  %v286 = vadd.f32 %v254, 1.0
  %v287 = vadd.f32 %v255, 1.0
  %v288 = vadd.f32 %v256, 1.0
  %v289 = vrsqrt.pop %v257
  %v290 = vrsqrt.pop %v258
  %v291 = vrsqrt.pop %v259
  %v292 = vrsqrt.pop %v260
  %v293 = vrsqrt.pop %v261
  %v294 = vrsqrt.pop %v262
  %v295 = vrsqrt.pop %v263
  %v296 = vrsqrt.pop %v264
  %v297 = vrsqrt.pop %v265
  %v298 = vrsqrt.pop %v266
  %v299 = vrsqrt.pop %v267
  %v300 = vrsqrt.pop %v268
  %v301 = vrsqrt.pop %v269
  %v302 = vrsqrt.pop %v270
  %v303 = vrsqrt.pop %v271
  %v304 = vrsqrt.pop %v272
  %v305 = vrsqrt.pop %v273
  %v306 = vrsqrt.pop %v274
  %v307 = vrsqrt.pop %v275
  %v308 = vrsqrt.pop %v276
  %v309 = vrsqrt.pop %v277
  %v310 = vrsqrt.pop %v278
  %v311 = vrsqrt.pop %v279
  %v312 = vrsqrt.pop %v280
  %v313 = vrsqrt.pop %v281
  %v314 = vrsqrt.pop %v282
  %v315 = vrsqrt.pop %v283
  %v316 = vrsqrt.pop %v284
  %v317 = vrsqrt.pop %v285
  %v318 = vrsqrt.pop %v286
  %v319 = vrsqrt.pop %v287
  %v320 = vrsqrt.pop %v288
  %v321 = vmul.f32 %v160, %v289
  %v322 = vmul.f32 %v161, %v290
  %v323 = vmul.f32 %v162, %v291
  %v324 = vmul.f32 %v163, %v292
  %v325 = vmul.f32 %v164, %v293
  %v326 = vmul.f32 %v165, %v294
  %v327 = vmul.f32 %v166, %v295
  %v328 = vmul.f32 %v167, %v296
  %v329 = vmul.f32 %v168, %v297
  %v330 = vmul.f32 %v169, %v298
  %v331 = vmul.f32 %v170, %v299
  %v332 = vmul.f32 %v171, %v300
  %v333 = vmul.f32 %v172, %v301
  %v334 = vmul.f32 %v173, %v302
  %v335 = vmul.f32 %v174, %v303
  %v336 = vmul.f32 %v175, %v304
  %v337 = vmul.f32 %v176, %v305
  %v338 = vmul.f32 %v177, %v306
  %v339 = vmul.f32 %v178, %v307
  %v340 = vmul.f32 %v179, %v308
  %v341 = vmul.f32 %v180, %v309
  %v342 = vmul.f32 %v181, %v310
  %v343 = vmul.f32 %v182, %v311
  %v344 = vmul.f32 %v183, %v312
  %v345 = vmul.f32 %v184, %v313
  %v346 = vmul.f32 %v185, %v314
  %v347 = vmul.f32 %v186, %v315
  %v348 = vmul.f32 %v187, %v316
  %v349 = vmul.f32 %v188, %v317
  %v350 = vmul.f32 %v189, %v318
  %v351 = vmul.f32 %v190, %v319
  %v352 = vmul.f32 %v191, %v320
  %v353 = vadd.f32 %v321, %v322
  %v354 = vadd.f32 %v353, %v323
  %v355 = vadd.f32 %v354, %v324
  %v356 = vadd.f32 %v355, %v325
  %v357 = vadd.f32 %v356, %v326
  %v358 = vadd.f32 %v357, %v327
  %v359 = vadd.f32 %v358, %v328
  %v360 = vadd.f32 %v359, %v329
  %v361 = vadd.f32 %v360, %v330
  %v362 = vadd.f32 %v361, %v331
  %v363 = vadd.f32 %v362, %v332
  %v364 = vadd.f32 %v363, %v333
  %v365 = vadd.f32 %v364, %v334
  %v366 = vadd.f32 %v365, %v335
  %v367 = vadd.f32 %v366, %v336
  %v368 = vadd.f32 %v367, %v337
  %v369 = vadd.f32 %v368, %v338
  %v370 = vadd.f32 %v369, %v339
  %v371 = vadd.f32 %v370, %v340
  %v372 = vadd.f32 %v371, %v341
  %v373 = vadd.f32 %v372, %v342
  %v374 = vadd.f32 %v373, %v343
  %v375 = vadd.f32 %v374, %v344
  %v376 = vadd.f32 %v375, %v345
  %v377 = vadd.f32 %v376, %v346
  %v378 = vadd.f32 %v377, %v347
  %v379 = vadd.f32 %v378, %v348
  %v380 = vadd.f32 %v379, %v349
  %v381 = vadd.f32 %v380, %v350
  %v382 = vadd.f32 %v381, %v351
  %v383 = vadd.f32 %v382, %v352
  %v384 = vrot.slane %v383, 4
  %v385 = vadd.f32 %v383, %v384
  %v386 = vrot.slane %v385, 2
  %v387 = vadd.f32 %v385, %v386
  %v388 = vrot.slane %v387, 1
  %v389 = vadd.f32 %v387, %v388
  %v390 = vmul.f32 %v289, %v289
  %v391 = vmul.f32 %v290, %v290
  %v392 = vmul.f32 %v291, %v291
  %v393 = vmul.f32 %v292, %v292
  %v394 = vmul.f32 %v293, %v293
  %v395 = vmul.f32 %v294, %v294
  %v396 = vmul.f32 %v295, %v295
  %v397 = vmul.f32 %v296, %v296
  %v398 = vmul.f32 %v297, %v297
  %v399 = vmul.f32 %v298, %v298
  %v400 = vmul.f32 %v299, %v299
  %v401 = vmul.f32 %v300, %v300
  %v402 = vmul.f32 %v301, %v301
  %v403 = vmul.f32 %v302, %v302
  %v404 = vmul.f32 %v303, %v303
  %v405 = vmul.f32 %v304, %v304
  %v406 = vmul.f32 %v305, %v305
  %v407 = vmul.f32 %v306, %v306
  %v408 = vmul.f32 %v307, %v307
  %v409 = vmul.f32 %v308, %v308
  %v410 = vmul.f32 %v309, %v309
  %v411 = vmul.f32 %v310, %v310
  %v412 = vmul.f32 %v311, %v311
  %v413 = vmul.f32 %v312, %v312
  %v414 = vmul.f32 %v313, %v313
  %v415 = vmul.f32 %v314, %v314
  %v416 = vmul.f32 %v315, %v315
  %v417 = vmul.f32 %v316, %v316
  %v418 = vmul.f32 %v317, %v317
  %v419 = vmul.f32 %v318, %v318
  %v420 = vmul.f32 %v319, %v319
  %v421 = vmul.f32 %v320, %v320
  %v422 = vmul.f32 %v390, %v289
  %v423 = vmul.f32 %v391, %v290
  %v424 = vmul.f32 %v392, %v291
  %v425 = vmul.f32 %v393, %v292
  %v426 = vmul.f32 %v394, %v293
  %v427 = vmul.f32 %v395, %v294
  %v428 = vmul.f32 %v396, %v295
  %v429 = vmul.f32 %v397, %v296
  %v430 = vmul.f32 %v398, %v297
  %v431 = vmul.f32 %v399, %v298
  %v432 = vmul.f32 %v400, %v299
  %v433 = vmul.f32 %v401, %v300
  %v434 = vmul.f32 %v402, %v301
  %v435 = vmul.f32 %v403, %v302
  %v436 = vmul.f32 %v404, %v303
  %v437 = vmul.f32 %v405, %v304
  %v438 = vmul.f32 %v406, %v305
  %v439 = vmul.f32 %v407, %v306
  %v440 = vmul.f32 %v408, %v307
  %v441 = vmul.f32 %v409, %v308
  %v442 = vmul.f32 %v410, %v309
  %v443 = vmul.f32 %v411, %v310
  %v444 = vmul.f32 %v412, %v311
  %v445 = vmul.f32 %v413, %v312
  %v446 = vmul.f32 %v414, %v313
  %v447 = vmul.f32 %v415, %v314
  %v448 = vmul.f32 %v416, %v315
  %v449 = vmul.f32 %v417, %v316
  %v450 = vmul.f32 %v418, %v317
  %v451 = vmul.f32 %v419, %v318
  %v452 = vmul.f32 %v420, %v319
  %v453 = vmul.f32 %v421, %v320
  %v454 = vadd.f32 %v422, %v423
  %v455 = vadd.f32 %v454, %v424
  %v456 = vadd.f32 %v455, %v425
  %v457 = vadd.f32 %v456, %v426
  %v458 = vadd.f32 %v457, %v427
  %v459 = vadd.f32 %v458, %v428
  %v460 = vadd.f32 %v459, %v429
  %v461 = vadd.f32 %v460, %v430
  %v462 = vadd.f32 %v461, %v431
  %v463 = vadd.f32 %v462, %v432
  %v464 = vadd.f32 %v463, %v433
  %v465 = vadd.f32 %v464, %v434
  %v466 = vadd.f32 %v465, %v435
  %v467 = vadd.f32 %v466, %v436
  %v468 = vadd.f32 %v467, %v437
  %v469 = vadd.f32 %v468, %v438
  %v470 = vadd.f32 %v469, %v439
  %v471 = vadd.f32 %v470, %v440
  %v472 = vadd.f32 %v471, %v441
  %v473 = vadd.f32 %v472, %v442
  %v474 = vadd.f32 %v473, %v443
  %v475 = vadd.f32 %v474, %v444
  %v476 = vadd.f32 %v475, %v445
  %v477 = vadd.f32 %v476, %v446
  %v478 = vadd.f32 %v477, %v447
  %v479 = vadd.f32 %v478, %v448
  %v480 = vadd.f32 %v479, %v449
  %v481 = vadd.f32 %v480, %v450
  %v482 = vadd.f32 %v481, %v451
  %v483 = vadd.f32 %v482, %v452
  %v484 = vadd.f32 %v483, %v453
  %v485 = vrot.slane %v484, 4
  %v486 = vadd.f32 %v484, %v485
  %v487 = vrot.slane %v486, 2
  %v488 = vadd.f32 %v486, %v487
  %v489 = vrot.slane %v488, 1
  %v490 = vadd.f32 %v488, %v489
  %vm491 = vcmp.lt.f32.partialorder %v389, 0.0
  %v492 = vsel %vm491, %v85, %v122
  %vm493 = vcmp.gt.f32.partialorder %v389, 0.0
  %v494 = vsel %vm493, %v85, %v159
  %v495 = vrcp.pop %v490
  %v496 = vmul.f32 %v389, %v495
  %v497 = vsub.f32 %v85, %v496
  %vm498 = vcmp.ge.f32.partialorder %v497, %v492
  %vm499 = vcmp.le.f32.partialorder %v497, %v494
  %vm500 = vmand %vm498, %vm499
  %v501 = vadd.f32 %v492, %v494
  %v502 = vmul.f32 %v501, 0.5
  %v503 = vsel %vm500, %v497, %v502
  %v504 = vsub.f32 %v503, %v16
  %v505 = vsub.f32 %v503, %v17
  %v506 = vsub.f32 %v503, %v18
  %v507 = vsub.f32 %v503, %v19
  %v508 = vsub.f32 %v503, %v20
  %v509 = vsub.f32 %v503, %v21
  %v510 = vsub.f32 %v503, %v22
  %v511 = vsub.f32 %v503, %v23
  %v512 = vsub.f32 %v503, %v24
  %v513 = vsub.f32 %v503, %v25
  %v514 = vsub.f32 %v503, %v26
  %v515 = vsub.f32 %v503, %v27
  %v516 = vsub.f32 %v503, %v28
  %v517 = vsub.f32 %v503, %v29
  %v518 = vsub.f32 %v503, %v30
  %v519 = vsub.f32 %v503, %v31
  %v520 = vsub.f32 %v503, %v32
  %v521 = vsub.f32 %v503, %v33
  %v522 = vsub.f32 %v503, %v34
  %v523 = vsub.f32 %v503, %v35
  %v524 = vsub.f32 %v503, %v36
  %v525 = vsub.f32 %v503, %v37
  %v526 = vsub.f32 %v503, %v38
  %v527 = vsub.f32 %v503, %v39
  %v528 = vsub.f32 %v503, %v40
  %v529 = vsub.f32 %v503, %v41
  %v530 = vsub.f32 %v503, %v42
  %v531 = vsub.f32 %v503, %v43
  %v532 = vsub.f32 %v503, %v44
  %v533 = vsub.f32 %v503, %v45
  %v534 = vsub.f32 %v503, %v46
  %v535 = vsub.f32 %v503, %v47
  %v536 = vmul.f32 %v504, %v192
  %v537 = vmul.f32 %v505, %v192
  %v538 = vmul.f32 %v506, %v192
  %v539 = vmul.f32 %v507, %v192
  %v540 = vmul.f32 %v508, %v192
  %v541 = vmul.f32 %v509, %v192
  %v542 = vmul.f32 %v510, %v192
  %v543 = vmul.f32 %v511, %v192
  %v544 = vmul.f32 %v512, %v192
  %v545 = vmul.f32 %v513, %v192
  %v546 = vmul.f32 %v514, %v192
  %v547 = vmul.f32 %v515, %v192
  %v548 = vmul.f32 %v516, %v192
  %v549 = vmul.f32 %v517, %v192
  %v550 = vmul.f32 %v518, %v192
  %v551 = vmul.f32 %v519, %v192
  %v552 = vmul.f32 %v520, %v192
  %v553 = vmul.f32 %v521, %v192
  %v554 = vmul.f32 %v522, %v192
  %v555 = vmul.f32 %v523, %v192
  %v556 = vmul.f32 %v524, %v192
  %v557 = vmul.f32 %v525, %v192
  %v558 = vmul.f32 %v526, %v192
  %v559 = vmul.f32 %v527, %v192
  %v560 = vmul.f32 %v528, %v192
  %v561 = vmul.f32 %v529, %v192
  %v562 = vmul.f32 %v530, %v192
  %v563 = vmul.f32 %v531, %v192
  %v564 = vmul.f32 %v532, %v192
  %v565 = vmul.f32 %v533, %v192
  %v566 = vmul.f32 %v534, %v192
  %v567 = vmul.f32 %v535, %v192
  %v568 = vmul.f32 %v536, %v536
  %v569 = vmul.f32 %v537, %v537
  %v570 = vmul.f32 %v538, %v538
  %v571 = vmul.f32 %v539, %v539
  %v572 = vmul.f32 %v540, %v540
  %v573 = vmul.f32 %v541, %v541
  %v574 = vmul.f32 %v542, %v542
  %v575 = vmul.f32 %v543, %v543
  %v576 = vmul.f32 %v544, %v544
  %v577 = vmul.f32 %v545, %v545
  %v578 = vmul.f32 %v546, %v546
  %v579 = vmul.f32 %v547, %v547
  %v580 = vmul.f32 %v548, %v548
  %v581 = vmul.f32 %v549, %v549
  %v582 = vmul.f32 %v550, %v550
  %v583 = vmul.f32 %v551, %v551
  %v584 = vmul.f32 %v552, %v552
  %v585 = vmul.f32 %v553, %v553
  %v586 = vmul.f32 %v554, %v554
  %v587 = vmul.f32 %v555, %v555
  %v588 = vmul.f32 %v556, %v556
  %v589 = vmul.f32 %v557, %v557
  %v590 = vmul.f32 %v558, %v558
  %v591 = vmul.f32 %v559, %v559
  %v592 = vmul.f32 %v560, %v560
  %v593 = vmul.f32 %v561, %v561
  %v594 = vmul.f32 %v562, %v562
  %v595 = vmul.f32 %v563, %v563
  %v596 = vmul.f32 %v564, %v564
  %v597 = vmul.f32 %v565, %v565
  %v598 = vmul.f32 %v566, %v566
  %v599 = vmul.f32 %v567, %v567
  %v600 = vadd.f32 %v568, 1.0
  %v601 = vadd.f32 %v569, 1.0
  %v602 = vadd.f32 %v570, 1.0
  %v603 = vadd.f32 %v571, 1.0
  %v604 = vadd.f32 %v572, 1.0
  %v605 = vadd.f32 %v573, 1.0
  %v606 = vadd.f32 %v574, 1.0
  %v607 = vadd.f32 %v575, 1.0
  %v608 = vadd.f32 %v576, 1.0
  %v609 = vadd.f32 %v577, 1.0
  %v610 = vadd.f32 %v578, 1.0
  %v611 = vadd.f32 %v579, 1.0
  %v612 = vadd.f32 %v580, 1.0
  %v613 = vadd.f32 %v581, 1.0
  %v614 = vadd.f32 %v582, 1.0
  %v615 = vadd.f32 %v583, 1.0
  %v616 = vadd.f32 %v584, 1.0
  %v617 = vadd.f32 %v585, 1.0
  %v618 = vadd.f32 %v586, 1.0
  %v619 = vadd.f32 %v587, 1.0
  %v620 = vadd.f32 %v588, 1.0
  %v621 = vadd.f32 %v589, 1.0
  %v622 = vadd.f32 %v590, 1.0
  %v623 = vadd.f32 %v591, 1.0
  %v624 = vadd.f32 %v592, 1.0
  %v625 = vadd.f32 %v593, 1.0
  %v626 = vadd.f32 %v594, 1.0
  %v627 = vadd.f32 %v595, 1.0
  %v628 = vadd.f32 %v596, 1.0
  %v629 = vadd.f32 %v597, 1.0
  %v630 = vadd.f32 %v598, 1.0
  %v631 = vadd.f32 %v599, 1.0
  %v632 = vrsqrt.pop %v600
  %v633 = vrsqrt.pop %v601
  %v634 = vrsqrt.pop %v602
  %v635 = vrsqrt.pop %v603
  %v636 = vrsqrt.pop %v604
  %v637 = vrsqrt.pop %v605
  %v638 = vrsqrt.pop %v606
  %v639 = vrsqrt.pop %v607
  %v640 = vrsqrt.pop %v608
  %v641 = vrsqrt.pop %v609
  %v642 = vrsqrt.pop %v610
  %v643 = vrsqrt.pop %v611
  %v644 = vrsqrt.pop %v612
  %v645 = vrsqrt.pop %v613
  %v646 = vrsqrt.pop %v614
  %v647 = vrsqrt.pop %v615
  %v648 = vrsqrt.pop %v616
  %v649 = vrsqrt.pop %v617
  %v650 = vrsqrt.pop %v618
  %v651 = vrsqrt.pop %v619
  %v652 = vrsqrt.pop %v620
  %v653 = vrsqrt.pop %v621
  %v654 = vrsqrt.pop %v622
  %v655 = vrsqrt.pop %v623
  %v656 = vrsqrt.pop %v624
  %v657 = vrsqrt.pop %v625
  %v658 = vrsqrt.pop %v626
  %v659 = vrsqrt.pop %v627
  %v660 = vrsqrt.pop %v628
  %v661 = vrsqrt.pop %v629
  %v662 = vrsqrt.pop %v630
  %v663 = vrsqrt.pop %v631
  %v664 = vmul.f32 %v504, %v632
  %v665 = vmul.f32 %v505, %v633
  %v666 = vmul.f32 %v506, %v634
  %v667 = vmul.f32 %v507, %v635
  %v668 = vmul.f32 %v508, %v636
  %v669 = vmul.f32 %v509, %v637
  %v670 = vmul.f32 %v510, %v638
  %v671 = vmul.f32 %v511, %v639
  %v672 = vmul.f32 %v512, %v640
  %v673 = vmul.f32 %v513, %v641
  %v674 = vmul.f32 %v514, %v642
  %v675 = vmul.f32 %v515, %v643
  %v676 = vmul.f32 %v516, %v644
  %v677 = vmul.f32 %v517, %v645
  %v678 = vmul.f32 %v518, %v646
  %v679 = vmul.f32 %v519, %v647
  %v680 = vmul.f32 %v520, %v648
  %v681 = vmul.f32 %v521, %v649
  %v682 = vmul.f32 %v522, %v650
  %v683 = vmul.f32 %v523, %v651
  %v684 = vmul.f32 %v524, %v652
  %v685 = vmul.f32 %v525, %v653
  %v686 = vmul.f32 %v526, %v654
  %v687 = vmul.f32 %v527, %v655
  %v688 = vmul.f32 %v528, %v656
  %v689 = vmul.f32 %v529, %v657
  %v690 = vmul.f32 %v530, %v658
  %v691 = vmul.f32 %v531, %v659
  %v692 = vmul.f32 %v532, %v660
  %v693 = vmul.f32 %v533, %v661
  %v694 = vmul.f32 %v534, %v662
  %v695 = vmul.f32 %v535, %v663
  %v696 = vadd.f32 %v664, %v665
  %v697 = vadd.f32 %v696, %v666
  %v698 = vadd.f32 %v697, %v667
  %v699 = vadd.f32 %v698, %v668
  %v700 = vadd.f32 %v699, %v669
  %v701 = vadd.f32 %v700, %v670
  %v702 = vadd.f32 %v701, %v671
  %v703 = vadd.f32 %v702, %v672
  %v704 = vadd.f32 %v703, %v673
  %v705 = vadd.f32 %v704, %v674
  %v706 = vadd.f32 %v705, %v675
  %v707 = vadd.f32 %v706, %v676
  %v708 = vadd.f32 %v707, %v677
  %v709 = vadd.f32 %v708, %v678
  %v710 = vadd.f32 %v709, %v679
  %v711 = vadd.f32 %v710, %v680
  %v712 = vadd.f32 %v711, %v681
  %v713 = vadd.f32 %v712, %v682
  %v714 = vadd.f32 %v713, %v683
  %v715 = vadd.f32 %v714, %v684
  %v716 = vadd.f32 %v715, %v685
  %v717 = vadd.f32 %v716, %v686
  %v718 = vadd.f32 %v717, %v687
  %v719 = vadd.f32 %v718, %v688
  %v720 = vadd.f32 %v719, %v689
  %v721 = vadd.f32 %v720, %v690
  %v722 = vadd.f32 %v721, %v691
  %v723 = vadd.f32 %v722, %v692
  %v724 = vadd.f32 %v723, %v693
  %v725 = vadd.f32 %v724, %v694
  %v726 = vadd.f32 %v725, %v695
  %v727 = vrot.slane %v726, 4
  %v728 = vadd.f32 %v726, %v727
  %v729 = vrot.slane %v728, 2
  %v730 = vadd.f32 %v728, %v729
  %v731 = vrot.slane %v730, 1
  %v732 = vadd.f32 %v730, %v731
  %v733 = vmul.f32 %v632, %v632
  %v734 = vmul.f32 %v633, %v633
  %v735 = vmul.f32 %v634, %v634
  %v736 = vmul.f32 %v635, %v635
  %v737 = vmul.f32 %v636, %v636
  %v738 = vmul.f32 %v637, %v637
  %v739 = vmul.f32 %v638, %v638
  %v740 = vmul.f32 %v639, %v639
  %v741 = vmul.f32 %v640, %v640
  %v742 = vmul.f32 %v641, %v641
  %v743 = vmul.f32 %v642, %v642
  %v744 = vmul.f32 %v643, %v643
  %v745 = vmul.f32 %v644, %v644
  %v746 = vmul.f32 %v645, %v645
  %v747 = vmul.f32 %v646, %v646
  %v748 = vmul.f32 %v647, %v647
  %v749 = vmul.f32 %v648, %v648
  %v750 = vmul.f32 %v649, %v649
  %v751 = vmul.f32 %v650, %v650
  %v752 = vmul.f32 %v651, %v651
  %v753 = vmul.f32 %v652, %v652
  %v754 = vmul.f32 %v653, %v653
  %v755 = vmul.f32 %v654, %v654
  %v756 = vmul.f32 %v655, %v655
  %v757 = vmul.f32 %v656, %v656
  %v758 = vmul.f32 %v657, %v657
  %v759 = vmul.f32 %v658, %v658
  %v760 = vmul.f32 %v659, %v659
  %v761 = vmul.f32 %v660, %v660
  %v762 = vmul.f32 %v661, %v661
  %v763 = vmul.f32 %v662, %v662
  %v764 = vmul.f32 %v663, %v663
  %v765 = vmul.f32 %v733, %v632
  %v766 = vmul.f32 %v734, %v633
  %v767 = vmul.f32 %v735, %v634
  %v768 = vmul.f32 %v736, %v635
  %v769 = vmul.f32 %v737, %v636
  %v770 = vmul.f32 %v738, %v637
  %v771 = vmul.f32 %v739, %v638
  %v772 = vmul.f32 %v740, %v639
  %v773 = vmul.f32 %v741, %v640
  %v774 = vmul.f32 %v742, %v641
  %v775 = vmul.f32 %v743, %v642
  %v776 = vmul.f32 %v744, %v643
  %v777 = vmul.f32 %v745, %v644
  %v778 = vmul.f32 %v746, %v645
  %v779 = vmul.f32 %v747, %v646
  %v780 = vmul.f32 %v748, %v647
  %v781 = vmul.f32 %v749, %v648
  %v782 = vmul.f32 %v750, %v649
  %v783 = vmul.f32 %v751, %v650
  %v784 = vmul.f32 %v752, %v651
  %v785 = vmul.f32 %v753, %v652
  %v786 = vmul.f32 %v754, %v653
  %v787 = vmul.f32 %v755, %v654
  %v788 = vmul.f32 %v756, %v655
  %v789 = vmul.f32 %v757, %v656
  %v790 = vmul.f32 %v758, %v657
  %v791 = vmul.f32 %v759, %v658
  %v792 = vmul.f32 %v760, %v659
  %v793 = vmul.f32 %v761, %v660
  %v794 = vmul.f32 %v762, %v661
  %v795 = vmul.f32 %v763, %v662
  %v796 = vmul.f32 %v764, %v663
  %v797 = vadd.f32 %v765, %v766
  %v798 = vadd.f32 %v797, %v767
  %v799 = vadd.f32 %v798, %v768
  %v800 = vadd.f32 %v799, %v769
  %v801 = vadd.f32 %v800, %v770
  %v802 = vadd.f32 %v801, %v771
  %v803 = vadd.f32 %v802, %v772
  %v804 = vadd.f32 %v803, %v773
  %v805 = vadd.f32 %v804, %v774
  %v806 = vadd.f32 %v805, %v775
  %v807 = vadd.f32 %v806, %v776
  %v808 = vadd.f32 %v807, %v777
  %v809 = vadd.f32 %v808, %v778
  %v810 = vadd.f32 %v809, %v779
  %v811 = vadd.f32 %v810, %v780
  %v812 = vadd.f32 %v811, %v781
  %v813 = vadd.f32 %v812, %v782
  %v814 = vadd.f32 %v813, %v783
  %v815 = vadd.f32 %v814, %v784
  %v816 = vadd.f32 %v815, %v785
  %v817 = vadd.f32 %v816, %v786
  %v818 = vadd.f32 %v817, %v787
  %v819 = vadd.f32 %v818, %v788
  %v820 = vadd.f32 %v819, %v789
  %v821 = vadd.f32 %v820, %v790
  %v822 = vadd.f32 %v821, %v791
  %v823 = vadd.f32 %v822, %v792
  %v824 = vadd.f32 %v823, %v793
  %v825 = vadd.f32 %v824, %v794
  %v826 = vadd.f32 %v825, %v795
  %v827 = vadd.f32 %v826, %v796
  %v828 = vrot.slane %v827, 4
  %v829 = vadd.f32 %v827, %v828
  %v830 = vrot.slane %v829, 2
  %v831 = vadd.f32 %v829, %v830
  %v832 = vrot.slane %v831, 1
  %v833 = vadd.f32 %v831, %v832
  %vm834 = vcmp.lt.f32.partialorder %v732, 0.0
  %v835 = vsel %vm834, %v503, %v492
  %vm836 = vcmp.gt.f32.partialorder %v732, 0.0
  %v837 = vsel %vm836, %v503, %v494
  %v838 = vrcp.pop %v833
  %v839 = vmul.f32 %v732, %v838
  %v840 = vsub.f32 %v503, %v839
  %vm841 = vcmp.ge.f32.partialorder %v840, %v835
  %vm842 = vcmp.le.f32.partialorder %v840, %v837
  %vm843 = vmand %vm841, %vm842
  %v844 = vadd.f32 %v835, %v837
  %v845 = vmul.f32 %v844, 0.5
  %v846 = vsel %vm843, %v840, %v845
  %v847 = vsub.f32 %v846, %v16
  %v848 = vsub.f32 %v846, %v17
  %v849 = vsub.f32 %v846, %v18
  %v850 = vsub.f32 %v846, %v19
  %v851 = vsub.f32 %v846, %v20
  %v852 = vsub.f32 %v846, %v21
  %v853 = vsub.f32 %v846, %v22
  %v854 = vsub.f32 %v846, %v23
  %v855 = vsub.f32 %v846, %v24
  %v856 = vsub.f32 %v846, %v25
  %v857 = vsub.f32 %v846, %v26
  %v858 = vsub.f32 %v846, %v27
  %v859 = vsub.f32 %v846, %v28
  %v860 = vsub.f32 %v846, %v29
  %v861 = vsub.f32 %v846, %v30
  %v862 = vsub.f32 %v846, %v31
  %v863 = vsub.f32 %v846, %v32
  %v864 = vsub.f32 %v846, %v33
  %v865 = vsub.f32 %v846, %v34
  %v866 = vsub.f32 %v846, %v35
  %v867 = vsub.f32 %v846, %v36
  %v868 = vsub.f32 %v846, %v37
  %v869 = vsub.f32 %v846, %v38
  %v870 = vsub.f32 %v846, %v39
  %v871 = vsub.f32 %v846, %v40
  %v872 = vsub.f32 %v846, %v41
  %v873 = vsub.f32 %v846, %v42
  %v874 = vsub.f32 %v846, %v43
  %v875 = vsub.f32 %v846, %v44
  %v876 = vsub.f32 %v846, %v45
  %v877 = vsub.f32 %v846, %v46
  %v878 = vsub.f32 %v846, %v47
  %v879 = vmul.f32 %v847, %v192
  %v880 = vmul.f32 %v848, %v192
  %v881 = vmul.f32 %v849, %v192
  %v882 = vmul.f32 %v850, %v192
  %v883 = vmul.f32 %v851, %v192
  %v884 = vmul.f32 %v852, %v192
  %v885 = vmul.f32 %v853, %v192
  %v886 = vmul.f32 %v854, %v192
  %v887 = vmul.f32 %v855, %v192
  %v888 = vmul.f32 %v856, %v192
  %v889 = vmul.f32 %v857, %v192
  %v890 = vmul.f32 %v858, %v192
  %v891 = vmul.f32 %v859, %v192
  %v892 = vmul.f32 %v860, %v192
  %v893 = vmul.f32 %v861, %v192
  %v894 = vmul.f32 %v862, %v192
  %v895 = vmul.f32 %v863, %v192
  %v896 = vmul.f32 %v864, %v192
  %v897 = vmul.f32 %v865, %v192
  %v898 = vmul.f32 %v866, %v192
  %v899 = vmul.f32 %v867, %v192
  %v900 = vmul.f32 %v868, %v192
  %v901 = vmul.f32 %v869, %v192
  %v902 = vmul.f32 %v870, %v192
  %v903 = vmul.f32 %v871, %v192
  %v904 = vmul.f32 %v872, %v192
  %v905 = vmul.f32 %v873, %v192
  %v906 = vmul.f32 %v874, %v192
  %v907 = vmul.f32 %v875, %v192
  %v908 = vmul.f32 %v876, %v192
  %v909 = vmul.f32 %v877, %v192
  %v910 = vmul.f32 %v878, %v192
  %v911 = vmul.f32 %v879, %v879
  %v912 = vmul.f32 %v880, %v880
  %v913 = vmul.f32 %v881, %v881
  %v914 = vmul.f32 %v882, %v882
  %v915 = vmul.f32 %v883, %v883
  %v916 = vmul.f32 %v884, %v884
  %v917 = vmul.f32 %v885, %v885
  %v918 = vmul.f32 %v886, %v886
  %v919 = vmul.f32 %v887, %v887
  %v920 = vmul.f32 %v888, %v888
  %v921 = vmul.f32 %v889, %v889
  %v922 = vmul.f32 %v890, %v890
  %v923 = vmul.f32 %v891, %v891
  %v924 = vmul.f32 %v892, %v892
  %v925 = vmul.f32 %v893, %v893
  %v926 = vmul.f32 %v894, %v894
  %v927 = vmul.f32 %v895, %v895
  %v928 = vmul.f32 %v896, %v896
  %v929 = vmul.f32 %v897, %v897
  %v930 = vmul.f32 %v898, %v898
  %v931 = vmul.f32 %v899, %v899
  %v932 = vmul.f32 %v900, %v900
  %v933 = vmul.f32 %v901, %v901
  %v934 = vmul.f32 %v902, %v902
  %v935 = vmul.f32 %v903, %v903
  %v936 = vmul.f32 %v904, %v904
  %v937 = vmul.f32 %v905, %v905
  %v938 = vmul.f32 %v906, %v906
  %v939 = vmul.f32 %v907, %v907
  %v940 = vmul.f32 %v908, %v908
  %v941 = vmul.f32 %v909, %v909
  %v942 = vmul.f32 %v910, %v910
  %v943 = vadd.f32 %v911, 1.0
  %v944 = vadd.f32 %v912, 1.0
  %v945 = vadd.f32 %v913, 1.0
  %v946 = vadd.f32 %v914, 1.0
  %v947 = vadd.f32 %v915, 1.0
  %v948 = vadd.f32 %v916, 1.0
  %v949 = vadd.f32 %v917, 1.0
  %v950 = vadd.f32 %v918, 1.0
  %v951 = vadd.f32 %v919, 1.0
  %v952 = vadd.f32 %v920, 1.0
  %v953 = vadd.f32 %v921, 1.0
  %v954 = vadd.f32 %v922, 1.0
  %v955 = vadd.f32 %v923, 1.0
  %v956 = vadd.f32 %v924, 1.0
  %v957 = vadd.f32 %v925, 1.0
  %v958 = vadd.f32 %v926, 1.0
  %v959 = vadd.f32 %v927, 1.0
  %v960 = vadd.f32 %v928, 1.0
  %v961 = vadd.f32 %v929, 1.0
  %v962 = vadd.f32 %v930, 1.0
  %v963 = vadd.f32 %v931, 1.0
  %v964 = vadd.f32 %v932, 1.0
  %v965 = vadd.f32 %v933, 1.0
  %v966 = vadd.f32 %v934, 1.0
  %v967 = vadd.f32 %v935, 1.0
  %v968 = vadd.f32 %v936, 1.0
  %v969 = vadd.f32 %v937, 1.0
  %v970 = vadd.f32 %v938, 1.0
  %v971 = vadd.f32 %v939, 1.0
  %v972 = vadd.f32 %v940, 1.0
  %v973 = vadd.f32 %v941, 1.0
  %v974 = vadd.f32 %v942, 1.0
  %v975 = vrsqrt.pop %v943
  %v976 = vrsqrt.pop %v944
  %v977 = vrsqrt.pop %v945
  %v978 = vrsqrt.pop %v946
  %v979 = vrsqrt.pop %v947
  %v980 = vrsqrt.pop %v948
  %v981 = vrsqrt.pop %v949
  %v982 = vrsqrt.pop %v950
  %v983 = vrsqrt.pop %v951
  %v984 = vrsqrt.pop %v952
  %v985 = vrsqrt.pop %v953
  %v986 = vrsqrt.pop %v954
  %v987 = vrsqrt.pop %v955
  %v988 = vrsqrt.pop %v956
  %v989 = vrsqrt.pop %v957
  %v990 = vrsqrt.pop %v958
  %v991 = vrsqrt.pop %v959
  %v992 = vrsqrt.pop %v960
  %v993 = vrsqrt.pop %v961
  %v994 = vrsqrt.pop %v962
  %v995 = vrsqrt.pop %v963
  %v996 = vrsqrt.pop %v964
  %v997 = vrsqrt.pop %v965
  %v998 = vrsqrt.pop %v966
  %v999 = vrsqrt.pop %v967
  %v1000 = vrsqrt.pop %v968
  %v1001 = vrsqrt.pop %v969
  %v1002 = vrsqrt.pop %v970
  %v1003 = vrsqrt.pop %v971
  %v1004 = vrsqrt.pop %v972
  %v1005 = vrsqrt.pop %v973
  %v1006 = vrsqrt.pop %v974
  %v1007 = vmul.f32 %v847, %v975
  %v1008 = vmul.f32 %v848, %v976
  %v1009 = vmul.f32 %v849, %v977
  %v1010 = vmul.f32 %v850, %v978
  %v1011 = vmul.f32 %v851, %v979
  %v1012 = vmul.f32 %v852, %v980
  %v1013 = vmul.f32 %v853, %v981
  %v1014 = vmul.f32 %v854, %v982
  %v1015 = vmul.f32 %v855, %v983
  %v1016 = vmul.f32 %v856, %v984
  %v1017 = vmul.f32 %v857, %v985
  %v1018 = vmul.f32 %v858, %v986
  %v1019 = vmul.f32 %v859, %v987
  %v1020 = vmul.f32 %v860, %v988
  %v1021 = vmul.f32 %v861, %v989
  %v1022 = vmul.f32 %v862, %v990
  %v1023 = vmul.f32 %v863, %v991
  %v1024 = vmul.f32 %v864, %v992
  %v1025 = vmul.f32 %v865, %v993
  %v1026 = vmul.f32 %v866, %v994
  %v1027 = vmul.f32 %v867, %v995
  %v1028 = vmul.f32 %v868, %v996
  %v1029 = vmul.f32 %v869, %v997
  %v1030 = vmul.f32 %v870, %v998
  %v1031 = vmul.f32 %v871, %v999
  %v1032 = vmul.f32 %v872, %v1000
  %v1033 = vmul.f32 %v873, %v1001
  %v1034 = vmul.f32 %v874, %v1002
  %v1035 = vmul.f32 %v875, %v1003
  %v1036 = vmul.f32 %v876, %v1004
  %v1037 = vmul.f32 %v877, %v1005
  %v1038 = vmul.f32 %v878, %v1006
  %v1039 = vadd.f32 %v1007, %v1008
  %v1040 = vadd.f32 %v1039, %v1009
  %v1041 = vadd.f32 %v1040, %v1010
  %v1042 = vadd.f32 %v1041, %v1011
  %v1043 = vadd.f32 %v1042, %v1012
  %v1044 = vadd.f32 %v1043, %v1013
  %v1045 = vadd.f32 %v1044, %v1014
  %v1046 = vadd.f32 %v1045, %v1015
  %v1047 = vadd.f32 %v1046, %v1016
  %v1048 = vadd.f32 %v1047, %v1017
  %v1049 = vadd.f32 %v1048, %v1018
  %v1050 = vadd.f32 %v1049, %v1019
  %v1051 = vadd.f32 %v1050, %v1020
  %v1052 = vadd.f32 %v1051, %v1021
  %v1053 = vadd.f32 %v1052, %v1022
  %v1054 = vadd.f32 %v1053, %v1023
  %v1055 = vadd.f32 %v1054, %v1024
  %v1056 = vadd.f32 %v1055, %v1025
  %v1057 = vadd.f32 %v1056, %v1026
  %v1058 = vadd.f32 %v1057, %v1027
  %v1059 = vadd.f32 %v1058, %v1028
  %v1060 = vadd.f32 %v1059, %v1029
  %v1061 = vadd.f32 %v1060, %v1030
  %v1062 = vadd.f32 %v1061, %v1031
  %v1063 = vadd.f32 %v1062, %v1032
  %v1064 = vadd.f32 %v1063, %v1033
  %v1065 = vadd.f32 %v1064, %v1034
  %v1066 = vadd.f32 %v1065, %v1035
  %v1067 = vadd.f32 %v1066, %v1036
  %v1068 = vadd.f32 %v1067, %v1037
  %v1069 = vadd.f32 %v1068, %v1038
  %v1070 = vrot.slane %v1069, 4
  %v1071 = vadd.f32 %v1069, %v1070
  %v1072 = vrot.slane %v1071, 2
  %v1073 = vadd.f32 %v1071, %v1072
  %v1074 = vrot.slane %v1073, 1
  %v1075 = vadd.f32 %v1073, %v1074
  %v1076 = vmul.f32 %v975, %v975
  %v1077 = vmul.f32 %v976, %v976
  %v1078 = vmul.f32 %v977, %v977
  %v1079 = vmul.f32 %v978, %v978
  %v1080 = vmul.f32 %v979, %v979
  %v1081 = vmul.f32 %v980, %v980
  %v1082 = vmul.f32 %v981, %v981
  %v1083 = vmul.f32 %v982, %v982
  %v1084 = vmul.f32 %v983, %v983
  %v1085 = vmul.f32 %v984, %v984
  %v1086 = vmul.f32 %v985, %v985
  %v1087 = vmul.f32 %v986, %v986
  %v1088 = vmul.f32 %v987, %v987
  %v1089 = vmul.f32 %v988, %v988
  %v1090 = vmul.f32 %v989, %v989
  %v1091 = vmul.f32 %v990, %v990
  %v1092 = vmul.f32 %v991, %v991
  %v1093 = vmul.f32 %v992, %v992
  %v1094 = vmul.f32 %v993, %v993
  %v1095 = vmul.f32 %v994, %v994
  %v1096 = vmul.f32 %v995, %v995
  %v1097 = vmul.f32 %v996, %v996
  %v1098 = vmul.f32 %v997, %v997
  %v1099 = vmul.f32 %v998, %v998
  %v1100 = vmul.f32 %v999, %v999
  %v1101 = vmul.f32 %v1000, %v1000
  %v1102 = vmul.f32 %v1001, %v1001
  %v1103 = vmul.f32 %v1002, %v1002
  %v1104 = vmul.f32 %v1003, %v1003
  %v1105 = vmul.f32 %v1004, %v1004
  %v1106 = vmul.f32 %v1005, %v1005
  %v1107 = vmul.f32 %v1006, %v1006
  %v1108 = vmul.f32 %v1076, %v975
  %v1109 = vmul.f32 %v1077, %v976
  %v1110 = vmul.f32 %v1078, %v977
  %v1111 = vmul.f32 %v1079, %v978
  %v1112 = vmul.f32 %v1080, %v979
  %v1113 = vmul.f32 %v1081, %v980
  %v1114 = vmul.f32 %v1082, %v981
  %v1115 = vmul.f32 %v1083, %v982
  %v1116 = vmul.f32 %v1084, %v983
  %v1117 = vmul.f32 %v1085, %v984
  %v1118 = vmul.f32 %v1086, %v985
  %v1119 = vmul.f32 %v1087, %v986
  %v1120 = vmul.f32 %v1088, %v987
  %v1121 = vmul.f32 %v1089, %v988
  %v1122 = vmul.f32 %v1090, %v989
  %v1123 = vmul.f32 %v1091, %v990
  %v1124 = vmul.f32 %v1092, %v991
  %v1125 = vmul.f32 %v1093, %v992
  %v1126 = vmul.f32 %v1094, %v993
  %v1127 = vmul.f32 %v1095, %v994
  %v1128 = vmul.f32 %v1096, %v995
  %v1129 = vmul.f32 %v1097, %v996
  %v1130 = vmul.f32 %v1098, %v997
  %v1131 = vmul.f32 %v1099, %v998
  %v1132 = vmul.f32 %v1100, %v999
  %v1133 = vmul.f32 %v1101, %v1000
  %v1134 = vmul.f32 %v1102, %v1001
  %v1135 = vmul.f32 %v1103, %v1002
  %v1136 = vmul.f32 %v1104, %v1003
  %v1137 = vmul.f32 %v1105, %v1004
  %v1138 = vmul.f32 %v1106, %v1005
  %v1139 = vmul.f32 %v1107, %v1006
  %v1140 = vadd.f32 %v1108, %v1109
  %v1141 = vadd.f32 %v1140, %v1110
  %v1142 = vadd.f32 %v1141, %v1111
  %v1143 = vadd.f32 %v1142, %v1112
  %v1144 = vadd.f32 %v1143, %v1113
  %v1145 = vadd.f32 %v1144, %v1114
  %v1146 = vadd.f32 %v1145, %v1115
  %v1147 = vadd.f32 %v1146, %v1116
  %v1148 = vadd.f32 %v1147, %v1117
  %v1149 = vadd.f32 %v1148, %v1118
  %v1150 = vadd.f32 %v1149, %v1119
  %v1151 = vadd.f32 %v1150, %v1120
  %v1152 = vadd.f32 %v1151, %v1121
  %v1153 = vadd.f32 %v1152, %v1122
  %v1154 = vadd.f32 %v1153, %v1123
  %v1155 = vadd.f32 %v1154, %v1124
  %v1156 = vadd.f32 %v1155, %v1125
  %v1157 = vadd.f32 %v1156, %v1126
  %v1158 = vadd.f32 %v1157, %v1127
  %v1159 = vadd.f32 %v1158, %v1128
  %v1160 = vadd.f32 %v1159, %v1129
  %v1161 = vadd.f32 %v1160, %v1130
  %v1162 = vadd.f32 %v1161, %v1131
  %v1163 = vadd.f32 %v1162, %v1132
  %v1164 = vadd.f32 %v1163, %v1133
  %v1165 = vadd.f32 %v1164, %v1134
  %v1166 = vadd.f32 %v1165, %v1135
  %v1167 = vadd.f32 %v1166, %v1136
  %v1168 = vadd.f32 %v1167, %v1137
  %v1169 = vadd.f32 %v1168, %v1138
  %v1170 = vadd.f32 %v1169, %v1139
  %v1171 = vrot.slane %v1170, 4
  %v1172 = vadd.f32 %v1170, %v1171
  %v1173 = vrot.slane %v1172, 2
  %v1174 = vadd.f32 %v1172, %v1173
  %v1175 = vrot.slane %v1174, 1
  %v1176 = vadd.f32 %v1174, %v1175
  %vm1177 = vcmp.lt.f32.partialorder %v1075, 0.0
  %v1178 = vsel %vm1177, %v846, %v835
  %vm1179 = vcmp.gt.f32.partialorder %v1075, 0.0
  %v1180 = vsel %vm1179, %v846, %v837
  %v1181 = vrcp.pop %v1176
  %v1182 = vmul.f32 %v1075, %v1181
  %v1183 = vsub.f32 %v846, %v1182
  %vm1184 = vcmp.ge.f32.partialorder %v1183, %v1178
  %vm1185 = vcmp.le.f32.partialorder %v1183, %v1180
  %vm1186 = vmand %vm1184, %vm1185
  %v1187 = vadd.f32 %v1178, %v1180
  %v1188 = vmul.f32 %v1187, 0.5
  %v1189 = vsel %vm1186, %v1183, %v1188
  %v1190 = vsub.f32 %v1189, %v16
  %v1191 = vsub.f32 %v1189, %v17
  %v1192 = vsub.f32 %v1189, %v18
  %v1193 = vsub.f32 %v1189, %v19
  %v1194 = vsub.f32 %v1189, %v20
  %v1195 = vsub.f32 %v1189, %v21
  %v1196 = vsub.f32 %v1189, %v22
  %v1197 = vsub.f32 %v1189, %v23
  %v1198 = vsub.f32 %v1189, %v24
  %v1199 = vsub.f32 %v1189, %v25
  %v1200 = vsub.f32 %v1189, %v26
  %v1201 = vsub.f32 %v1189, %v27
  %v1202 = vsub.f32 %v1189, %v28
  %v1203 = vsub.f32 %v1189, %v29
  %v1204 = vsub.f32 %v1189, %v30
  %v1205 = vsub.f32 %v1189, %v31
  %v1206 = vsub.f32 %v1189, %v32
  %v1207 = vsub.f32 %v1189, %v33
  %v1208 = vsub.f32 %v1189, %v34
  %v1209 = vsub.f32 %v1189, %v35
  %v1210 = vsub.f32 %v1189, %v36
  %v1211 = vsub.f32 %v1189, %v37
  %v1212 = vsub.f32 %v1189, %v38
  %v1213 = vsub.f32 %v1189, %v39
  %v1214 = vsub.f32 %v1189, %v40
  %v1215 = vsub.f32 %v1189, %v41
  %v1216 = vsub.f32 %v1189, %v42
  %v1217 = vsub.f32 %v1189, %v43
  %v1218 = vsub.f32 %v1189, %v44
  %v1219 = vsub.f32 %v1189, %v45
  %v1220 = vsub.f32 %v1189, %v46
  %v1221 = vsub.f32 %v1189, %v47
  %v1222 = vmul.f32 %v1190, %v192
  %v1223 = vmul.f32 %v1191, %v192
  %v1224 = vmul.f32 %v1192, %v192
  %v1225 = vmul.f32 %v1193, %v192
  %v1226 = vmul.f32 %v1194, %v192
  %v1227 = vmul.f32 %v1195, %v192
  %v1228 = vmul.f32 %v1196, %v192
  %v1229 = vmul.f32 %v1197, %v192
  %v1230 = vmul.f32 %v1198, %v192
  %v1231 = vmul.f32 %v1199, %v192
  %v1232 = vmul.f32 %v1200, %v192
  %v1233 = vmul.f32 %v1201, %v192
  %v1234 = vmul.f32 %v1202, %v192
  %v1235 = vmul.f32 %v1203, %v192
  %v1236 = vmul.f32 %v1204, %v192
  %v1237 = vmul.f32 %v1205, %v192
  %v1238 = vmul.f32 %v1206, %v192
  %v1239 = vmul.f32 %v1207, %v192
  %v1240 = vmul.f32 %v1208, %v192
  %v1241 = vmul.f32 %v1209, %v192
  %v1242 = vmul.f32 %v1210, %v192
  %v1243 = vmul.f32 %v1211, %v192
  %v1244 = vmul.f32 %v1212, %v192
  %v1245 = vmul.f32 %v1213, %v192
  %v1246 = vmul.f32 %v1214, %v192
  %v1247 = vmul.f32 %v1215, %v192
  %v1248 = vmul.f32 %v1216, %v192
  %v1249 = vmul.f32 %v1217, %v192
  %v1250 = vmul.f32 %v1218, %v192
  %v1251 = vmul.f32 %v1219, %v192
  %v1252 = vmul.f32 %v1220, %v192
  %v1253 = vmul.f32 %v1221, %v192
  %v1254 = vmul.f32 %v1222, %v1222
  %v1255 = vmul.f32 %v1223, %v1223
  %v1256 = vmul.f32 %v1224, %v1224
  %v1257 = vmul.f32 %v1225, %v1225
  %v1258 = vmul.f32 %v1226, %v1226
  %v1259 = vmul.f32 %v1227, %v1227
  %v1260 = vmul.f32 %v1228, %v1228
  %v1261 = vmul.f32 %v1229, %v1229
  %v1262 = vmul.f32 %v1230, %v1230
  %v1263 = vmul.f32 %v1231, %v1231
  %v1264 = vmul.f32 %v1232, %v1232
  %v1265 = vmul.f32 %v1233, %v1233
  %v1266 = vmul.f32 %v1234, %v1234
  %v1267 = vmul.f32 %v1235, %v1235
  %v1268 = vmul.f32 %v1236, %v1236
  %v1269 = vmul.f32 %v1237, %v1237
  %v1270 = vmul.f32 %v1238, %v1238
  %v1271 = vmul.f32 %v1239, %v1239
  %v1272 = vmul.f32 %v1240, %v1240
  %v1273 = vmul.f32 %v1241, %v1241
  %v1274 = vmul.f32 %v1242, %v1242
  %v1275 = vmul.f32 %v1243, %v1243
  %v1276 = vmul.f32 %v1244, %v1244
  %v1277 = vmul.f32 %v1245, %v1245
  %v1278 = vmul.f32 %v1246, %v1246
  %v1279 = vmul.f32 %v1247, %v1247
  %v1280 = vmul.f32 %v1248, %v1248
  %v1281 = vmul.f32 %v1249, %v1249
  %v1282 = vmul.f32 %v1250, %v1250
  %v1283 = vmul.f32 %v1251, %v1251
  %v1284 = vmul.f32 %v1252, %v1252
  %v1285 = vmul.f32 %v1253, %v1253
  %v1286 = vadd.f32 %v1254, 1.0
  %v1287 = vadd.f32 %v1255, 1.0
  %v1288 = vadd.f32 %v1256, 1.0
  %v1289 = vadd.f32 %v1257, 1.0
  %v1290 = vadd.f32 %v1258, 1.0
  %v1291 = vadd.f32 %v1259, 1.0
  %v1292 = vadd.f32 %v1260, 1.0
  %v1293 = vadd.f32 %v1261, 1.0
  %v1294 = vadd.f32 %v1262, 1.0
  %v1295 = vadd.f32 %v1263, 1.0
  %v1296 = vadd.f32 %v1264, 1.0
  %v1297 = vadd.f32 %v1265, 1.0
  %v1298 = vadd.f32 %v1266, 1.0
  %v1299 = vadd.f32 %v1267, 1.0
  %v1300 = vadd.f32 %v1268, 1.0
  %v1301 = vadd.f32 %v1269, 1.0
  %v1302 = vadd.f32 %v1270, 1.0
  %v1303 = vadd.f32 %v1271, 1.0
  %v1304 = vadd.f32 %v1272, 1.0
  %v1305 = vadd.f32 %v1273, 1.0
  %v1306 = vadd.f32 %v1274, 1.0
  %v1307 = vadd.f32 %v1275, 1.0
  %v1308 = vadd.f32 %v1276, 1.0
  %v1309 = vadd.f32 %v1277, 1.0
  %v1310 = vadd.f32 %v1278, 1.0
  %v1311 = vadd.f32 %v1279, 1.0
  %v1312 = vadd.f32 %v1280, 1.0
  %v1313 = vadd.f32 %v1281, 1.0
  %v1314 = vadd.f32 %v1282, 1.0
  %v1315 = vadd.f32 %v1283, 1.0
  %v1316 = vadd.f32 %v1284, 1.0
  %v1317 = vadd.f32 %v1285, 1.0
  %v1318 = vrsqrt.pop %v1286
  %v1319 = vrsqrt.pop %v1287
  %v1320 = vrsqrt.pop %v1288
  %v1321 = vrsqrt.pop %v1289
  %v1322 = vrsqrt.pop %v1290
  %v1323 = vrsqrt.pop %v1291
  %v1324 = vrsqrt.pop %v1292
  %v1325 = vrsqrt.pop %v1293
  %v1326 = vrsqrt.pop %v1294
  %v1327 = vrsqrt.pop %v1295
  %v1328 = vrsqrt.pop %v1296
  %v1329 = vrsqrt.pop %v1297
  %v1330 = vrsqrt.pop %v1298
  %v1331 = vrsqrt.pop %v1299
  %v1332 = vrsqrt.pop %v1300
  %v1333 = vrsqrt.pop %v1301
  %v1334 = vrsqrt.pop %v1302
  %v1335 = vrsqrt.pop %v1303
  %v1336 = vrsqrt.pop %v1304
  %v1337 = vrsqrt.pop %v1305
  %v1338 = vrsqrt.pop %v1306
  %v1339 = vrsqrt.pop %v1307
  %v1340 = vrsqrt.pop %v1308
  %v1341 = vrsqrt.pop %v1309
  %v1342 = vrsqrt.pop %v1310
  %v1343 = vrsqrt.pop %v1311
  %v1344 = vrsqrt.pop %v1312
  %v1345 = vrsqrt.pop %v1313
  %v1346 = vrsqrt.pop %v1314
  %v1347 = vrsqrt.pop %v1315
  %v1348 = vrsqrt.pop %v1316
  %v1349 = vrsqrt.pop %v1317
  %v1350 = vmul.f32 %v1190, %v1318
  %v1351 = vmul.f32 %v1191, %v1319
  %v1352 = vmul.f32 %v1192, %v1320
  %v1353 = vmul.f32 %v1193, %v1321
  %v1354 = vmul.f32 %v1194, %v1322
  %v1355 = vmul.f32 %v1195, %v1323
  %v1356 = vmul.f32 %v1196, %v1324
  %v1357 = vmul.f32 %v1197, %v1325
  %v1358 = vmul.f32 %v1198, %v1326
  %v1359 = vmul.f32 %v1199, %v1327
  %v1360 = vmul.f32 %v1200, %v1328
  %v1361 = vmul.f32 %v1201, %v1329
  %v1362 = vmul.f32 %v1202, %v1330
  %v1363 = vmul.f32 %v1203, %v1331
  %v1364 = vmul.f32 %v1204, %v1332
  %v1365 = vmul.f32 %v1205, %v1333
  %v1366 = vmul.f32 %v1206, %v1334
  %v1367 = vmul.f32 %v1207, %v1335
  %v1368 = vmul.f32 %v1208, %v1336
  %v1369 = vmul.f32 %v1209, %v1337
  %v1370 = vmul.f32 %v1210, %v1338
  %v1371 = vmul.f32 %v1211, %v1339
  %v1372 = vmul.f32 %v1212, %v1340
  %v1373 = vmul.f32 %v1213, %v1341
  %v1374 = vmul.f32 %v1214, %v1342
  %v1375 = vmul.f32 %v1215, %v1343
  %v1376 = vmul.f32 %v1216, %v1344
  %v1377 = vmul.f32 %v1217, %v1345
  %v1378 = vmul.f32 %v1218, %v1346
  %v1379 = vmul.f32 %v1219, %v1347
  %v1380 = vmul.f32 %v1220, %v1348
  %v1381 = vmul.f32 %v1221, %v1349
  %v1382 = vadd.f32 %v1350, %v1351
  %v1383 = vadd.f32 %v1382, %v1352
  %v1384 = vadd.f32 %v1383, %v1353
  %v1385 = vadd.f32 %v1384, %v1354
  %v1386 = vadd.f32 %v1385, %v1355
  %v1387 = vadd.f32 %v1386, %v1356
  %v1388 = vadd.f32 %v1387, %v1357
  %v1389 = vadd.f32 %v1388, %v1358
  %v1390 = vadd.f32 %v1389, %v1359
  %v1391 = vadd.f32 %v1390, %v1360
  %v1392 = vadd.f32 %v1391, %v1361
  %v1393 = vadd.f32 %v1392, %v1362
  %v1394 = vadd.f32 %v1393, %v1363
  %v1395 = vadd.f32 %v1394, %v1364
  %v1396 = vadd.f32 %v1395, %v1365
  %v1397 = vadd.f32 %v1396, %v1366
  %v1398 = vadd.f32 %v1397, %v1367
  %v1399 = vadd.f32 %v1398, %v1368
  %v1400 = vadd.f32 %v1399, %v1369
  %v1401 = vadd.f32 %v1400, %v1370
  %v1402 = vadd.f32 %v1401, %v1371
  %v1403 = vadd.f32 %v1402, %v1372
  %v1404 = vadd.f32 %v1403, %v1373
  %v1405 = vadd.f32 %v1404, %v1374
  %v1406 = vadd.f32 %v1405, %v1375
  %v1407 = vadd.f32 %v1406, %v1376
  %v1408 = vadd.f32 %v1407, %v1377
  %v1409 = vadd.f32 %v1408, %v1378
  %v1410 = vadd.f32 %v1409, %v1379
  %v1411 = vadd.f32 %v1410, %v1380
  %v1412 = vadd.f32 %v1411, %v1381
  %v1413 = vrot.slane %v1412, 4
  %v1414 = vadd.f32 %v1412, %v1413
  %v1415 = vrot.slane %v1414, 2
  %v1416 = vadd.f32 %v1414, %v1415
  %v1417 = vrot.slane %v1416, 1
  %v1418 = vadd.f32 %v1416, %v1417
  %v1419 = vmul.f32 %v1318, %v1318
  %v1420 = vmul.f32 %v1319, %v1319
  %v1421 = vmul.f32 %v1320, %v1320
  %v1422 = vmul.f32 %v1321, %v1321
  %v1423 = vmul.f32 %v1322, %v1322
  %v1424 = vmul.f32 %v1323, %v1323
  %v1425 = vmul.f32 %v1324, %v1324
  %v1426 = vmul.f32 %v1325, %v1325
  %v1427 = vmul.f32 %v1326, %v1326
  %v1428 = vmul.f32 %v1327, %v1327
  %v1429 = vmul.f32 %v1328, %v1328
  %v1430 = vmul.f32 %v1329, %v1329
  %v1431 = vmul.f32 %v1330, %v1330
  %v1432 = vmul.f32 %v1331, %v1331
  %v1433 = vmul.f32 %v1332, %v1332
  %v1434 = vmul.f32 %v1333, %v1333
  %v1435 = vmul.f32 %v1334, %v1334
  %v1436 = vmul.f32 %v1335, %v1335
  %v1437 = vmul.f32 %v1336, %v1336
  %v1438 = vmul.f32 %v1337, %v1337
  %v1439 = vmul.f32 %v1338, %v1338
  %v1440 = vmul.f32 %v1339, %v1339
  %v1441 = vmul.f32 %v1340, %v1340
  %v1442 = vmul.f32 %v1341, %v1341
  %v1443 = vmul.f32 %v1342, %v1342
  %v1444 = vmul.f32 %v1343, %v1343
  %v1445 = vmul.f32 %v1344, %v1344
  %v1446 = vmul.f32 %v1345, %v1345
  %v1447 = vmul.f32 %v1346, %v1346
  %v1448 = vmul.f32 %v1347, %v1347
  %v1449 = vmul.f32 %v1348, %v1348
  %v1450 = vmul.f32 %v1349, %v1349
  %v1451 = vmul.f32 %v1419, %v1318
  %v1452 = vmul.f32 %v1420, %v1319
  %v1453 = vmul.f32 %v1421, %v1320
  %v1454 = vmul.f32 %v1422, %v1321
  %v1455 = vmul.f32 %v1423, %v1322
  %v1456 = vmul.f32 %v1424, %v1323
  %v1457 = vmul.f32 %v1425, %v1324
  %v1458 = vmul.f32 %v1426, %v1325
  %v1459 = vmul.f32 %v1427, %v1326
  %v1460 = vmul.f32 %v1428, %v1327
  %v1461 = vmul.f32 %v1429, %v1328
  %v1462 = vmul.f32 %v1430, %v1329
  %v1463 = vmul.f32 %v1431, %v1330
  %v1464 = vmul.f32 %v1432, %v1331
  %v1465 = vmul.f32 %v1433, %v1332
  %v1466 = vmul.f32 %v1434, %v1333
  %v1467 = vmul.f32 %v1435, %v1334
  %v1468 = vmul.f32 %v1436, %v1335
  %v1469 = vmul.f32 %v1437, %v1336
  %v1470 = vmul.f32 %v1438, %v1337
  %v1471 = vmul.f32 %v1439, %v1338
  %v1472 = vmul.f32 %v1440, %v1339
  %v1473 = vmul.f32 %v1441, %v1340
  %v1474 = vmul.f32 %v1442, %v1341
  %v1475 = vmul.f32 %v1443, %v1342
  %v1476 = vmul.f32 %v1444, %v1343
  %v1477 = vmul.f32 %v1445, %v1344
  %v1478 = vmul.f32 %v1446, %v1345
  %v1479 = vmul.f32 %v1447, %v1346
  %v1480 = vmul.f32 %v1448, %v1347
  %v1481 = vmul.f32 %v1449, %v1348
  %v1482 = vmul.f32 %v1450, %v1349
  %v1483 = vadd.f32 %v1451, %v1452
  %v1484 = vadd.f32 %v1483, %v1453
  %v1485 = vadd.f32 %v1484, %v1454
  %v1486 = vadd.f32 %v1485, %v1455
  %v1487 = vadd.f32 %v1486, %v1456
  %v1488 = vadd.f32 %v1487, %v1457
  %v1489 = vadd.f32 %v1488, %v1458
  %v1490 = vadd.f32 %v1489, %v1459
  %v1491 = vadd.f32 %v1490, %v1460
  %v1492 = vadd.f32 %v1491, %v1461
  %v1493 = vadd.f32 %v1492, %v1462
  %v1494 = vadd.f32 %v1493, %v1463
  %v1495 = vadd.f32 %v1494, %v1464
  %v1496 = vadd.f32 %v1495, %v1465
  %v1497 = vadd.f32 %v1496, %v1466
  %v1498 = vadd.f32 %v1497, %v1467
  %v1499 = vadd.f32 %v1498, %v1468
  %v1500 = vadd.f32 %v1499, %v1469
  %v1501 = vadd.f32 %v1500, %v1470
  %v1502 = vadd.f32 %v1501, %v1471
  %v1503 = vadd.f32 %v1502, %v1472
  %v1504 = vadd.f32 %v1503, %v1473
  %v1505 = vadd.f32 %v1504, %v1474
  %v1506 = vadd.f32 %v1505, %v1475
  %v1507 = vadd.f32 %v1506, %v1476
  %v1508 = vadd.f32 %v1507, %v1477
  %v1509 = vadd.f32 %v1508, %v1478
  %v1510 = vadd.f32 %v1509, %v1479
  %v1511 = vadd.f32 %v1510, %v1480
  %v1512 = vadd.f32 %v1511, %v1481
  %v1513 = vadd.f32 %v1512, %v1482
  %v1514 = vrot.slane %v1513, 4
  %v1515 = vadd.f32 %v1513, %v1514
  %v1516 = vrot.slane %v1515, 2
  %v1517 = vadd.f32 %v1515, %v1516
  %v1518 = vrot.slane %v1517, 1
  %v1519 = vadd.f32 %v1517, %v1518
  %vm1520 = vcmp.lt.f32.partialorder %v1418, 0.0
  %v1521 = vsel %vm1520, %v1189, %v1178
  %vm1522 = vcmp.gt.f32.partialorder %v1418, 0.0
  %v1523 = vsel %vm1522, %v1189, %v1180
  %v1524 = vrcp.pop %v1519
  %v1525 = vmul.f32 %v1418, %v1524
  %v1526 = vsub.f32 %v1189, %v1525
  %vm1527 = vcmp.ge.f32.partialorder %v1526, %v1521
  %vm1528 = vcmp.le.f32.partialorder %v1526, %v1523
  %vm1529 = vmand %vm1527, %vm1528
  %v1530 = vadd.f32 %v1521, %v1523
  %v1531 = vmul.f32 %v1530, 0.5
  %v1532 = vsel %vm1529, %v1526, %v1531
  %v1533 = vsub.f32 %v1532, %v16
  %v1534 = vsub.f32 %v1532, %v17
  %v1535 = vsub.f32 %v1532, %v18
  %v1536 = vsub.f32 %v1532, %v19
  %v1537 = vsub.f32 %v1532, %v20
  %v1538 = vsub.f32 %v1532, %v21
  %v1539 = vsub.f32 %v1532, %v22
  %v1540 = vsub.f32 %v1532, %v23
  %v1541 = vsub.f32 %v1532, %v24
  %v1542 = vsub.f32 %v1532, %v25
  %v1543 = vsub.f32 %v1532, %v26
  %v1544 = vsub.f32 %v1532, %v27
  %v1545 = vsub.f32 %v1532, %v28
  %v1546 = vsub.f32 %v1532, %v29
  %v1547 = vsub.f32 %v1532, %v30
  %v1548 = vsub.f32 %v1532, %v31
  %v1549 = vsub.f32 %v1532, %v32
  %v1550 = vsub.f32 %v1532, %v33
  %v1551 = vsub.f32 %v1532, %v34
  %v1552 = vsub.f32 %v1532, %v35
  %v1553 = vsub.f32 %v1532, %v36
  %v1554 = vsub.f32 %v1532, %v37
  %v1555 = vsub.f32 %v1532, %v38
  %v1556 = vsub.f32 %v1532, %v39
  %v1557 = vsub.f32 %v1532, %v40
  %v1558 = vsub.f32 %v1532, %v41
  %v1559 = vsub.f32 %v1532, %v42
  %v1560 = vsub.f32 %v1532, %v43
  %v1561 = vsub.f32 %v1532, %v44
  %v1562 = vsub.f32 %v1532, %v45
  %v1563 = vsub.f32 %v1532, %v46
  %v1564 = vsub.f32 %v1532, %v47
  %v1565 = vmul.f32 %v1533, %v192
  %v1566 = vmul.f32 %v1534, %v192
  %v1567 = vmul.f32 %v1535, %v192
  %v1568 = vmul.f32 %v1536, %v192
  %v1569 = vmul.f32 %v1537, %v192
  %v1570 = vmul.f32 %v1538, %v192
  %v1571 = vmul.f32 %v1539, %v192
  %v1572 = vmul.f32 %v1540, %v192
  %v1573 = vmul.f32 %v1541, %v192
  %v1574 = vmul.f32 %v1542, %v192
  %v1575 = vmul.f32 %v1543, %v192
  %v1576 = vmul.f32 %v1544, %v192
  %v1577 = vmul.f32 %v1545, %v192
  %v1578 = vmul.f32 %v1546, %v192
  %v1579 = vmul.f32 %v1547, %v192
  %v1580 = vmul.f32 %v1548, %v192
  %v1581 = vmul.f32 %v1549, %v192
  %v1582 = vmul.f32 %v1550, %v192
  %v1583 = vmul.f32 %v1551, %v192
  %v1584 = vmul.f32 %v1552, %v192
  %v1585 = vmul.f32 %v1553, %v192
  %v1586 = vmul.f32 %v1554, %v192
  %v1587 = vmul.f32 %v1555, %v192
  %v1588 = vmul.f32 %v1556, %v192
  %v1589 = vmul.f32 %v1557, %v192
  %v1590 = vmul.f32 %v1558, %v192
  %v1591 = vmul.f32 %v1559, %v192
  %v1592 = vmul.f32 %v1560, %v192
  %v1593 = vmul.f32 %v1561, %v192
  %v1594 = vmul.f32 %v1562, %v192
  %v1595 = vmul.f32 %v1563, %v192
  %v1596 = vmul.f32 %v1564, %v192
  %v1597 = vmul.f32 %v1565, %v1565
  %v1598 = vmul.f32 %v1566, %v1566
  %v1599 = vmul.f32 %v1567, %v1567
  %v1600 = vmul.f32 %v1568, %v1568
  %v1601 = vmul.f32 %v1569, %v1569
  %v1602 = vmul.f32 %v1570, %v1570
  %v1603 = vmul.f32 %v1571, %v1571
  %v1604 = vmul.f32 %v1572, %v1572
  %v1605 = vmul.f32 %v1573, %v1573
  %v1606 = vmul.f32 %v1574, %v1574
  %v1607 = vmul.f32 %v1575, %v1575
  %v1608 = vmul.f32 %v1576, %v1576
  %v1609 = vmul.f32 %v1577, %v1577
  %v1610 = vmul.f32 %v1578, %v1578
  %v1611 = vmul.f32 %v1579, %v1579
  %v1612 = vmul.f32 %v1580, %v1580
  %v1613 = vmul.f32 %v1581, %v1581
  %v1614 = vmul.f32 %v1582, %v1582
  %v1615 = vmul.f32 %v1583, %v1583
  %v1616 = vmul.f32 %v1584, %v1584
  %v1617 = vmul.f32 %v1585, %v1585
  %v1618 = vmul.f32 %v1586, %v1586
  %v1619 = vmul.f32 %v1587, %v1587
  %v1620 = vmul.f32 %v1588, %v1588
  %v1621 = vmul.f32 %v1589, %v1589
  %v1622 = vmul.f32 %v1590, %v1590
  %v1623 = vmul.f32 %v1591, %v1591
  %v1624 = vmul.f32 %v1592, %v1592
  %v1625 = vmul.f32 %v1593, %v1593
  %v1626 = vmul.f32 %v1594, %v1594
  %v1627 = vmul.f32 %v1595, %v1595
  %v1628 = vmul.f32 %v1596, %v1596
  %v1629 = vadd.f32 %v1597, 1.0
  %v1630 = vadd.f32 %v1598, 1.0
  %v1631 = vadd.f32 %v1599, 1.0
  %v1632 = vadd.f32 %v1600, 1.0
  %v1633 = vadd.f32 %v1601, 1.0
  %v1634 = vadd.f32 %v1602, 1.0
  %v1635 = vadd.f32 %v1603, 1.0
  %v1636 = vadd.f32 %v1604, 1.0
  %v1637 = vadd.f32 %v1605, 1.0
  %v1638 = vadd.f32 %v1606, 1.0
  %v1639 = vadd.f32 %v1607, 1.0
  %v1640 = vadd.f32 %v1608, 1.0
  %v1641 = vadd.f32 %v1609, 1.0
  %v1642 = vadd.f32 %v1610, 1.0
  %v1643 = vadd.f32 %v1611, 1.0
  %v1644 = vadd.f32 %v1612, 1.0
  %v1645 = vadd.f32 %v1613, 1.0
  %v1646 = vadd.f32 %v1614, 1.0
  %v1647 = vadd.f32 %v1615, 1.0
  %v1648 = vadd.f32 %v1616, 1.0
  %v1649 = vadd.f32 %v1617, 1.0
  %v1650 = vadd.f32 %v1618, 1.0
  %v1651 = vadd.f32 %v1619, 1.0
  %v1652 = vadd.f32 %v1620, 1.0
  %v1653 = vadd.f32 %v1621, 1.0
  %v1654 = vadd.f32 %v1622, 1.0
  %v1655 = vadd.f32 %v1623, 1.0
  %v1656 = vadd.f32 %v1624, 1.0
  %v1657 = vadd.f32 %v1625, 1.0
  %v1658 = vadd.f32 %v1626, 1.0
  %v1659 = vadd.f32 %v1627, 1.0
  %v1660 = vadd.f32 %v1628, 1.0
  %v1661 = vrsqrt.pop %v1629
  %v1662 = vrsqrt.pop %v1630
  %v1663 = vrsqrt.pop %v1631
  %v1664 = vrsqrt.pop %v1632
  %v1665 = vrsqrt.pop %v1633
  %v1666 = vrsqrt.pop %v1634
  %v1667 = vrsqrt.pop %v1635
  %v1668 = vrsqrt.pop %v1636
  %v1669 = vrsqrt.pop %v1637
  %v1670 = vrsqrt.pop %v1638
  %v1671 = vrsqrt.pop %v1639
  %v1672 = vrsqrt.pop %v1640
  %v1673 = vrsqrt.pop %v1641
  %v1674 = vrsqrt.pop %v1642
  %v1675 = vrsqrt.pop %v1643
  %v1676 = vrsqrt.pop %v1644
  %v1677 = vrsqrt.pop %v1645
  %v1678 = vrsqrt.pop %v1646
  %v1679 = vrsqrt.pop %v1647
  %v1680 = vrsqrt.pop %v1648
  %v1681 = vrsqrt.pop %v1649
  %v1682 = vrsqrt.pop %v1650
  %v1683 = vrsqrt.pop %v1651
  %v1684 = vrsqrt.pop %v1652
  %v1685 = vrsqrt.pop %v1653
  %v1686 = vrsqrt.pop %v1654
  %v1687 = vrsqrt.pop %v1655
  %v1688 = vrsqrt.pop %v1656
  %v1689 = vrsqrt.pop %v1657
  %v1690 = vrsqrt.pop %v1658
  %v1691 = vrsqrt.pop %v1659
  %v1692 = vrsqrt.pop %v1660
  %v1693 = vmul.f32 %v1533, %v1661
  %v1694 = vmul.f32 %v1534, %v1662
  %v1695 = vmul.f32 %v1535, %v1663
  %v1696 = vmul.f32 %v1536, %v1664
  %v1697 = vmul.f32 %v1537, %v1665
  %v1698 = vmul.f32 %v1538, %v1666
  %v1699 = vmul.f32 %v1539, %v1667
  %v1700 = vmul.f32 %v1540, %v1668
  %v1701 = vmul.f32 %v1541, %v1669
  %v1702 = vmul.f32 %v1542, %v1670
  %v1703 = vmul.f32 %v1543, %v1671
  %v1704 = vmul.f32 %v1544, %v1672
  %v1705 = vmul.f32 %v1545, %v1673
  %v1706 = vmul.f32 %v1546, %v1674
  %v1707 = vmul.f32 %v1547, %v1675
  %v1708 = vmul.f32 %v1548, %v1676
  %v1709 = vmul.f32 %v1549, %v1677
  %v1710 = vmul.f32 %v1550, %v1678
  %v1711 = vmul.f32 %v1551, %v1679
  %v1712 = vmul.f32 %v1552, %v1680
  %v1713 = vmul.f32 %v1553, %v1681
  %v1714 = vmul.f32 %v1554, %v1682
  %v1715 = vmul.f32 %v1555, %v1683
  %v1716 = vmul.f32 %v1556, %v1684
  %v1717 = vmul.f32 %v1557, %v1685
  %v1718 = vmul.f32 %v1558, %v1686
  %v1719 = vmul.f32 %v1559, %v1687
  %v1720 = vmul.f32 %v1560, %v1688
  %v1721 = vmul.f32 %v1561, %v1689
  %v1722 = vmul.f32 %v1562, %v1690
  %v1723 = vmul.f32 %v1563, %v1691
  %v1724 = vmul.f32 %v1564, %v1692
  %v1725 = vadd.f32 %v1693, %v1694
  %v1726 = vadd.f32 %v1725, %v1695
  %v1727 = vadd.f32 %v1726, %v1696
  %v1728 = vadd.f32 %v1727, %v1697
  %v1729 = vadd.f32 %v1728, %v1698
  %v1730 = vadd.f32 %v1729, %v1699
  %v1731 = vadd.f32 %v1730, %v1700
  %v1732 = vadd.f32 %v1731, %v1701
  %v1733 = vadd.f32 %v1732, %v1702
  %v1734 = vadd.f32 %v1733, %v1703
  %v1735 = vadd.f32 %v1734, %v1704
  %v1736 = vadd.f32 %v1735, %v1705
  %v1737 = vadd.f32 %v1736, %v1706
  %v1738 = vadd.f32 %v1737, %v1707
  %v1739 = vadd.f32 %v1738, %v1708
  %v1740 = vadd.f32 %v1739, %v1709
  %v1741 = vadd.f32 %v1740, %v1710
  %v1742 = vadd.f32 %v1741, %v1711
  %v1743 = vadd.f32 %v1742, %v1712
  %v1744 = vadd.f32 %v1743, %v1713
  %v1745 = vadd.f32 %v1744, %v1714
  %v1746 = vadd.f32 %v1745, %v1715
  %v1747 = vadd.f32 %v1746, %v1716
  %v1748 = vadd.f32 %v1747, %v1717
  %v1749 = vadd.f32 %v1748, %v1718
  %v1750 = vadd.f32 %v1749, %v1719
  %v1751 = vadd.f32 %v1750, %v1720
  %v1752 = vadd.f32 %v1751, %v1721
  %v1753 = vadd.f32 %v1752, %v1722
  %v1754 = vadd.f32 %v1753, %v1723
  %v1755 = vadd.f32 %v1754, %v1724
  %v1756 = vrot.slane %v1755, 4
  %v1757 = vadd.f32 %v1755, %v1756
  %v1758 = vrot.slane %v1757, 2
  %v1759 = vadd.f32 %v1757, %v1758
  %v1760 = vrot.slane %v1759, 1
  %v1761 = vadd.f32 %v1759, %v1760
  %v1762 = vmul.f32 %v1661, %v1661
  %v1763 = vmul.f32 %v1662, %v1662
  %v1764 = vmul.f32 %v1663, %v1663
  %v1765 = vmul.f32 %v1664, %v1664
  %v1766 = vmul.f32 %v1665, %v1665
  %v1767 = vmul.f32 %v1666, %v1666
  %v1768 = vmul.f32 %v1667, %v1667
  %v1769 = vmul.f32 %v1668, %v1668
  %v1770 = vmul.f32 %v1669, %v1669
  %v1771 = vmul.f32 %v1670, %v1670
  %v1772 = vmul.f32 %v1671, %v1671
  %v1773 = vmul.f32 %v1672, %v1672
  %v1774 = vmul.f32 %v1673, %v1673
  %v1775 = vmul.f32 %v1674, %v1674
  %v1776 = vmul.f32 %v1675, %v1675
  %v1777 = vmul.f32 %v1676, %v1676
  %v1778 = vmul.f32 %v1677, %v1677
  %v1779 = vmul.f32 %v1678, %v1678
  %v1780 = vmul.f32 %v1679, %v1679
  %v1781 = vmul.f32 %v1680, %v1680
  %v1782 = vmul.f32 %v1681, %v1681
  %v1783 = vmul.f32 %v1682, %v1682
  %v1784 = vmul.f32 %v1683, %v1683
  %v1785 = vmul.f32 %v1684, %v1684
  %v1786 = vmul.f32 %v1685, %v1685
  %v1787 = vmul.f32 %v1686, %v1686
  %v1788 = vmul.f32 %v1687, %v1687
  %v1789 = vmul.f32 %v1688, %v1688
  %v1790 = vmul.f32 %v1689, %v1689
  %v1791 = vmul.f32 %v1690, %v1690
  %v1792 = vmul.f32 %v1691, %v1691
  %v1793 = vmul.f32 %v1692, %v1692
  %v1794 = vmul.f32 %v1762, %v1661
  %v1795 = vmul.f32 %v1763, %v1662
  %v1796 = vmul.f32 %v1764, %v1663
  %v1797 = vmul.f32 %v1765, %v1664
  %v1798 = vmul.f32 %v1766, %v1665
  %v1799 = vmul.f32 %v1767, %v1666
  %v1800 = vmul.f32 %v1768, %v1667
  %v1801 = vmul.f32 %v1769, %v1668
  %v1802 = vmul.f32 %v1770, %v1669
  %v1803 = vmul.f32 %v1771, %v1670
  %v1804 = vmul.f32 %v1772, %v1671
  %v1805 = vmul.f32 %v1773, %v1672
  %v1806 = vmul.f32 %v1774, %v1673
  %v1807 = vmul.f32 %v1775, %v1674
  %v1808 = vmul.f32 %v1776, %v1675
  %v1809 = vmul.f32 %v1777, %v1676
  %v1810 = vmul.f32 %v1778, %v1677
  %v1811 = vmul.f32 %v1779, %v1678
  %v1812 = vmul.f32 %v1780, %v1679
  %v1813 = vmul.f32 %v1781, %v1680
  %v1814 = vmul.f32 %v1782, %v1681
  %v1815 = vmul.f32 %v1783, %v1682
  %v1816 = vmul.f32 %v1784, %v1683
  %v1817 = vmul.f32 %v1785, %v1684
  %v1818 = vmul.f32 %v1786, %v1685
  %v1819 = vmul.f32 %v1787, %v1686
  %v1820 = vmul.f32 %v1788, %v1687
  %v1821 = vmul.f32 %v1789, %v1688
  %v1822 = vmul.f32 %v1790, %v1689
  %v1823 = vmul.f32 %v1791, %v1690
  %v1824 = vmul.f32 %v1792, %v1691
  %v1825 = vmul.f32 %v1793, %v1692
  %v1826 = vadd.f32 %v1794, %v1795
  %v1827 = vadd.f32 %v1826, %v1796
  %v1828 = vadd.f32 %v1827, %v1797
  %v1829 = vadd.f32 %v1828, %v1798
  %v1830 = vadd.f32 %v1829, %v1799
  %v1831 = vadd.f32 %v1830, %v1800
  %v1832 = vadd.f32 %v1831, %v1801
  %v1833 = vadd.f32 %v1832, %v1802
  %v1834 = vadd.f32 %v1833, %v1803
  %v1835 = vadd.f32 %v1834, %v1804
  %v1836 = vadd.f32 %v1835, %v1805
  %v1837 = vadd.f32 %v1836, %v1806
  %v1838 = vadd.f32 %v1837, %v1807
  %v1839 = vadd.f32 %v1838, %v1808
  %v1840 = vadd.f32 %v1839, %v1809
  %v1841 = vadd.f32 %v1840, %v1810
  %v1842 = vadd.f32 %v1841, %v1811
  %v1843 = vadd.f32 %v1842, %v1812
  %v1844 = vadd.f32 %v1843, %v1813
  %v1845 = vadd.f32 %v1844, %v1814
  %v1846 = vadd.f32 %v1845, %v1815
  %v1847 = vadd.f32 %v1846, %v1816
  %v1848 = vadd.f32 %v1847, %v1817
  %v1849 = vadd.f32 %v1848, %v1818
  %v1850 = vadd.f32 %v1849, %v1819
  %v1851 = vadd.f32 %v1850, %v1820
  %v1852 = vadd.f32 %v1851, %v1821
  %v1853 = vadd.f32 %v1852, %v1822
  %v1854 = vadd.f32 %v1853, %v1823
  %v1855 = vadd.f32 %v1854, %v1824
  %v1856 = vadd.f32 %v1855, %v1825
  %v1857 = vrot.slane %v1856, 4
  %v1858 = vadd.f32 %v1856, %v1857
  %v1859 = vrot.slane %v1858, 2
  %v1860 = vadd.f32 %v1858, %v1859
  %v1861 = vrot.slane %v1860, 1
  %v1862 = vadd.f32 %v1860, %v1861
  %vm1863 = vcmp.lt.f32.partialorder %v1761, 0.0
  %v1864 = vsel %vm1863, %v1532, %v1521
  %vm1865 = vcmp.gt.f32.partialorder %v1761, 0.0
  %v1866 = vsel %vm1865, %v1532, %v1523
  %v1867 = vrcp.pop %v1862
  %v1868 = vmul.f32 %v1761, %v1867
  %v1869 = vsub.f32 %v1532, %v1868
  %vm1870 = vcmp.ge.f32.partialorder %v1869, %v1864
  %vm1871 = vcmp.le.f32.partialorder %v1869, %v1866
  %vm1872 = vmand %vm1870, %vm1871
  %v1873 = vadd.f32 %v1864, %v1866
  %v1874 = vmul.f32 %v1873, 0.5
  %v1875 = vsel %vm1872, %v1869, %v1874
  %v1876 = vsub.f32 %v1875, %v16
  %v1877 = vsub.f32 %v1875, %v17
  %v1878 = vsub.f32 %v1875, %v18
  %v1879 = vsub.f32 %v1875, %v19
  %v1880 = vsub.f32 %v1875, %v20
  %v1881 = vsub.f32 %v1875, %v21
  %v1882 = vsub.f32 %v1875, %v22
  %v1883 = vsub.f32 %v1875, %v23
  %v1884 = vsub.f32 %v1875, %v24
  %v1885 = vsub.f32 %v1875, %v25
  %v1886 = vsub.f32 %v1875, %v26
  %v1887 = vsub.f32 %v1875, %v27
  %v1888 = vsub.f32 %v1875, %v28
  %v1889 = vsub.f32 %v1875, %v29
  %v1890 = vsub.f32 %v1875, %v30
  %v1891 = vsub.f32 %v1875, %v31
  %v1892 = vsub.f32 %v1875, %v32
  %v1893 = vsub.f32 %v1875, %v33
  %v1894 = vsub.f32 %v1875, %v34
  %v1895 = vsub.f32 %v1875, %v35
  %v1896 = vsub.f32 %v1875, %v36
  %v1897 = vsub.f32 %v1875, %v37
  %v1898 = vsub.f32 %v1875, %v38
  %v1899 = vsub.f32 %v1875, %v39
  %v1900 = vsub.f32 %v1875, %v40
  %v1901 = vsub.f32 %v1875, %v41
  %v1902 = vsub.f32 %v1875, %v42
  %v1903 = vsub.f32 %v1875, %v43
  %v1904 = vsub.f32 %v1875, %v44
  %v1905 = vsub.f32 %v1875, %v45
  %v1906 = vsub.f32 %v1875, %v46
  %v1907 = vsub.f32 %v1875, %v47
  %v1908 = vmul.f32 %v1876, %v192
  %v1909 = vmul.f32 %v1877, %v192
  %v1910 = vmul.f32 %v1878, %v192
  %v1911 = vmul.f32 %v1879, %v192
  %v1912 = vmul.f32 %v1880, %v192
  %v1913 = vmul.f32 %v1881, %v192
  %v1914 = vmul.f32 %v1882, %v192
  %v1915 = vmul.f32 %v1883, %v192
  %v1916 = vmul.f32 %v1884, %v192
  %v1917 = vmul.f32 %v1885, %v192
  %v1918 = vmul.f32 %v1886, %v192
  %v1919 = vmul.f32 %v1887, %v192
  %v1920 = vmul.f32 %v1888, %v192
  %v1921 = vmul.f32 %v1889, %v192
  %v1922 = vmul.f32 %v1890, %v192
  %v1923 = vmul.f32 %v1891, %v192
  %v1924 = vmul.f32 %v1892, %v192
  %v1925 = vmul.f32 %v1893, %v192
  %v1926 = vmul.f32 %v1894, %v192
  %v1927 = vmul.f32 %v1895, %v192
  %v1928 = vmul.f32 %v1896, %v192
  %v1929 = vmul.f32 %v1897, %v192
  %v1930 = vmul.f32 %v1898, %v192
  %v1931 = vmul.f32 %v1899, %v192
  %v1932 = vmul.f32 %v1900, %v192
  %v1933 = vmul.f32 %v1901, %v192
  %v1934 = vmul.f32 %v1902, %v192
  %v1935 = vmul.f32 %v1903, %v192
  %v1936 = vmul.f32 %v1904, %v192
  %v1937 = vmul.f32 %v1905, %v192
  %v1938 = vmul.f32 %v1906, %v192
  %v1939 = vmul.f32 %v1907, %v192
  %v1940 = vmul.f32 %v1908, %v1908
  %v1941 = vmul.f32 %v1909, %v1909
  %v1942 = vmul.f32 %v1910, %v1910
  %v1943 = vmul.f32 %v1911, %v1911
  %v1944 = vmul.f32 %v1912, %v1912
  %v1945 = vmul.f32 %v1913, %v1913
  %v1946 = vmul.f32 %v1914, %v1914
  %v1947 = vmul.f32 %v1915, %v1915
  %v1948 = vmul.f32 %v1916, %v1916
  %v1949 = vmul.f32 %v1917, %v1917
  %v1950 = vmul.f32 %v1918, %v1918
  %v1951 = vmul.f32 %v1919, %v1919
  %v1952 = vmul.f32 %v1920, %v1920
  %v1953 = vmul.f32 %v1921, %v1921
  %v1954 = vmul.f32 %v1922, %v1922
  %v1955 = vmul.f32 %v1923, %v1923
  %v1956 = vmul.f32 %v1924, %v1924
  %v1957 = vmul.f32 %v1925, %v1925
  %v1958 = vmul.f32 %v1926, %v1926
  %v1959 = vmul.f32 %v1927, %v1927
  %v1960 = vmul.f32 %v1928, %v1928
  %v1961 = vmul.f32 %v1929, %v1929
  %v1962 = vmul.f32 %v1930, %v1930
  %v1963 = vmul.f32 %v1931, %v1931
  %v1964 = vmul.f32 %v1932, %v1932
  %v1965 = vmul.f32 %v1933, %v1933
  %v1966 = vmul.f32 %v1934, %v1934
  %v1967 = vmul.f32 %v1935, %v1935
  %v1968 = vmul.f32 %v1936, %v1936
  %v1969 = vmul.f32 %v1937, %v1937
  %v1970 = vmul.f32 %v1938, %v1938
  %v1971 = vmul.f32 %v1939, %v1939
  %v1972 = vadd.f32 %v1940, 1.0
  %v1973 = vadd.f32 %v1941, 1.0
  %v1974 = vadd.f32 %v1942, 1.0
  %v1975 = vadd.f32 %v1943, 1.0
  %v1976 = vadd.f32 %v1944, 1.0
  %v1977 = vadd.f32 %v1945, 1.0
  %v1978 = vadd.f32 %v1946, 1.0
  %v1979 = vadd.f32 %v1947, 1.0
  %v1980 = vadd.f32 %v1948, 1.0
  %v1981 = vadd.f32 %v1949, 1.0
  %v1982 = vadd.f32 %v1950, 1.0
  %v1983 = vadd.f32 %v1951, 1.0
  %v1984 = vadd.f32 %v1952, 1.0
  %v1985 = vadd.f32 %v1953, 1.0
  %v1986 = vadd.f32 %v1954, 1.0
  %v1987 = vadd.f32 %v1955, 1.0
  %v1988 = vadd.f32 %v1956, 1.0
  %v1989 = vadd.f32 %v1957, 1.0
  %v1990 = vadd.f32 %v1958, 1.0
  %v1991 = vadd.f32 %v1959, 1.0
  %v1992 = vadd.f32 %v1960, 1.0
  %v1993 = vadd.f32 %v1961, 1.0
  %v1994 = vadd.f32 %v1962, 1.0
  %v1995 = vadd.f32 %v1963, 1.0
  %v1996 = vadd.f32 %v1964, 1.0
  %v1997 = vadd.f32 %v1965, 1.0
  %v1998 = vadd.f32 %v1966, 1.0
  %v1999 = vadd.f32 %v1967, 1.0
  %v2000 = vadd.f32 %v1968, 1.0
  %v2001 = vadd.f32 %v1969, 1.0
  %v2002 = vadd.f32 %v1970, 1.0
  %v2003 = vadd.f32 %v1971, 1.0
  %v2004 = vrsqrt.pop %v1972
  %v2005 = vrsqrt.pop %v1973
  %v2006 = vrsqrt.pop %v1974
  %v2007 = vrsqrt.pop %v1975
  %v2008 = vrsqrt.pop %v1976
  %v2009 = vrsqrt.pop %v1977
  %v2010 = vrsqrt.pop %v1978
  %v2011 = vrsqrt.pop %v1979
  %v2012 = vrsqrt.pop %v1980
  %v2013 = vrsqrt.pop %v1981
  %v2014 = vrsqrt.pop %v1982
  %v2015 = vrsqrt.pop %v1983
  %v2016 = vrsqrt.pop %v1984
  %v2017 = vrsqrt.pop %v1985
  %v2018 = vrsqrt.pop %v1986
  %v2019 = vrsqrt.pop %v1987
  %v2020 = vrsqrt.pop %v1988
  %v2021 = vrsqrt.pop %v1989
  %v2022 = vrsqrt.pop %v1990
  %v2023 = vrsqrt.pop %v1991
  %v2024 = vrsqrt.pop %v1992
  %v2025 = vrsqrt.pop %v1993
  %v2026 = vrsqrt.pop %v1994
  %v2027 = vrsqrt.pop %v1995
  %v2028 = vrsqrt.pop %v1996
  %v2029 = vrsqrt.pop %v1997
  %v2030 = vrsqrt.pop %v1998
  %v2031 = vrsqrt.pop %v1999
  %v2032 = vrsqrt.pop %v2000
  %v2033 = vrsqrt.pop %v2001
  %v2034 = vrsqrt.pop %v2002
  %v2035 = vrsqrt.pop %v2003
  %v2036 = vmul.f32 %v1876, %v2004
  %v2037 = vmul.f32 %v1877, %v2005
  %v2038 = vmul.f32 %v1878, %v2006
  %v2039 = vmul.f32 %v1879, %v2007
  %v2040 = vmul.f32 %v1880, %v2008
  %v2041 = vmul.f32 %v1881, %v2009
  %v2042 = vmul.f32 %v1882, %v2010
  %v2043 = vmul.f32 %v1883, %v2011
  %v2044 = vmul.f32 %v1884, %v2012
  %v2045 = vmul.f32 %v1885, %v2013
  %v2046 = vmul.f32 %v1886, %v2014
  %v2047 = vmul.f32 %v1887, %v2015
  %v2048 = vmul.f32 %v1888, %v2016
  %v2049 = vmul.f32 %v1889, %v2017
  %v2050 = vmul.f32 %v1890, %v2018
  %v2051 = vmul.f32 %v1891, %v2019
  %v2052 = vmul.f32 %v1892, %v2020
  %v2053 = vmul.f32 %v1893, %v2021
  %v2054 = vmul.f32 %v1894, %v2022
  %v2055 = vmul.f32 %v1895, %v2023
  %v2056 = vmul.f32 %v1896, %v2024
  %v2057 = vmul.f32 %v1897, %v2025
  %v2058 = vmul.f32 %v1898, %v2026
  %v2059 = vmul.f32 %v1899, %v2027
  %v2060 = vmul.f32 %v1900, %v2028
  %v2061 = vmul.f32 %v1901, %v2029
  %v2062 = vmul.f32 %v1902, %v2030
  %v2063 = vmul.f32 %v1903, %v2031
  %v2064 = vmul.f32 %v1904, %v2032
  %v2065 = vmul.f32 %v1905, %v2033
  %v2066 = vmul.f32 %v1906, %v2034
  %v2067 = vmul.f32 %v1907, %v2035
  %v2068 = vadd.f32 %v2036, %v2037
  %v2069 = vadd.f32 %v2068, %v2038
  %v2070 = vadd.f32 %v2069, %v2039
  %v2071 = vadd.f32 %v2070, %v2040
  %v2072 = vadd.f32 %v2071, %v2041
  %v2073 = vadd.f32 %v2072, %v2042
  %v2074 = vadd.f32 %v2073, %v2043
  %v2075 = vadd.f32 %v2074, %v2044
  %v2076 = vadd.f32 %v2075, %v2045
  %v2077 = vadd.f32 %v2076, %v2046
  %v2078 = vadd.f32 %v2077, %v2047
  %v2079 = vadd.f32 %v2078, %v2048
  %v2080 = vadd.f32 %v2079, %v2049
  %v2081 = vadd.f32 %v2080, %v2050
  %v2082 = vadd.f32 %v2081, %v2051
  %v2083 = vadd.f32 %v2082, %v2052
  %v2084 = vadd.f32 %v2083, %v2053
  %v2085 = vadd.f32 %v2084, %v2054
  %v2086 = vadd.f32 %v2085, %v2055
  %v2087 = vadd.f32 %v2086, %v2056
  %v2088 = vadd.f32 %v2087, %v2057
  %v2089 = vadd.f32 %v2088, %v2058
  %v2090 = vadd.f32 %v2089, %v2059
  %v2091 = vadd.f32 %v2090, %v2060
  %v2092 = vadd.f32 %v2091, %v2061
  %v2093 = vadd.f32 %v2092, %v2062
  %v2094 = vadd.f32 %v2093, %v2063
  %v2095 = vadd.f32 %v2094, %v2064
  %v2096 = vadd.f32 %v2095, %v2065
  %v2097 = vadd.f32 %v2096, %v2066
  %v2098 = vadd.f32 %v2097, %v2067
  %v2099 = vrot.slane %v2098, 4
  %v2100 = vadd.f32 %v2098, %v2099
  %v2101 = vrot.slane %v2100, 2
  %v2102 = vadd.f32 %v2100, %v2101
  %v2103 = vrot.slane %v2102, 1
  %v2104 = vadd.f32 %v2102, %v2103
  %v2105 = vmul.f32 %v2004, %v2004
  %v2106 = vmul.f32 %v2005, %v2005
  %v2107 = vmul.f32 %v2006, %v2006
  %v2108 = vmul.f32 %v2007, %v2007
  %v2109 = vmul.f32 %v2008, %v2008
  %v2110 = vmul.f32 %v2009, %v2009
  %v2111 = vmul.f32 %v2010, %v2010
  %v2112 = vmul.f32 %v2011, %v2011
  %v2113 = vmul.f32 %v2012, %v2012
  %v2114 = vmul.f32 %v2013, %v2013
  %v2115 = vmul.f32 %v2014, %v2014
  %v2116 = vmul.f32 %v2015, %v2015
  %v2117 = vmul.f32 %v2016, %v2016
  %v2118 = vmul.f32 %v2017, %v2017
  %v2119 = vmul.f32 %v2018, %v2018
  %v2120 = vmul.f32 %v2019, %v2019
  %v2121 = vmul.f32 %v2020, %v2020
  %v2122 = vmul.f32 %v2021, %v2021
  %v2123 = vmul.f32 %v2022, %v2022
  %v2124 = vmul.f32 %v2023, %v2023
  %v2125 = vmul.f32 %v2024, %v2024
  %v2126 = vmul.f32 %v2025, %v2025
  %v2127 = vmul.f32 %v2026, %v2026
  %v2128 = vmul.f32 %v2027, %v2027
  %v2129 = vmul.f32 %v2028, %v2028
  %v2130 = vmul.f32 %v2029, %v2029
  %v2131 = vmul.f32 %v2030, %v2030
  %v2132 = vmul.f32 %v2031, %v2031
  %v2133 = vmul.f32 %v2032, %v2032
  %v2134 = vmul.f32 %v2033, %v2033
  %v2135 = vmul.f32 %v2034, %v2034
  %v2136 = vmul.f32 %v2035, %v2035
  %v2137 = vmul.f32 %v2105, %v2004
  %v2138 = vmul.f32 %v2106, %v2005
  %v2139 = vmul.f32 %v2107, %v2006
  %v2140 = vmul.f32 %v2108, %v2007
  %v2141 = vmul.f32 %v2109, %v2008
  %v2142 = vmul.f32 %v2110, %v2009
  %v2143 = vmul.f32 %v2111, %v2010
  %v2144 = vmul.f32 %v2112, %v2011
  %v2145 = vmul.f32 %v2113, %v2012
  %v2146 = vmul.f32 %v2114, %v2013
  %v2147 = vmul.f32 %v2115, %v2014
  %v2148 = vmul.f32 %v2116, %v2015
  %v2149 = vmul.f32 %v2117, %v2016
  %v2150 = vmul.f32 %v2118, %v2017
  %v2151 = vmul.f32 %v2119, %v2018
  %v2152 = vmul.f32 %v2120, %v2019
  %v2153 = vmul.f32 %v2121, %v2020
  %v2154 = vmul.f32 %v2122, %v2021
  %v2155 = vmul.f32 %v2123, %v2022
  %v2156 = vmul.f32 %v2124, %v2023
  %v2157 = vmul.f32 %v2125, %v2024
  %v2158 = vmul.f32 %v2126, %v2025
  %v2159 = vmul.f32 %v2127, %v2026
  %v2160 = vmul.f32 %v2128, %v2027
  %v2161 = vmul.f32 %v2129, %v2028
  %v2162 = vmul.f32 %v2130, %v2029
  %v2163 = vmul.f32 %v2131, %v2030
  %v2164 = vmul.f32 %v2132, %v2031
  %v2165 = vmul.f32 %v2133, %v2032
  %v2166 = vmul.f32 %v2134, %v2033
  %v2167 = vmul.f32 %v2135, %v2034
  %v2168 = vmul.f32 %v2136, %v2035
  %v2169 = vadd.f32 %v2137, %v2138
  %v2170 = vadd.f32 %v2169, %v2139
  %v2171 = vadd.f32 %v2170, %v2140
  %v2172 = vadd.f32 %v2171, %v2141
  %v2173 = vadd.f32 %v2172, %v2142
  %v2174 = vadd.f32 %v2173, %v2143
  %v2175 = vadd.f32 %v2174, %v2144
  %v2176 = vadd.f32 %v2175, %v2145
  %v2177 = vadd.f32 %v2176, %v2146
  %v2178 = vadd.f32 %v2177, %v2147
  %v2179 = vadd.f32 %v2178, %v2148
  %v2180 = vadd.f32 %v2179, %v2149
  %v2181 = vadd.f32 %v2180, %v2150
  %v2182 = vadd.f32 %v2181, %v2151
  %v2183 = vadd.f32 %v2182, %v2152
  %v2184 = vadd.f32 %v2183, %v2153
  %v2185 = vadd.f32 %v2184, %v2154
  %v2186 = vadd.f32 %v2185, %v2155
  %v2187 = vadd.f32 %v2186, %v2156
  %v2188 = vadd.f32 %v2187, %v2157
  %v2189 = vadd.f32 %v2188, %v2158
  %v2190 = vadd.f32 %v2189, %v2159
  %v2191 = vadd.f32 %v2190, %v2160
  %v2192 = vadd.f32 %v2191, %v2161
  %v2193 = vadd.f32 %v2192, %v2162
  %v2194 = vadd.f32 %v2193, %v2163
  %v2195 = vadd.f32 %v2194, %v2164
  %v2196 = vadd.f32 %v2195, %v2165
  %v2197 = vadd.f32 %v2196, %v2166
  %v2198 = vadd.f32 %v2197, %v2167
  %v2199 = vadd.f32 %v2198, %v2168
  %v2200 = vrot.slane %v2199, 4
  %v2201 = vadd.f32 %v2199, %v2200
  %v2202 = vrot.slane %v2201, 2
  %v2203 = vadd.f32 %v2201, %v2202
  %v2204 = vrot.slane %v2203, 1
  %v2205 = vadd.f32 %v2203, %v2204
  %vm2206 = vcmp.lt.f32.partialorder %v2104, 0.0
  %v2207 = vsel %vm2206, %v1875, %v1864
  %vm2208 = vcmp.gt.f32.partialorder %v2104, 0.0
  %v2209 = vsel %vm2208, %v1875, %v1866
  %v2210 = vrcp.pop %v2205
  %v2211 = vmul.f32 %v2104, %v2210
  %v2212 = vsub.f32 %v1875, %v2211
  %vm2213 = vcmp.ge.f32.partialorder %v2212, %v2207
  %vm2214 = vcmp.le.f32.partialorder %v2212, %v2209
  %vm2215 = vmand %vm2213, %vm2214
  %v2216 = vadd.f32 %v2207, %v2209
  %v2217 = vmul.f32 %v2216, 0.5
  %v2218 = vsel %vm2215, %v2212, %v2217
  %v2219 = vsub.f32 %v2218, %v16
  %v2220 = vsub.f32 %v2218, %v17
  %v2221 = vsub.f32 %v2218, %v18
  %v2222 = vsub.f32 %v2218, %v19
  %v2223 = vsub.f32 %v2218, %v20
  %v2224 = vsub.f32 %v2218, %v21
  %v2225 = vsub.f32 %v2218, %v22
  %v2226 = vsub.f32 %v2218, %v23
  %v2227 = vsub.f32 %v2218, %v24
  %v2228 = vsub.f32 %v2218, %v25
  %v2229 = vsub.f32 %v2218, %v26
  %v2230 = vsub.f32 %v2218, %v27
  %v2231 = vsub.f32 %v2218, %v28
  %v2232 = vsub.f32 %v2218, %v29
  %v2233 = vsub.f32 %v2218, %v30
  %v2234 = vsub.f32 %v2218, %v31
  %v2235 = vsub.f32 %v2218, %v32
  %v2236 = vsub.f32 %v2218, %v33
  %v2237 = vsub.f32 %v2218, %v34
  %v2238 = vsub.f32 %v2218, %v35
  %v2239 = vsub.f32 %v2218, %v36
  %v2240 = vsub.f32 %v2218, %v37
  %v2241 = vsub.f32 %v2218, %v38
  %v2242 = vsub.f32 %v2218, %v39
  %v2243 = vsub.f32 %v2218, %v40
  %v2244 = vsub.f32 %v2218, %v41
  %v2245 = vsub.f32 %v2218, %v42
  %v2246 = vsub.f32 %v2218, %v43
  %v2247 = vsub.f32 %v2218, %v44
  %v2248 = vsub.f32 %v2218, %v45
  %v2249 = vsub.f32 %v2218, %v46
  %v2250 = vsub.f32 %v2218, %v47
  %v2251 = vmul.f32 %v2219, %v192
  %v2252 = vmul.f32 %v2220, %v192
  %v2253 = vmul.f32 %v2221, %v192
  %v2254 = vmul.f32 %v2222, %v192
  %v2255 = vmul.f32 %v2223, %v192
  %v2256 = vmul.f32 %v2224, %v192
  %v2257 = vmul.f32 %v2225, %v192
  %v2258 = vmul.f32 %v2226, %v192
  %v2259 = vmul.f32 %v2227, %v192
  %v2260 = vmul.f32 %v2228, %v192
  %v2261 = vmul.f32 %v2229, %v192
  %v2262 = vmul.f32 %v2230, %v192
  %v2263 = vmul.f32 %v2231, %v192
  %v2264 = vmul.f32 %v2232, %v192
  %v2265 = vmul.f32 %v2233, %v192
  %v2266 = vmul.f32 %v2234, %v192
  %v2267 = vmul.f32 %v2235, %v192
  %v2268 = vmul.f32 %v2236, %v192
  %v2269 = vmul.f32 %v2237, %v192
  %v2270 = vmul.f32 %v2238, %v192
  %v2271 = vmul.f32 %v2239, %v192
  %v2272 = vmul.f32 %v2240, %v192
  %v2273 = vmul.f32 %v2241, %v192
  %v2274 = vmul.f32 %v2242, %v192
  %v2275 = vmul.f32 %v2243, %v192
  %v2276 = vmul.f32 %v2244, %v192
  %v2277 = vmul.f32 %v2245, %v192
  %v2278 = vmul.f32 %v2246, %v192
  %v2279 = vmul.f32 %v2247, %v192
  %v2280 = vmul.f32 %v2248, %v192
  %v2281 = vmul.f32 %v2249, %v192
  %v2282 = vmul.f32 %v2250, %v192
  %v2283 = vmul.f32 %v2251, %v2251
  %v2284 = vmul.f32 %v2252, %v2252
  %v2285 = vmul.f32 %v2253, %v2253
  %v2286 = vmul.f32 %v2254, %v2254
  %v2287 = vmul.f32 %v2255, %v2255
  %v2288 = vmul.f32 %v2256, %v2256
  %v2289 = vmul.f32 %v2257, %v2257
  %v2290 = vmul.f32 %v2258, %v2258
  %v2291 = vmul.f32 %v2259, %v2259
  %v2292 = vmul.f32 %v2260, %v2260
  %v2293 = vmul.f32 %v2261, %v2261
  %v2294 = vmul.f32 %v2262, %v2262
  %v2295 = vmul.f32 %v2263, %v2263
  %v2296 = vmul.f32 %v2264, %v2264
  %v2297 = vmul.f32 %v2265, %v2265
  %v2298 = vmul.f32 %v2266, %v2266
  %v2299 = vmul.f32 %v2267, %v2267
  %v2300 = vmul.f32 %v2268, %v2268
  %v2301 = vmul.f32 %v2269, %v2269
  %v2302 = vmul.f32 %v2270, %v2270
  %v2303 = vmul.f32 %v2271, %v2271
  %v2304 = vmul.f32 %v2272, %v2272
  %v2305 = vmul.f32 %v2273, %v2273
  %v2306 = vmul.f32 %v2274, %v2274
  %v2307 = vmul.f32 %v2275, %v2275
  %v2308 = vmul.f32 %v2276, %v2276
  %v2309 = vmul.f32 %v2277, %v2277
  %v2310 = vmul.f32 %v2278, %v2278
  %v2311 = vmul.f32 %v2279, %v2279
  %v2312 = vmul.f32 %v2280, %v2280
  %v2313 = vmul.f32 %v2281, %v2281
  %v2314 = vmul.f32 %v2282, %v2282
  %v2315 = vadd.f32 %v2283, 1.0
  %v2316 = vadd.f32 %v2284, 1.0
  %v2317 = vadd.f32 %v2285, 1.0
  %v2318 = vadd.f32 %v2286, 1.0
  %v2319 = vadd.f32 %v2287, 1.0
  %v2320 = vadd.f32 %v2288, 1.0
  %v2321 = vadd.f32 %v2289, 1.0
  %v2322 = vadd.f32 %v2290, 1.0
  %v2323 = vadd.f32 %v2291, 1.0
  %v2324 = vadd.f32 %v2292, 1.0
  %v2325 = vadd.f32 %v2293, 1.0
  %v2326 = vadd.f32 %v2294, 1.0
  %v2327 = vadd.f32 %v2295, 1.0
  %v2328 = vadd.f32 %v2296, 1.0
  %v2329 = vadd.f32 %v2297, 1.0
  %v2330 = vadd.f32 %v2298, 1.0
  %v2331 = vadd.f32 %v2299, 1.0
  %v2332 = vadd.f32 %v2300, 1.0
  %v2333 = vadd.f32 %v2301, 1.0
  %v2334 = vadd.f32 %v2302, 1.0
  %v2335 = vadd.f32 %v2303, 1.0
  %v2336 = vadd.f32 %v2304, 1.0
  %v2337 = vadd.f32 %v2305, 1.0
  %v2338 = vadd.f32 %v2306, 1.0
  %v2339 = vadd.f32 %v2307, 1.0
  %v2340 = vadd.f32 %v2308, 1.0
  %v2341 = vadd.f32 %v2309, 1.0
  %v2342 = vadd.f32 %v2310, 1.0
  %v2343 = vadd.f32 %v2311, 1.0
  %v2344 = vadd.f32 %v2312, 1.0
  %v2345 = vadd.f32 %v2313, 1.0
  %v2346 = vadd.f32 %v2314, 1.0
  %v2347 = vrsqrt.pop %v2315
  %v2348 = vrsqrt.pop %v2316
  %v2349 = vrsqrt.pop %v2317
  %v2350 = vrsqrt.pop %v2318
  %v2351 = vrsqrt.pop %v2319
  %v2352 = vrsqrt.pop %v2320
  %v2353 = vrsqrt.pop %v2321
  %v2354 = vrsqrt.pop %v2322
  %v2355 = vrsqrt.pop %v2323
  %v2356 = vrsqrt.pop %v2324
  %v2357 = vrsqrt.pop %v2325
  %v2358 = vrsqrt.pop %v2326
  %v2359 = vrsqrt.pop %v2327
  %v2360 = vrsqrt.pop %v2328
  %v2361 = vrsqrt.pop %v2329
  %v2362 = vrsqrt.pop %v2330
  %v2363 = vrsqrt.pop %v2331
  %v2364 = vrsqrt.pop %v2332
  %v2365 = vrsqrt.pop %v2333
  %v2366 = vrsqrt.pop %v2334
  %v2367 = vrsqrt.pop %v2335
  %v2368 = vrsqrt.pop %v2336
  %v2369 = vrsqrt.pop %v2337
  %v2370 = vrsqrt.pop %v2338
  %v2371 = vrsqrt.pop %v2339
  %v2372 = vrsqrt.pop %v2340
  %v2373 = vrsqrt.pop %v2341
  %v2374 = vrsqrt.pop %v2342
  %v2375 = vrsqrt.pop %v2343
  %v2376 = vrsqrt.pop %v2344
  %v2377 = vrsqrt.pop %v2345
  %v2378 = vrsqrt.pop %v2346
  %v2379 = vmul.f32 %v2219, %v2347
  %v2380 = vmul.f32 %v2220, %v2348
  %v2381 = vmul.f32 %v2221, %v2349
  %v2382 = vmul.f32 %v2222, %v2350
  %v2383 = vmul.f32 %v2223, %v2351
  %v2384 = vmul.f32 %v2224, %v2352
  %v2385 = vmul.f32 %v2225, %v2353
  %v2386 = vmul.f32 %v2226, %v2354
  %v2387 = vmul.f32 %v2227, %v2355
  %v2388 = vmul.f32 %v2228, %v2356
  %v2389 = vmul.f32 %v2229, %v2357
  %v2390 = vmul.f32 %v2230, %v2358
  %v2391 = vmul.f32 %v2231, %v2359
  %v2392 = vmul.f32 %v2232, %v2360
  %v2393 = vmul.f32 %v2233, %v2361
  %v2394 = vmul.f32 %v2234, %v2362
  %v2395 = vmul.f32 %v2235, %v2363
  %v2396 = vmul.f32 %v2236, %v2364
  %v2397 = vmul.f32 %v2237, %v2365
  %v2398 = vmul.f32 %v2238, %v2366
  %v2399 = vmul.f32 %v2239, %v2367
  %v2400 = vmul.f32 %v2240, %v2368
  %v2401 = vmul.f32 %v2241, %v2369
  %v2402 = vmul.f32 %v2242, %v2370
  %v2403 = vmul.f32 %v2243, %v2371
  %v2404 = vmul.f32 %v2244, %v2372
  %v2405 = vmul.f32 %v2245, %v2373
  %v2406 = vmul.f32 %v2246, %v2374
  %v2407 = vmul.f32 %v2247, %v2375
  %v2408 = vmul.f32 %v2248, %v2376
  %v2409 = vmul.f32 %v2249, %v2377
  %v2410 = vmul.f32 %v2250, %v2378
  %v2411 = vadd.f32 %v2379, %v2380
  %v2412 = vadd.f32 %v2411, %v2381
  %v2413 = vadd.f32 %v2412, %v2382
  %v2414 = vadd.f32 %v2413, %v2383
  %v2415 = vadd.f32 %v2414, %v2384
  %v2416 = vadd.f32 %v2415, %v2385
  %v2417 = vadd.f32 %v2416, %v2386
  %v2418 = vadd.f32 %v2417, %v2387
  %v2419 = vadd.f32 %v2418, %v2388
  %v2420 = vadd.f32 %v2419, %v2389
  %v2421 = vadd.f32 %v2420, %v2390
  %v2422 = vadd.f32 %v2421, %v2391
  %v2423 = vadd.f32 %v2422, %v2392
  %v2424 = vadd.f32 %v2423, %v2393
  %v2425 = vadd.f32 %v2424, %v2394
  %v2426 = vadd.f32 %v2425, %v2395
  %v2427 = vadd.f32 %v2426, %v2396
  %v2428 = vadd.f32 %v2427, %v2397
  %v2429 = vadd.f32 %v2428, %v2398
  %v2430 = vadd.f32 %v2429, %v2399
  %v2431 = vadd.f32 %v2430, %v2400
  %v2432 = vadd.f32 %v2431, %v2401
  %v2433 = vadd.f32 %v2432, %v2402
  %v2434 = vadd.f32 %v2433, %v2403
  %v2435 = vadd.f32 %v2434, %v2404
  %v2436 = vadd.f32 %v2435, %v2405
  %v2437 = vadd.f32 %v2436, %v2406
  %v2438 = vadd.f32 %v2437, %v2407
  %v2439 = vadd.f32 %v2438, %v2408
  %v2440 = vadd.f32 %v2439, %v2409
  %v2441 = vadd.f32 %v2440, %v2410
  %v2442 = vrot.slane %v2441, 4
  %v2443 = vadd.f32 %v2441, %v2442
  %v2444 = vrot.slane %v2443, 2
  %v2445 = vadd.f32 %v2443, %v2444
  %v2446 = vrot.slane %v2445, 1
  %v2447 = vadd.f32 %v2445, %v2446
  %v2448 = vmul.f32 %v2347, %v2347
  %v2449 = vmul.f32 %v2348, %v2348
  %v2450 = vmul.f32 %v2349, %v2349
  %v2451 = vmul.f32 %v2350, %v2350
  %v2452 = vmul.f32 %v2351, %v2351
  %v2453 = vmul.f32 %v2352, %v2352
  %v2454 = vmul.f32 %v2353, %v2353
  %v2455 = vmul.f32 %v2354, %v2354
  %v2456 = vmul.f32 %v2355, %v2355
  %v2457 = vmul.f32 %v2356, %v2356
  %v2458 = vmul.f32 %v2357, %v2357
  %v2459 = vmul.f32 %v2358, %v2358
  %v2460 = vmul.f32 %v2359, %v2359
  %v2461 = vmul.f32 %v2360, %v2360
  %v2462 = vmul.f32 %v2361, %v2361
  %v2463 = vmul.f32 %v2362, %v2362
  %v2464 = vmul.f32 %v2363, %v2363
  %v2465 = vmul.f32 %v2364, %v2364
  %v2466 = vmul.f32 %v2365, %v2365
  %v2467 = vmul.f32 %v2366, %v2366
  %v2468 = vmul.f32 %v2367, %v2367
  %v2469 = vmul.f32 %v2368, %v2368
  %v2470 = vmul.f32 %v2369, %v2369
  %v2471 = vmul.f32 %v2370, %v2370
  %v2472 = vmul.f32 %v2371, %v2371
  %v2473 = vmul.f32 %v2372, %v2372
  %v2474 = vmul.f32 %v2373, %v2373
  %v2475 = vmul.f32 %v2374, %v2374
  %v2476 = vmul.f32 %v2375, %v2375
  %v2477 = vmul.f32 %v2376, %v2376
  %v2478 = vmul.f32 %v2377, %v2377
  %v2479 = vmul.f32 %v2378, %v2378
  %v2480 = vmul.f32 %v2448, %v2347
  %v2481 = vmul.f32 %v2449, %v2348
  %v2482 = vmul.f32 %v2450, %v2349
  %v2483 = vmul.f32 %v2451, %v2350
  %v2484 = vmul.f32 %v2452, %v2351
  %v2485 = vmul.f32 %v2453, %v2352
  %v2486 = vmul.f32 %v2454, %v2353
  %v2487 = vmul.f32 %v2455, %v2354
  %v2488 = vmul.f32 %v2456, %v2355
  %v2489 = vmul.f32 %v2457, %v2356
  %v2490 = vmul.f32 %v2458, %v2357
  %v2491 = vmul.f32 %v2459, %v2358
  %v2492 = vmul.f32 %v2460, %v2359
  %v2493 = vmul.f32 %v2461, %v2360
  %v2494 = vmul.f32 %v2462, %v2361
  %v2495 = vmul.f32 %v2463, %v2362
  %v2496 = vmul.f32 %v2464, %v2363
  %v2497 = vmul.f32 %v2465, %v2364
  %v2498 = vmul.f32 %v2466, %v2365
  %v2499 = vmul.f32 %v2467, %v2366
  %v2500 = vmul.f32 %v2468, %v2367
  %v2501 = vmul.f32 %v2469, %v2368
  %v2502 = vmul.f32 %v2470, %v2369
  %v2503 = vmul.f32 %v2471, %v2370
  %v2504 = vmul.f32 %v2472, %v2371
  %v2505 = vmul.f32 %v2473, %v2372
  %v2506 = vmul.f32 %v2474, %v2373
  %v2507 = vmul.f32 %v2475, %v2374
  %v2508 = vmul.f32 %v2476, %v2375
  %v2509 = vmul.f32 %v2477, %v2376
  %v2510 = vmul.f32 %v2478, %v2377
  %v2511 = vmul.f32 %v2479, %v2378
  %v2512 = vadd.f32 %v2480, %v2481
  %v2513 = vadd.f32 %v2512, %v2482
  %v2514 = vadd.f32 %v2513, %v2483
  %v2515 = vadd.f32 %v2514, %v2484
  %v2516 = vadd.f32 %v2515, %v2485
  %v2517 = vadd.f32 %v2516, %v2486
  %v2518 = vadd.f32 %v2517, %v2487
  %v2519 = vadd.f32 %v2518, %v2488
  %v2520 = vadd.f32 %v2519, %v2489
  %v2521 = vadd.f32 %v2520, %v2490
  %v2522 = vadd.f32 %v2521, %v2491
  %v2523 = vadd.f32 %v2522, %v2492
  %v2524 = vadd.f32 %v2523, %v2493
  %v2525 = vadd.f32 %v2524, %v2494
  %v2526 = vadd.f32 %v2525, %v2495
  %v2527 = vadd.f32 %v2526, %v2496
  %v2528 = vadd.f32 %v2527, %v2497
  %v2529 = vadd.f32 %v2528, %v2498
  %v2530 = vadd.f32 %v2529, %v2499
  %v2531 = vadd.f32 %v2530, %v2500
  %v2532 = vadd.f32 %v2531, %v2501
  %v2533 = vadd.f32 %v2532, %v2502
  %v2534 = vadd.f32 %v2533, %v2503
  %v2535 = vadd.f32 %v2534, %v2504
  %v2536 = vadd.f32 %v2535, %v2505
  %v2537 = vadd.f32 %v2536, %v2506
  %v2538 = vadd.f32 %v2537, %v2507
  %v2539 = vadd.f32 %v2538, %v2508
  %v2540 = vadd.f32 %v2539, %v2509
  %v2541 = vadd.f32 %v2540, %v2510
  %v2542 = vadd.f32 %v2541, %v2511
  %v2543 = vrot.slane %v2542, 4
  %v2544 = vadd.f32 %v2542, %v2543
  %v2545 = vrot.slane %v2544, 2
  %v2546 = vadd.f32 %v2544, %v2545
  %v2547 = vrot.slane %v2546, 1
  %v2548 = vadd.f32 %v2546, %v2547
  %vm2549 = vcmp.lt.f32.partialorder %v2447, 0.0
  %v2550 = vsel %vm2549, %v2218, %v2207
  %vm2551 = vcmp.gt.f32.partialorder %v2447, 0.0
  %v2552 = vsel %vm2551, %v2218, %v2209
  %v2553 = vrcp.pop %v2548
  %v2554 = vmul.f32 %v2447, %v2553
  %v2555 = vsub.f32 %v2218, %v2554
  %vm2556 = vcmp.ge.f32.partialorder %v2555, %v2550
  %vm2557 = vcmp.le.f32.partialorder %v2555, %v2552
  %vm2558 = vmand %vm2556, %vm2557
  %v2559 = vadd.f32 %v2550, %v2552
  %v2560 = vmul.f32 %v2559, 0.5
  %v2561 = vsel %vm2558, %v2555, %v2560
  %v2562 = vsub.f32 %v2561, %v16
  %v2563 = vsub.f32 %v2561, %v17
  %v2564 = vsub.f32 %v2561, %v18
  %v2565 = vsub.f32 %v2561, %v19
  %v2566 = vsub.f32 %v2561, %v20
  %v2567 = vsub.f32 %v2561, %v21
  %v2568 = vsub.f32 %v2561, %v22
  %v2569 = vsub.f32 %v2561, %v23
  %v2570 = vsub.f32 %v2561, %v24
  %v2571 = vsub.f32 %v2561, %v25
  %v2572 = vsub.f32 %v2561, %v26
  %v2573 = vsub.f32 %v2561, %v27
  %v2574 = vsub.f32 %v2561, %v28
  %v2575 = vsub.f32 %v2561, %v29
  %v2576 = vsub.f32 %v2561, %v30
  %v2577 = vsub.f32 %v2561, %v31
  %v2578 = vsub.f32 %v2561, %v32
  %v2579 = vsub.f32 %v2561, %v33
  %v2580 = vsub.f32 %v2561, %v34
  %v2581 = vsub.f32 %v2561, %v35
  %v2582 = vsub.f32 %v2561, %v36
  %v2583 = vsub.f32 %v2561, %v37
  %v2584 = vsub.f32 %v2561, %v38
  %v2585 = vsub.f32 %v2561, %v39
  %v2586 = vsub.f32 %v2561, %v40
  %v2587 = vsub.f32 %v2561, %v41
  %v2588 = vsub.f32 %v2561, %v42
  %v2589 = vsub.f32 %v2561, %v43
  %v2590 = vsub.f32 %v2561, %v44
  %v2591 = vsub.f32 %v2561, %v45
  %v2592 = vsub.f32 %v2561, %v46
  %v2593 = vsub.f32 %v2561, %v47
  %v2594 = vmul.f32 %v2562, %v192
  %v2595 = vmul.f32 %v2563, %v192
  %v2596 = vmul.f32 %v2564, %v192
  %v2597 = vmul.f32 %v2565, %v192
  %v2598 = vmul.f32 %v2566, %v192
  %v2599 = vmul.f32 %v2567, %v192
  %v2600 = vmul.f32 %v2568, %v192
  %v2601 = vmul.f32 %v2569, %v192
  %v2602 = vmul.f32 %v2570, %v192
  %v2603 = vmul.f32 %v2571, %v192
  %v2604 = vmul.f32 %v2572, %v192
  %v2605 = vmul.f32 %v2573, %v192
  %v2606 = vmul.f32 %v2574, %v192
  %v2607 = vmul.f32 %v2575, %v192
  %v2608 = vmul.f32 %v2576, %v192
  %v2609 = vmul.f32 %v2577, %v192
  %v2610 = vmul.f32 %v2578, %v192
  %v2611 = vmul.f32 %v2579, %v192
  %v2612 = vmul.f32 %v2580, %v192
  %v2613 = vmul.f32 %v2581, %v192
  %v2614 = vmul.f32 %v2582, %v192
  %v2615 = vmul.f32 %v2583, %v192
  %v2616 = vmul.f32 %v2584, %v192
  %v2617 = vmul.f32 %v2585, %v192
  %v2618 = vmul.f32 %v2586, %v192
  %v2619 = vmul.f32 %v2587, %v192
  %v2620 = vmul.f32 %v2588, %v192
  %v2621 = vmul.f32 %v2589, %v192
  %v2622 = vmul.f32 %v2590, %v192
  %v2623 = vmul.f32 %v2591, %v192
  %v2624 = vmul.f32 %v2592, %v192
  %v2625 = vmul.f32 %v2593, %v192
  %v2626 = vmul.f32 %v2594, %v2594
  %v2627 = vmul.f32 %v2595, %v2595
  %v2628 = vmul.f32 %v2596, %v2596
  %v2629 = vmul.f32 %v2597, %v2597
  %v2630 = vmul.f32 %v2598, %v2598
  %v2631 = vmul.f32 %v2599, %v2599
  %v2632 = vmul.f32 %v2600, %v2600
  %v2633 = vmul.f32 %v2601, %v2601
  %v2634 = vmul.f32 %v2602, %v2602
  %v2635 = vmul.f32 %v2603, %v2603
  %v2636 = vmul.f32 %v2604, %v2604
  %v2637 = vmul.f32 %v2605, %v2605
  %v2638 = vmul.f32 %v2606, %v2606
  %v2639 = vmul.f32 %v2607, %v2607
  %v2640 = vmul.f32 %v2608, %v2608
  %v2641 = vmul.f32 %v2609, %v2609
  %v2642 = vmul.f32 %v2610, %v2610
  %v2643 = vmul.f32 %v2611, %v2611
  %v2644 = vmul.f32 %v2612, %v2612
  %v2645 = vmul.f32 %v2613, %v2613
  %v2646 = vmul.f32 %v2614, %v2614
  %v2647 = vmul.f32 %v2615, %v2615
  %v2648 = vmul.f32 %v2616, %v2616
  %v2649 = vmul.f32 %v2617, %v2617
  %v2650 = vmul.f32 %v2618, %v2618
  %v2651 = vmul.f32 %v2619, %v2619
  %v2652 = vmul.f32 %v2620, %v2620
  %v2653 = vmul.f32 %v2621, %v2621
  %v2654 = vmul.f32 %v2622, %v2622
  %v2655 = vmul.f32 %v2623, %v2623
  %v2656 = vmul.f32 %v2624, %v2624
  %v2657 = vmul.f32 %v2625, %v2625
  %v2658 = vadd.f32 %v2626, 1.0
  %v2659 = vadd.f32 %v2627, 1.0
  %v2660 = vadd.f32 %v2628, 1.0
  %v2661 = vadd.f32 %v2629, 1.0
  %v2662 = vadd.f32 %v2630, 1.0
  %v2663 = vadd.f32 %v2631, 1.0
  %v2664 = vadd.f32 %v2632, 1.0
  %v2665 = vadd.f32 %v2633, 1.0
  %v2666 = vadd.f32 %v2634, 1.0
  %v2667 = vadd.f32 %v2635, 1.0
  %v2668 = vadd.f32 %v2636, 1.0
  %v2669 = vadd.f32 %v2637, 1.0
  %v2670 = vadd.f32 %v2638, 1.0
  %v2671 = vadd.f32 %v2639, 1.0
  %v2672 = vadd.f32 %v2640, 1.0
  %v2673 = vadd.f32 %v2641, 1.0
  %v2674 = vadd.f32 %v2642, 1.0
  %v2675 = vadd.f32 %v2643, 1.0
  %v2676 = vadd.f32 %v2644, 1.0
  %v2677 = vadd.f32 %v2645, 1.0
  %v2678 = vadd.f32 %v2646, 1.0
  %v2679 = vadd.f32 %v2647, 1.0
  %v2680 = vadd.f32 %v2648, 1.0
  %v2681 = vadd.f32 %v2649, 1.0
  %v2682 = vadd.f32 %v2650, 1.0
  %v2683 = vadd.f32 %v2651, 1.0
  %v2684 = vadd.f32 %v2652, 1.0
  %v2685 = vadd.f32 %v2653, 1.0
  %v2686 = vadd.f32 %v2654, 1.0
  %v2687 = vadd.f32 %v2655, 1.0
  %v2688 = vadd.f32 %v2656, 1.0
  %v2689 = vadd.f32 %v2657, 1.0
  %v2690 = vrsqrt.pop %v2658
  %v2691 = vrsqrt.pop %v2659
  %v2692 = vrsqrt.pop %v2660
  %v2693 = vrsqrt.pop %v2661
  %v2694 = vrsqrt.pop %v2662
  %v2695 = vrsqrt.pop %v2663
  %v2696 = vrsqrt.pop %v2664
  %v2697 = vrsqrt.pop %v2665
  %v2698 = vrsqrt.pop %v2666
  %v2699 = vrsqrt.pop %v2667
  %v2700 = vrsqrt.pop %v2668
  %v2701 = vrsqrt.pop %v2669
  %v2702 = vrsqrt.pop %v2670
  %v2703 = vrsqrt.pop %v2671
  %v2704 = vrsqrt.pop %v2672
  %v2705 = vrsqrt.pop %v2673
  %v2706 = vrsqrt.pop %v2674
  %v2707 = vrsqrt.pop %v2675
  %v2708 = vrsqrt.pop %v2676
  %v2709 = vrsqrt.pop %v2677
  %v2710 = vrsqrt.pop %v2678
  %v2711 = vrsqrt.pop %v2679
  %v2712 = vrsqrt.pop %v2680
  %v2713 = vrsqrt.pop %v2681
  %v2714 = vrsqrt.pop %v2682
  %v2715 = vrsqrt.pop %v2683
  %v2716 = vrsqrt.pop %v2684
  %v2717 = vrsqrt.pop %v2685
  %v2718 = vrsqrt.pop %v2686
  %v2719 = vrsqrt.pop %v2687
  %v2720 = vrsqrt.pop %v2688
  %v2721 = vrsqrt.pop %v2689
  %v2722 = vmul.f32 %v2562, %v2690
  %v2723 = vmul.f32 %v2563, %v2691
  %v2724 = vmul.f32 %v2564, %v2692
  %v2725 = vmul.f32 %v2565, %v2693
  %v2726 = vmul.f32 %v2566, %v2694
  %v2727 = vmul.f32 %v2567, %v2695
  %v2728 = vmul.f32 %v2568, %v2696
  %v2729 = vmul.f32 %v2569, %v2697
  %v2730 = vmul.f32 %v2570, %v2698
  %v2731 = vmul.f32 %v2571, %v2699
  %v2732 = vmul.f32 %v2572, %v2700
  %v2733 = vmul.f32 %v2573, %v2701
  %v2734 = vmul.f32 %v2574, %v2702
  %v2735 = vmul.f32 %v2575, %v2703
  %v2736 = vmul.f32 %v2576, %v2704
  %v2737 = vmul.f32 %v2577, %v2705
  %v2738 = vmul.f32 %v2578, %v2706
  %v2739 = vmul.f32 %v2579, %v2707
  %v2740 = vmul.f32 %v2580, %v2708
  %v2741 = vmul.f32 %v2581, %v2709
  %v2742 = vmul.f32 %v2582, %v2710
  %v2743 = vmul.f32 %v2583, %v2711
  %v2744 = vmul.f32 %v2584, %v2712
  %v2745 = vmul.f32 %v2585, %v2713
  %v2746 = vmul.f32 %v2586, %v2714
  %v2747 = vmul.f32 %v2587, %v2715
  %v2748 = vmul.f32 %v2588, %v2716
  %v2749 = vmul.f32 %v2589, %v2717
  %v2750 = vmul.f32 %v2590, %v2718
  %v2751 = vmul.f32 %v2591, %v2719
  %v2752 = vmul.f32 %v2592, %v2720
  %v2753 = vmul.f32 %v2593, %v2721
  %v2754 = vadd.f32 %v2722, %v2723
  %v2755 = vadd.f32 %v2754, %v2724
  %v2756 = vadd.f32 %v2755, %v2725
  %v2757 = vadd.f32 %v2756, %v2726
  %v2758 = vadd.f32 %v2757, %v2727
  %v2759 = vadd.f32 %v2758, %v2728
  %v2760 = vadd.f32 %v2759, %v2729
  %v2761 = vadd.f32 %v2760, %v2730
  %v2762 = vadd.f32 %v2761, %v2731
  %v2763 = vadd.f32 %v2762, %v2732
  %v2764 = vadd.f32 %v2763, %v2733
  %v2765 = vadd.f32 %v2764, %v2734
  %v2766 = vadd.f32 %v2765, %v2735
  %v2767 = vadd.f32 %v2766, %v2736
  %v2768 = vadd.f32 %v2767, %v2737
  %v2769 = vadd.f32 %v2768, %v2738
  %v2770 = vadd.f32 %v2769, %v2739
  %v2771 = vadd.f32 %v2770, %v2740
  %v2772 = vadd.f32 %v2771, %v2741
  %v2773 = vadd.f32 %v2772, %v2742
  %v2774 = vadd.f32 %v2773, %v2743
  %v2775 = vadd.f32 %v2774, %v2744
  %v2776 = vadd.f32 %v2775, %v2745
  %v2777 = vadd.f32 %v2776, %v2746
  %v2778 = vadd.f32 %v2777, %v2747
  %v2779 = vadd.f32 %v2778, %v2748
  %v2780 = vadd.f32 %v2779, %v2749
  %v2781 = vadd.f32 %v2780, %v2750
  %v2782 = vadd.f32 %v2781, %v2751
  %v2783 = vadd.f32 %v2782, %v2752
  %v2784 = vadd.f32 %v2783, %v2753
  %v2785 = vrot.slane %v2784, 4
  %v2786 = vadd.f32 %v2784, %v2785
  %v2787 = vrot.slane %v2786, 2
  %v2788 = vadd.f32 %v2786, %v2787
  %v2789 = vrot.slane %v2788, 1
  %v2790 = vadd.f32 %v2788, %v2789
  %v2791 = vmul.f32 %v2690, %v2690
  %v2792 = vmul.f32 %v2691, %v2691
  %v2793 = vmul.f32 %v2692, %v2692
  %v2794 = vmul.f32 %v2693, %v2693
  %v2795 = vmul.f32 %v2694, %v2694
  %v2796 = vmul.f32 %v2695, %v2695
  %v2797 = vmul.f32 %v2696, %v2696
  %v2798 = vmul.f32 %v2697, %v2697
  %v2799 = vmul.f32 %v2698, %v2698
  %v2800 = vmul.f32 %v2699, %v2699
  %v2801 = vmul.f32 %v2700, %v2700
  %v2802 = vmul.f32 %v2701, %v2701
  %v2803 = vmul.f32 %v2702, %v2702
  %v2804 = vmul.f32 %v2703, %v2703
  %v2805 = vmul.f32 %v2704, %v2704
  %v2806 = vmul.f32 %v2705, %v2705
  %v2807 = vmul.f32 %v2706, %v2706
  %v2808 = vmul.f32 %v2707, %v2707
  %v2809 = vmul.f32 %v2708, %v2708
  %v2810 = vmul.f32 %v2709, %v2709
  %v2811 = vmul.f32 %v2710, %v2710
  %v2812 = vmul.f32 %v2711, %v2711
  %v2813 = vmul.f32 %v2712, %v2712
  %v2814 = vmul.f32 %v2713, %v2713
  %v2815 = vmul.f32 %v2714, %v2714
  %v2816 = vmul.f32 %v2715, %v2715
  %v2817 = vmul.f32 %v2716, %v2716
  %v2818 = vmul.f32 %v2717, %v2717
  %v2819 = vmul.f32 %v2718, %v2718
  %v2820 = vmul.f32 %v2719, %v2719
  %v2821 = vmul.f32 %v2720, %v2720
  %v2822 = vmul.f32 %v2721, %v2721
  %v2823 = vmul.f32 %v2791, %v2690
  %v2824 = vmul.f32 %v2792, %v2691
  %v2825 = vmul.f32 %v2793, %v2692
  %v2826 = vmul.f32 %v2794, %v2693
  %v2827 = vmul.f32 %v2795, %v2694
  %v2828 = vmul.f32 %v2796, %v2695
  %v2829 = vmul.f32 %v2797, %v2696
  %v2830 = vmul.f32 %v2798, %v2697
  %v2831 = vmul.f32 %v2799, %v2698
  %v2832 = vmul.f32 %v2800, %v2699
  %v2833 = vmul.f32 %v2801, %v2700
  %v2834 = vmul.f32 %v2802, %v2701
  %v2835 = vmul.f32 %v2803, %v2702
  %v2836 = vmul.f32 %v2804, %v2703
  %v2837 = vmul.f32 %v2805, %v2704
  %v2838 = vmul.f32 %v2806, %v2705
  %v2839 = vmul.f32 %v2807, %v2706
  %v2840 = vmul.f32 %v2808, %v2707
  %v2841 = vmul.f32 %v2809, %v2708
  %v2842 = vmul.f32 %v2810, %v2709
  %v2843 = vmul.f32 %v2811, %v2710
  %v2844 = vmul.f32 %v2812, %v2711
  %v2845 = vmul.f32 %v2813, %v2712
  %v2846 = vmul.f32 %v2814, %v2713
  %v2847 = vmul.f32 %v2815, %v2714
  %v2848 = vmul.f32 %v2816, %v2715
  %v2849 = vmul.f32 %v2817, %v2716
  %v2850 = vmul.f32 %v2818, %v2717
  %v2851 = vmul.f32 %v2819, %v2718
  %v2852 = vmul.f32 %v2820, %v2719
  %v2853 = vmul.f32 %v2821, %v2720
  %v2854 = vmul.f32 %v2822, %v2721
  %v2855 = vadd.f32 %v2823, %v2824
  %v2856 = vadd.f32 %v2855, %v2825
  %v2857 = vadd.f32 %v2856, %v2826
  %v2858 = vadd.f32 %v2857, %v2827
  %v2859 = vadd.f32 %v2858, %v2828
  %v2860 = vadd.f32 %v2859, %v2829
  %v2861 = vadd.f32 %v2860, %v2830
  %v2862 = vadd.f32 %v2861, %v2831
  %v2863 = vadd.f32 %v2862, %v2832
  %v2864 = vadd.f32 %v2863, %v2833
  %v2865 = vadd.f32 %v2864, %v2834
  %v2866 = vadd.f32 %v2865, %v2835
  %v2867 = vadd.f32 %v2866, %v2836
  %v2868 = vadd.f32 %v2867, %v2837
  %v2869 = vadd.f32 %v2868, %v2838
  %v2870 = vadd.f32 %v2869, %v2839
  %v2871 = vadd.f32 %v2870, %v2840
  %v2872 = vadd.f32 %v2871, %v2841
  %v2873 = vadd.f32 %v2872, %v2842
  %v2874 = vadd.f32 %v2873, %v2843
  %v2875 = vadd.f32 %v2874, %v2844
  %v2876 = vadd.f32 %v2875, %v2845
  %v2877 = vadd.f32 %v2876, %v2846
  %v2878 = vadd.f32 %v2877, %v2847
  %v2879 = vadd.f32 %v2878, %v2848
  %v2880 = vadd.f32 %v2879, %v2849
  %v2881 = vadd.f32 %v2880, %v2850
  %v2882 = vadd.f32 %v2881, %v2851
  %v2883 = vadd.f32 %v2882, %v2852
  %v2884 = vadd.f32 %v2883, %v2853
  %v2885 = vadd.f32 %v2884, %v2854
  %v2886 = vrot.slane %v2885, 4
  %v2887 = vadd.f32 %v2885, %v2886
  %v2888 = vrot.slane %v2887, 2
  %v2889 = vadd.f32 %v2887, %v2888
  %v2890 = vrot.slane %v2889, 1
  %v2891 = vadd.f32 %v2889, %v2890
  %vm2892 = vcmp.lt.f32.partialorder %v2790, 0.0
  %v2893 = vsel %vm2892, %v2561, %v2550
  %vm2894 = vcmp.gt.f32.partialorder %v2790, 0.0
  %v2895 = vsel %vm2894, %v2561, %v2552
  %v2896 = vrcp.pop %v2891
  %v2897 = vmul.f32 %v2790, %v2896
  %v2898 = vsub.f32 %v2561, %v2897
  %vm2899 = vcmp.ge.f32.partialorder %v2898, %v2893
  %vm2900 = vcmp.le.f32.partialorder %v2898, %v2895
  %vm2901 = vmand %vm2899, %vm2900
  %v2902 = vadd.f32 %v2893, %v2895
  %v2903 = vmul.f32 %v2902, 0.5
  %v2904 = vsel %vm2901, %v2898, %v2903
  %v2905 = vsub.f32 %v2904, %v16
  %v2906 = vsub.f32 %v2904, %v17
  %v2907 = vsub.f32 %v2904, %v18
  %v2908 = vsub.f32 %v2904, %v19
  %v2909 = vsub.f32 %v2904, %v20
  %v2910 = vsub.f32 %v2904, %v21
  %v2911 = vsub.f32 %v2904, %v22
  %v2912 = vsub.f32 %v2904, %v23
  %v2913 = vsub.f32 %v2904, %v24
  %v2914 = vsub.f32 %v2904, %v25
  %v2915 = vsub.f32 %v2904, %v26
  %v2916 = vsub.f32 %v2904, %v27
  %v2917 = vsub.f32 %v2904, %v28
  %v2918 = vsub.f32 %v2904, %v29
  %v2919 = vsub.f32 %v2904, %v30
  %v2920 = vsub.f32 %v2904, %v31
  %v2921 = vsub.f32 %v2904, %v32
  %v2922 = vsub.f32 %v2904, %v33
  %v2923 = vsub.f32 %v2904, %v34
  %v2924 = vsub.f32 %v2904, %v35
  %v2925 = vsub.f32 %v2904, %v36
  %v2926 = vsub.f32 %v2904, %v37
  %v2927 = vsub.f32 %v2904, %v38
  %v2928 = vsub.f32 %v2904, %v39
  %v2929 = vsub.f32 %v2904, %v40
  %v2930 = vsub.f32 %v2904, %v41
  %v2931 = vsub.f32 %v2904, %v42
  %v2932 = vsub.f32 %v2904, %v43
  %v2933 = vsub.f32 %v2904, %v44
  %v2934 = vsub.f32 %v2904, %v45
  %v2935 = vsub.f32 %v2904, %v46
  %v2936 = vsub.f32 %v2904, %v47
  %v2937 = vmul.f32 %v2905, %v192
  %v2938 = vmul.f32 %v2906, %v192
  %v2939 = vmul.f32 %v2907, %v192
  %v2940 = vmul.f32 %v2908, %v192
  %v2941 = vmul.f32 %v2909, %v192
  %v2942 = vmul.f32 %v2910, %v192
  %v2943 = vmul.f32 %v2911, %v192
  %v2944 = vmul.f32 %v2912, %v192
  %v2945 = vmul.f32 %v2913, %v192
  %v2946 = vmul.f32 %v2914, %v192
  %v2947 = vmul.f32 %v2915, %v192
  %v2948 = vmul.f32 %v2916, %v192
  %v2949 = vmul.f32 %v2917, %v192
  %v2950 = vmul.f32 %v2918, %v192
  %v2951 = vmul.f32 %v2919, %v192
  %v2952 = vmul.f32 %v2920, %v192
  %v2953 = vmul.f32 %v2921, %v192
  %v2954 = vmul.f32 %v2922, %v192
  %v2955 = vmul.f32 %v2923, %v192
  %v2956 = vmul.f32 %v2924, %v192
  %v2957 = vmul.f32 %v2925, %v192
  %v2958 = vmul.f32 %v2926, %v192
  %v2959 = vmul.f32 %v2927, %v192
  %v2960 = vmul.f32 %v2928, %v192
  %v2961 = vmul.f32 %v2929, %v192
  %v2962 = vmul.f32 %v2930, %v192
  %v2963 = vmul.f32 %v2931, %v192
  %v2964 = vmul.f32 %v2932, %v192
  %v2965 = vmul.f32 %v2933, %v192
  %v2966 = vmul.f32 %v2934, %v192
  %v2967 = vmul.f32 %v2935, %v192
  %v2968 = vmul.f32 %v2936, %v192
  %v2969 = vmul.f32 %v2937, %v2937
  %v2970 = vmul.f32 %v2938, %v2938
  %v2971 = vmul.f32 %v2939, %v2939
  %v2972 = vmul.f32 %v2940, %v2940
  %v2973 = vmul.f32 %v2941, %v2941
  %v2974 = vmul.f32 %v2942, %v2942
  %v2975 = vmul.f32 %v2943, %v2943
  %v2976 = vmul.f32 %v2944, %v2944
  %v2977 = vmul.f32 %v2945, %v2945
  %v2978 = vmul.f32 %v2946, %v2946
  %v2979 = vmul.f32 %v2947, %v2947
  %v2980 = vmul.f32 %v2948, %v2948
  %v2981 = vmul.f32 %v2949, %v2949
  %v2982 = vmul.f32 %v2950, %v2950
  %v2983 = vmul.f32 %v2951, %v2951
  %v2984 = vmul.f32 %v2952, %v2952
  %v2985 = vmul.f32 %v2953, %v2953
  %v2986 = vmul.f32 %v2954, %v2954
  %v2987 = vmul.f32 %v2955, %v2955
  %v2988 = vmul.f32 %v2956, %v2956
  %v2989 = vmul.f32 %v2957, %v2957
  %v2990 = vmul.f32 %v2958, %v2958
  %v2991 = vmul.f32 %v2959, %v2959
  %v2992 = vmul.f32 %v2960, %v2960
  %v2993 = vmul.f32 %v2961, %v2961
  %v2994 = vmul.f32 %v2962, %v2962
  %v2995 = vmul.f32 %v2963, %v2963
  %v2996 = vmul.f32 %v2964, %v2964
  %v2997 = vmul.f32 %v2965, %v2965
  %v2998 = vmul.f32 %v2966, %v2966
  %v2999 = vmul.f32 %v2967, %v2967
  %v3000 = vmul.f32 %v2968, %v2968
  %v3001 = vadd.f32 %v2969, 1.0
  %v3002 = vadd.f32 %v2970, 1.0
  %v3003 = vadd.f32 %v2971, 1.0
  %v3004 = vadd.f32 %v2972, 1.0
  %v3005 = vadd.f32 %v2973, 1.0
  %v3006 = vadd.f32 %v2974, 1.0
  %v3007 = vadd.f32 %v2975, 1.0
  %v3008 = vadd.f32 %v2976, 1.0
  %v3009 = vadd.f32 %v2977, 1.0
  %v3010 = vadd.f32 %v2978, 1.0
  %v3011 = vadd.f32 %v2979, 1.0
  %v3012 = vadd.f32 %v2980, 1.0
  %v3013 = vadd.f32 %v2981, 1.0
  %v3014 = vadd.f32 %v2982, 1.0
  %v3015 = vadd.f32 %v2983, 1.0
  %v3016 = vadd.f32 %v2984, 1.0
  %v3017 = vadd.f32 %v2985, 1.0
  %v3018 = vadd.f32 %v2986, 1.0
  %v3019 = vadd.f32 %v2987, 1.0
  %v3020 = vadd.f32 %v2988, 1.0
  %v3021 = vadd.f32 %v2989, 1.0
  %v3022 = vadd.f32 %v2990, 1.0
  %v3023 = vadd.f32 %v2991, 1.0
  %v3024 = vadd.f32 %v2992, 1.0
  %v3025 = vadd.f32 %v2993, 1.0
  %v3026 = vadd.f32 %v2994, 1.0
  %v3027 = vadd.f32 %v2995, 1.0
  %v3028 = vadd.f32 %v2996, 1.0
  %v3029 = vadd.f32 %v2997, 1.0
  %v3030 = vadd.f32 %v2998, 1.0
  %v3031 = vadd.f32 %v2999, 1.0
  %v3032 = vadd.f32 %v3000, 1.0
  %v3033 = vrsqrt.pop %v3001
  %v3034 = vrsqrt.pop %v3002
  %v3035 = vrsqrt.pop %v3003
  %v3036 = vrsqrt.pop %v3004
  %v3037 = vrsqrt.pop %v3005
  %v3038 = vrsqrt.pop %v3006
  %v3039 = vrsqrt.pop %v3007
  %v3040 = vrsqrt.pop %v3008
  %v3041 = vrsqrt.pop %v3009
  %v3042 = vrsqrt.pop %v3010
  %v3043 = vrsqrt.pop %v3011
  %v3044 = vrsqrt.pop %v3012
  %v3045 = vrsqrt.pop %v3013
  %v3046 = vrsqrt.pop %v3014
  %v3047 = vrsqrt.pop %v3015
  %v3048 = vrsqrt.pop %v3016
  %v3049 = vrsqrt.pop %v3017
  %v3050 = vrsqrt.pop %v3018
  %v3051 = vrsqrt.pop %v3019
  %v3052 = vrsqrt.pop %v3020
  %v3053 = vrsqrt.pop %v3021
  %v3054 = vrsqrt.pop %v3022
  %v3055 = vrsqrt.pop %v3023
  %v3056 = vrsqrt.pop %v3024
  %v3057 = vrsqrt.pop %v3025
  %v3058 = vrsqrt.pop %v3026
  %v3059 = vrsqrt.pop %v3027
  %v3060 = vrsqrt.pop %v3028
  %v3061 = vrsqrt.pop %v3029
  %v3062 = vrsqrt.pop %v3030
  %v3063 = vrsqrt.pop %v3031
  %v3064 = vrsqrt.pop %v3032
  %v3065 = vmul.f32 %v2905, %v3033
  %v3066 = vmul.f32 %v2906, %v3034
  %v3067 = vmul.f32 %v2907, %v3035
  %v3068 = vmul.f32 %v2908, %v3036
  %v3069 = vmul.f32 %v2909, %v3037
  %v3070 = vmul.f32 %v2910, %v3038
  %v3071 = vmul.f32 %v2911, %v3039
  %v3072 = vmul.f32 %v2912, %v3040
  %v3073 = vmul.f32 %v2913, %v3041
  %v3074 = vmul.f32 %v2914, %v3042
  %v3075 = vmul.f32 %v2915, %v3043
  %v3076 = vmul.f32 %v2916, %v3044
  %v3077 = vmul.f32 %v2917, %v3045
  %v3078 = vmul.f32 %v2918, %v3046
  %v3079 = vmul.f32 %v2919, %v3047
  %v3080 = vmul.f32 %v2920, %v3048
  %v3081 = vmul.f32 %v2921, %v3049
  %v3082 = vmul.f32 %v2922, %v3050
  %v3083 = vmul.f32 %v2923, %v3051
  %v3084 = vmul.f32 %v2924, %v3052
  %v3085 = vmul.f32 %v2925, %v3053
  %v3086 = vmul.f32 %v2926, %v3054
  %v3087 = vmul.f32 %v2927, %v3055
  %v3088 = vmul.f32 %v2928, %v3056
  %v3089 = vmul.f32 %v2929, %v3057
  %v3090 = vmul.f32 %v2930, %v3058
  %v3091 = vmul.f32 %v2931, %v3059
  %v3092 = vmul.f32 %v2932, %v3060
  %v3093 = vmul.f32 %v2933, %v3061
  %v3094 = vmul.f32 %v2934, %v3062
  %v3095 = vmul.f32 %v2935, %v3063
  %v3096 = vmul.f32 %v2936, %v3064
  %v3097 = vadd.f32 %v3065, %v3066
  %v3098 = vadd.f32 %v3097, %v3067
  %v3099 = vadd.f32 %v3098, %v3068
  %v3100 = vadd.f32 %v3099, %v3069
  %v3101 = vadd.f32 %v3100, %v3070
  %v3102 = vadd.f32 %v3101, %v3071
  %v3103 = vadd.f32 %v3102, %v3072
  %v3104 = vadd.f32 %v3103, %v3073
  %v3105 = vadd.f32 %v3104, %v3074
  %v3106 = vadd.f32 %v3105, %v3075
  %v3107 = vadd.f32 %v3106, %v3076
  %v3108 = vadd.f32 %v3107, %v3077
  %v3109 = vadd.f32 %v3108, %v3078
  %v3110 = vadd.f32 %v3109, %v3079
  %v3111 = vadd.f32 %v3110, %v3080
  %v3112 = vadd.f32 %v3111, %v3081
  %v3113 = vadd.f32 %v3112, %v3082
  %v3114 = vadd.f32 %v3113, %v3083
  %v3115 = vadd.f32 %v3114, %v3084
  %v3116 = vadd.f32 %v3115, %v3085
  %v3117 = vadd.f32 %v3116, %v3086
  %v3118 = vadd.f32 %v3117, %v3087
  %v3119 = vadd.f32 %v3118, %v3088
  %v3120 = vadd.f32 %v3119, %v3089
  %v3121 = vadd.f32 %v3120, %v3090
  %v3122 = vadd.f32 %v3121, %v3091
  %v3123 = vadd.f32 %v3122, %v3092
  %v3124 = vadd.f32 %v3123, %v3093
  %v3125 = vadd.f32 %v3124, %v3094
  %v3126 = vadd.f32 %v3125, %v3095
  %v3127 = vadd.f32 %v3126, %v3096
  %v3128 = vrot.slane %v3127, 4
  %v3129 = vadd.f32 %v3127, %v3128
  %v3130 = vrot.slane %v3129, 2
  %v3131 = vadd.f32 %v3129, %v3130
  %v3132 = vrot.slane %v3131, 1
  %v3133 = vadd.f32 %v3131, %v3132
  %v3134 = vmul.f32 %v3033, %v3033
  %v3135 = vmul.f32 %v3034, %v3034
  %v3136 = vmul.f32 %v3035, %v3035
  %v3137 = vmul.f32 %v3036, %v3036
  %v3138 = vmul.f32 %v3037, %v3037
  %v3139 = vmul.f32 %v3038, %v3038
  %v3140 = vmul.f32 %v3039, %v3039
  %v3141 = vmul.f32 %v3040, %v3040
  %v3142 = vmul.f32 %v3041, %v3041
  %v3143 = vmul.f32 %v3042, %v3042
  %v3144 = vmul.f32 %v3043, %v3043
  %v3145 = vmul.f32 %v3044, %v3044
  %v3146 = vmul.f32 %v3045, %v3045
  %v3147 = vmul.f32 %v3046, %v3046
  %v3148 = vmul.f32 %v3047, %v3047
  %v3149 = vmul.f32 %v3048, %v3048
  %v3150 = vmul.f32 %v3049, %v3049
  %v3151 = vmul.f32 %v3050, %v3050
  %v3152 = vmul.f32 %v3051, %v3051
  %v3153 = vmul.f32 %v3052, %v3052
  %v3154 = vmul.f32 %v3053, %v3053
  %v3155 = vmul.f32 %v3054, %v3054
  %v3156 = vmul.f32 %v3055, %v3055
  %v3157 = vmul.f32 %v3056, %v3056
  %v3158 = vmul.f32 %v3057, %v3057
  %v3159 = vmul.f32 %v3058, %v3058
  %v3160 = vmul.f32 %v3059, %v3059
  %v3161 = vmul.f32 %v3060, %v3060
  %v3162 = vmul.f32 %v3061, %v3061
  %v3163 = vmul.f32 %v3062, %v3062
  %v3164 = vmul.f32 %v3063, %v3063
  %v3165 = vmul.f32 %v3064, %v3064
  %v3166 = vmul.f32 %v3134, %v3033
  %v3167 = vmul.f32 %v3135, %v3034
  %v3168 = vmul.f32 %v3136, %v3035
  %v3169 = vmul.f32 %v3137, %v3036
  %v3170 = vmul.f32 %v3138, %v3037
  %v3171 = vmul.f32 %v3139, %v3038
  %v3172 = vmul.f32 %v3140, %v3039
  %v3173 = vmul.f32 %v3141, %v3040
  %v3174 = vmul.f32 %v3142, %v3041
  %v3175 = vmul.f32 %v3143, %v3042
  %v3176 = vmul.f32 %v3144, %v3043
  %v3177 = vmul.f32 %v3145, %v3044
  %v3178 = vmul.f32 %v3146, %v3045
  %v3179 = vmul.f32 %v3147, %v3046
  %v3180 = vmul.f32 %v3148, %v3047
  %v3181 = vmul.f32 %v3149, %v3048
  %v3182 = vmul.f32 %v3150, %v3049
  %v3183 = vmul.f32 %v3151, %v3050
  %v3184 = vmul.f32 %v3152, %v3051
  %v3185 = vmul.f32 %v3153, %v3052
  %v3186 = vmul.f32 %v3154, %v3053
  %v3187 = vmul.f32 %v3155, %v3054
  %v3188 = vmul.f32 %v3156, %v3055
  %v3189 = vmul.f32 %v3157, %v3056
  %v3190 = vmul.f32 %v3158, %v3057
  %v3191 = vmul.f32 %v3159, %v3058
  %v3192 = vmul.f32 %v3160, %v3059
  %v3193 = vmul.f32 %v3161, %v3060
  %v3194 = vmul.f32 %v3162, %v3061
  %v3195 = vmul.f32 %v3163, %v3062
  %v3196 = vmul.f32 %v3164, %v3063
  %v3197 = vmul.f32 %v3165, %v3064
  %v3198 = vadd.f32 %v3166, %v3167
  %v3199 = vadd.f32 %v3198, %v3168
  %v3200 = vadd.f32 %v3199, %v3169
  %v3201 = vadd.f32 %v3200, %v3170
  %v3202 = vadd.f32 %v3201, %v3171
  %v3203 = vadd.f32 %v3202, %v3172
  %v3204 = vadd.f32 %v3203, %v3173
  %v3205 = vadd.f32 %v3204, %v3174
  %v3206 = vadd.f32 %v3205, %v3175
  %v3207 = vadd.f32 %v3206, %v3176
  %v3208 = vadd.f32 %v3207, %v3177
  %v3209 = vadd.f32 %v3208, %v3178
  %v3210 = vadd.f32 %v3209, %v3179
  %v3211 = vadd.f32 %v3210, %v3180
  %v3212 = vadd.f32 %v3211, %v3181
  %v3213 = vadd.f32 %v3212, %v3182
  %v3214 = vadd.f32 %v3213, %v3183
  %v3215 = vadd.f32 %v3214, %v3184
  %v3216 = vadd.f32 %v3215, %v3185
  %v3217 = vadd.f32 %v3216, %v3186
  %v3218 = vadd.f32 %v3217, %v3187
  %v3219 = vadd.f32 %v3218, %v3188
  %v3220 = vadd.f32 %v3219, %v3189
  %v3221 = vadd.f32 %v3220, %v3190
  %v3222 = vadd.f32 %v3221, %v3191
  %v3223 = vadd.f32 %v3222, %v3192
  %v3224 = vadd.f32 %v3223, %v3193
  %v3225 = vadd.f32 %v3224, %v3194
  %v3226 = vadd.f32 %v3225, %v3195
  %v3227 = vadd.f32 %v3226, %v3196
  %v3228 = vadd.f32 %v3227, %v3197
  %v3229 = vrot.slane %v3228, 4
  %v3230 = vadd.f32 %v3228, %v3229
  %v3231 = vrot.slane %v3230, 2
  %v3232 = vadd.f32 %v3230, %v3231
  %v3233 = vrot.slane %v3232, 1
  %v3234 = vadd.f32 %v3232, %v3233
  %vm3235 = vcmp.lt.f32.partialorder %v3133, 0.0
  %v3236 = vsel %vm3235, %v2904, %v122
  %vm3237 = vcmp.gt.f32.partialorder %v3133, 0.0
  %v3238 = vsel %vm3237, %v2904, %v159
  %v3239 = vrcp.pop %v3234
  %v3240 = vmul.f32 %v3133, %v3239
  %v3241 = vsub.f32 %v2904, %v3240
  %vm3242 = vcmp.ge.f32.partialorder %v3241, %v3236
  %vm3243 = vcmp.le.f32.partialorder %v3241, %v3238
  %vm3244 = vmand %vm3242, %vm3243
  %v3245 = vadd.f32 %v3236, %v3238
  %v3246 = vmul.f32 %v3245, 0.5
  %v3247 = vsel %vm3244, %v3241, %v3246
  %v3248 = vsub.f32 %v3247, %v16
  %v3249 = vsub.f32 %v3247, %v17
  %v3250 = vsub.f32 %v3247, %v18
  %v3251 = vsub.f32 %v3247, %v19
  %v3252 = vsub.f32 %v3247, %v20
  %v3253 = vsub.f32 %v3247, %v21
  %v3254 = vsub.f32 %v3247, %v22
  %v3255 = vsub.f32 %v3247, %v23
  %v3256 = vsub.f32 %v3247, %v24
  %v3257 = vsub.f32 %v3247, %v25
  %v3258 = vsub.f32 %v3247, %v26
  %v3259 = vsub.f32 %v3247, %v27
  %v3260 = vsub.f32 %v3247, %v28
  %v3261 = vsub.f32 %v3247, %v29
  %v3262 = vsub.f32 %v3247, %v30
  %v3263 = vsub.f32 %v3247, %v31
  %v3264 = vsub.f32 %v3247, %v32
  %v3265 = vsub.f32 %v3247, %v33
  %v3266 = vsub.f32 %v3247, %v34
  %v3267 = vsub.f32 %v3247, %v35
  %v3268 = vsub.f32 %v3247, %v36
  %v3269 = vsub.f32 %v3247, %v37
  %v3270 = vsub.f32 %v3247, %v38
  %v3271 = vsub.f32 %v3247, %v39
  %v3272 = vsub.f32 %v3247, %v40
  %v3273 = vsub.f32 %v3247, %v41
  %v3274 = vsub.f32 %v3247, %v42
  %v3275 = vsub.f32 %v3247, %v43
  %v3276 = vsub.f32 %v3247, %v44
  %v3277 = vsub.f32 %v3247, %v45
  %v3278 = vsub.f32 %v3247, %v46
  %v3279 = vsub.f32 %v3247, %v47
  %v3280 = vmul.f32 %v3248, %v192
  %v3281 = vmul.f32 %v3249, %v192
  %v3282 = vmul.f32 %v3250, %v192
  %v3283 = vmul.f32 %v3251, %v192
  %v3284 = vmul.f32 %v3252, %v192
  %v3285 = vmul.f32 %v3253, %v192
  %v3286 = vmul.f32 %v3254, %v192
  %v3287 = vmul.f32 %v3255, %v192
  %v3288 = vmul.f32 %v3256, %v192
  %v3289 = vmul.f32 %v3257, %v192
  %v3290 = vmul.f32 %v3258, %v192
  %v3291 = vmul.f32 %v3259, %v192
  %v3292 = vmul.f32 %v3260, %v192
  %v3293 = vmul.f32 %v3261, %v192
  %v3294 = vmul.f32 %v3262, %v192
  %v3295 = vmul.f32 %v3263, %v192
  %v3296 = vmul.f32 %v3264, %v192
  %v3297 = vmul.f32 %v3265, %v192
  %v3298 = vmul.f32 %v3266, %v192
  %v3299 = vmul.f32 %v3267, %v192
  %v3300 = vmul.f32 %v3268, %v192
  %v3301 = vmul.f32 %v3269, %v192
  %v3302 = vmul.f32 %v3270, %v192
  %v3303 = vmul.f32 %v3271, %v192
  %v3304 = vmul.f32 %v3272, %v192
  %v3305 = vmul.f32 %v3273, %v192
  %v3306 = vmul.f32 %v3274, %v192
  %v3307 = vmul.f32 %v3275, %v192
  %v3308 = vmul.f32 %v3276, %v192
  %v3309 = vmul.f32 %v3277, %v192
  %v3310 = vmul.f32 %v3278, %v192
  %v3311 = vmul.f32 %v3279, %v192
  %v3312 = vmul.f32 %v3280, %v3280
  %v3313 = vmul.f32 %v3281, %v3281
  %v3314 = vmul.f32 %v3282, %v3282
  %v3315 = vmul.f32 %v3283, %v3283
  %v3316 = vmul.f32 %v3284, %v3284
  %v3317 = vmul.f32 %v3285, %v3285
  %v3318 = vmul.f32 %v3286, %v3286
  %v3319 = vmul.f32 %v3287, %v3287
  %v3320 = vmul.f32 %v3288, %v3288
  %v3321 = vmul.f32 %v3289, %v3289
  %v3322 = vmul.f32 %v3290, %v3290
  %v3323 = vmul.f32 %v3291, %v3291
  %v3324 = vmul.f32 %v3292, %v3292
  %v3325 = vmul.f32 %v3293, %v3293
  %v3326 = vmul.f32 %v3294, %v3294
  %v3327 = vmul.f32 %v3295, %v3295
  %v3328 = vmul.f32 %v3296, %v3296
  %v3329 = vmul.f32 %v3297, %v3297
  %v3330 = vmul.f32 %v3298, %v3298
  %v3331 = vmul.f32 %v3299, %v3299
  %v3332 = vmul.f32 %v3300, %v3300
  %v3333 = vmul.f32 %v3301, %v3301
  %v3334 = vmul.f32 %v3302, %v3302
  %v3335 = vmul.f32 %v3303, %v3303
  %v3336 = vmul.f32 %v3304, %v3304
  %v3337 = vmul.f32 %v3305, %v3305
  %v3338 = vmul.f32 %v3306, %v3306
  %v3339 = vmul.f32 %v3307, %v3307
  %v3340 = vmul.f32 %v3308, %v3308
  %v3341 = vmul.f32 %v3309, %v3309
  %v3342 = vmul.f32 %v3310, %v3310
  %v3343 = vmul.f32 %v3311, %v3311
  %v3344 = vadd.f32 %v3312, 1.0
  %v3345 = vadd.f32 %v3313, 1.0
  %v3346 = vadd.f32 %v3314, 1.0
  %v3347 = vadd.f32 %v3315, 1.0
  %v3348 = vadd.f32 %v3316, 1.0
  %v3349 = vadd.f32 %v3317, 1.0
  %v3350 = vadd.f32 %v3318, 1.0
  %v3351 = vadd.f32 %v3319, 1.0
  %v3352 = vadd.f32 %v3320, 1.0
  %v3353 = vadd.f32 %v3321, 1.0
  %v3354 = vadd.f32 %v3322, 1.0
  %v3355 = vadd.f32 %v3323, 1.0
  %v3356 = vadd.f32 %v3324, 1.0
  %v3357 = vadd.f32 %v3325, 1.0
  %v3358 = vadd.f32 %v3326, 1.0
  %v3359 = vadd.f32 %v3327, 1.0
  %v3360 = vadd.f32 %v3328, 1.0
  %v3361 = vadd.f32 %v3329, 1.0
  %v3362 = vadd.f32 %v3330, 1.0
  %v3363 = vadd.f32 %v3331, 1.0
  %v3364 = vadd.f32 %v3332, 1.0
  %v3365 = vadd.f32 %v3333, 1.0
  %v3366 = vadd.f32 %v3334, 1.0
  %v3367 = vadd.f32 %v3335, 1.0
  %v3368 = vadd.f32 %v3336, 1.0
  %v3369 = vadd.f32 %v3337, 1.0
  %v3370 = vadd.f32 %v3338, 1.0
  %v3371 = vadd.f32 %v3339, 1.0
  %v3372 = vadd.f32 %v3340, 1.0
  %v3373 = vadd.f32 %v3341, 1.0
  %v3374 = vadd.f32 %v3342, 1.0
  %v3375 = vadd.f32 %v3343, 1.0
  %v3376 = vrsqrt.pop %v3344
  %v3377 = vrsqrt.pop %v3345
  %v3378 = vrsqrt.pop %v3346
  %v3379 = vrsqrt.pop %v3347
  %v3380 = vrsqrt.pop %v3348
  %v3381 = vrsqrt.pop %v3349
  %v3382 = vrsqrt.pop %v3350
  %v3383 = vrsqrt.pop %v3351
  %v3384 = vrsqrt.pop %v3352
  %v3385 = vrsqrt.pop %v3353
  %v3386 = vrsqrt.pop %v3354
  %v3387 = vrsqrt.pop %v3355
  %v3388 = vrsqrt.pop %v3356
  %v3389 = vrsqrt.pop %v3357
  %v3390 = vrsqrt.pop %v3358
  %v3391 = vrsqrt.pop %v3359
  %v3392 = vrsqrt.pop %v3360
  %v3393 = vrsqrt.pop %v3361
  %v3394 = vrsqrt.pop %v3362
  %v3395 = vrsqrt.pop %v3363
  %v3396 = vrsqrt.pop %v3364
  %v3397 = vrsqrt.pop %v3365
  %v3398 = vrsqrt.pop %v3366
  %v3399 = vrsqrt.pop %v3367
  %v3400 = vrsqrt.pop %v3368
  %v3401 = vrsqrt.pop %v3369
  %v3402 = vrsqrt.pop %v3370
  %v3403 = vrsqrt.pop %v3371
  %v3404 = vrsqrt.pop %v3372
  %v3405 = vrsqrt.pop %v3373
  %v3406 = vrsqrt.pop %v3374
  %v3407 = vrsqrt.pop %v3375
  %v3408 = vmul.f32 %v3248, %v3376
  %v3409 = vmul.f32 %v3249, %v3377
  %v3410 = vmul.f32 %v3250, %v3378
  %v3411 = vmul.f32 %v3251, %v3379
  %v3412 = vmul.f32 %v3252, %v3380
  %v3413 = vmul.f32 %v3253, %v3381
  %v3414 = vmul.f32 %v3254, %v3382
  %v3415 = vmul.f32 %v3255, %v3383
  %v3416 = vmul.f32 %v3256, %v3384
  %v3417 = vmul.f32 %v3257, %v3385
  %v3418 = vmul.f32 %v3258, %v3386
  %v3419 = vmul.f32 %v3259, %v3387
  %v3420 = vmul.f32 %v3260, %v3388
  %v3421 = vmul.f32 %v3261, %v3389
  %v3422 = vmul.f32 %v3262, %v3390
  %v3423 = vmul.f32 %v3263, %v3391
  %v3424 = vmul.f32 %v3264, %v3392
  %v3425 = vmul.f32 %v3265, %v3393
  %v3426 = vmul.f32 %v3266, %v3394
  %v3427 = vmul.f32 %v3267, %v3395
  %v3428 = vmul.f32 %v3268, %v3396
  %v3429 = vmul.f32 %v3269, %v3397
  %v3430 = vmul.f32 %v3270, %v3398
  %v3431 = vmul.f32 %v3271, %v3399
  %v3432 = vmul.f32 %v3272, %v3400
  %v3433 = vmul.f32 %v3273, %v3401
  %v3434 = vmul.f32 %v3274, %v3402
  %v3435 = vmul.f32 %v3275, %v3403
  %v3436 = vmul.f32 %v3276, %v3404
  %v3437 = vmul.f32 %v3277, %v3405
  %v3438 = vmul.f32 %v3278, %v3406
  %v3439 = vmul.f32 %v3279, %v3407
  %v3440 = vadd.f32 %v3408, %v3409
  %v3441 = vadd.f32 %v3440, %v3410
  %v3442 = vadd.f32 %v3441, %v3411
  %v3443 = vadd.f32 %v3442, %v3412
  %v3444 = vadd.f32 %v3443, %v3413
  %v3445 = vadd.f32 %v3444, %v3414
  %v3446 = vadd.f32 %v3445, %v3415
  %v3447 = vadd.f32 %v3446, %v3416
  %v3448 = vadd.f32 %v3447, %v3417
  %v3449 = vadd.f32 %v3448, %v3418
  %v3450 = vadd.f32 %v3449, %v3419
  %v3451 = vadd.f32 %v3450, %v3420
  %v3452 = vadd.f32 %v3451, %v3421
  %v3453 = vadd.f32 %v3452, %v3422
  %v3454 = vadd.f32 %v3453, %v3423
  %v3455 = vadd.f32 %v3454, %v3424
  %v3456 = vadd.f32 %v3455, %v3425
  %v3457 = vadd.f32 %v3456, %v3426
  %v3458 = vadd.f32 %v3457, %v3427
  %v3459 = vadd.f32 %v3458, %v3428
  %v3460 = vadd.f32 %v3459, %v3429
  %v3461 = vadd.f32 %v3460, %v3430
  %v3462 = vadd.f32 %v3461, %v3431
  %v3463 = vadd.f32 %v3462, %v3432
  %v3464 = vadd.f32 %v3463, %v3433
  %v3465 = vadd.f32 %v3464, %v3434
  %v3466 = vadd.f32 %v3465, %v3435
  %v3467 = vadd.f32 %v3466, %v3436
  %v3468 = vadd.f32 %v3467, %v3437
  %v3469 = vadd.f32 %v3468, %v3438
  %v3470 = vadd.f32 %v3469, %v3439
  %v3471 = vrot.slane %v3470, 4
  %v3472 = vadd.f32 %v3470, %v3471
  %v3473 = vrot.slane %v3472, 2
  %v3474 = vadd.f32 %v3472, %v3473
  %v3475 = vrot.slane %v3474, 1
  %v3476 = vadd.f32 %v3474, %v3475
  %v3477 = vmul.f32 %v3376, %v3376
  %v3478 = vmul.f32 %v3377, %v3377
  %v3479 = vmul.f32 %v3378, %v3378
  %v3480 = vmul.f32 %v3379, %v3379
  %v3481 = vmul.f32 %v3380, %v3380
  %v3482 = vmul.f32 %v3381, %v3381
  %v3483 = vmul.f32 %v3382, %v3382
  %v3484 = vmul.f32 %v3383, %v3383
  %v3485 = vmul.f32 %v3384, %v3384
  %v3486 = vmul.f32 %v3385, %v3385
  %v3487 = vmul.f32 %v3386, %v3386
  %v3488 = vmul.f32 %v3387, %v3387
  %v3489 = vmul.f32 %v3388, %v3388
  %v3490 = vmul.f32 %v3389, %v3389
  %v3491 = vmul.f32 %v3390, %v3390
  %v3492 = vmul.f32 %v3391, %v3391
  %v3493 = vmul.f32 %v3392, %v3392
  %v3494 = vmul.f32 %v3393, %v3393
  %v3495 = vmul.f32 %v3394, %v3394
  %v3496 = vmul.f32 %v3395, %v3395
  %v3497 = vmul.f32 %v3396, %v3396
  %v3498 = vmul.f32 %v3397, %v3397
  %v3499 = vmul.f32 %v3398, %v3398
  %v3500 = vmul.f32 %v3399, %v3399
  %v3501 = vmul.f32 %v3400, %v3400
  %v3502 = vmul.f32 %v3401, %v3401
  %v3503 = vmul.f32 %v3402, %v3402
  %v3504 = vmul.f32 %v3403, %v3403
  %v3505 = vmul.f32 %v3404, %v3404
  %v3506 = vmul.f32 %v3405, %v3405
  %v3507 = vmul.f32 %v3406, %v3406
  %v3508 = vmul.f32 %v3407, %v3407
  %v3509 = vmul.f32 %v3477, %v3376
  %v3510 = vmul.f32 %v3478, %v3377
  %v3511 = vmul.f32 %v3479, %v3378
  %v3512 = vmul.f32 %v3480, %v3379
  %v3513 = vmul.f32 %v3481, %v3380
  %v3514 = vmul.f32 %v3482, %v3381
  %v3515 = vmul.f32 %v3483, %v3382
  %v3516 = vmul.f32 %v3484, %v3383
  %v3517 = vmul.f32 %v3485, %v3384
  %v3518 = vmul.f32 %v3486, %v3385
  %v3519 = vmul.f32 %v3487, %v3386
  %v3520 = vmul.f32 %v3488, %v3387
  %v3521 = vmul.f32 %v3489, %v3388
  %v3522 = vmul.f32 %v3490, %v3389
  %v3523 = vmul.f32 %v3491, %v3390
  %v3524 = vmul.f32 %v3492, %v3391
  %v3525 = vmul.f32 %v3493, %v3392
  %v3526 = vmul.f32 %v3494, %v3393
  %v3527 = vmul.f32 %v3495, %v3394
  %v3528 = vmul.f32 %v3496, %v3395
  %v3529 = vmul.f32 %v3497, %v3396
  %v3530 = vmul.f32 %v3498, %v3397
  %v3531 = vmul.f32 %v3499, %v3398
  %v3532 = vmul.f32 %v3500, %v3399
  %v3533 = vmul.f32 %v3501, %v3400
  %v3534 = vmul.f32 %v3502, %v3401
  %v3535 = vmul.f32 %v3503, %v3402
  %v3536 = vmul.f32 %v3504, %v3403
  %v3537 = vmul.f32 %v3505, %v3404
  %v3538 = vmul.f32 %v3506, %v3405
  %v3539 = vmul.f32 %v3507, %v3406
  %v3540 = vmul.f32 %v3508, %v3407
  %v3541 = vadd.f32 %v3509, %v3510
  %v3542 = vadd.f32 %v3541, %v3511
  %v3543 = vadd.f32 %v3542, %v3512
  %v3544 = vadd.f32 %v3543, %v3513
  %v3545 = vadd.f32 %v3544, %v3514
  %v3546 = vadd.f32 %v3545, %v3515
  %v3547 = vadd.f32 %v3546, %v3516
  %v3548 = vadd.f32 %v3547, %v3517
  %v3549 = vadd.f32 %v3548, %v3518
  %v3550 = vadd.f32 %v3549, %v3519
  %v3551 = vadd.f32 %v3550, %v3520
  %v3552 = vadd.f32 %v3551, %v3521
  %v3553 = vadd.f32 %v3552, %v3522
  %v3554 = vadd.f32 %v3553, %v3523
  %v3555 = vadd.f32 %v3554, %v3524
  %v3556 = vadd.f32 %v3555, %v3525
  %v3557 = vadd.f32 %v3556, %v3526
  %v3558 = vadd.f32 %v3557, %v3527
  %v3559 = vadd.f32 %v3558, %v3528
  %v3560 = vadd.f32 %v3559, %v3529
  %v3561 = vadd.f32 %v3560, %v3530
  %v3562 = vadd.f32 %v3561, %v3531
  %v3563 = vadd.f32 %v3562, %v3532
  %v3564 = vadd.f32 %v3563, %v3533
  %v3565 = vadd.f32 %v3564, %v3534
  %v3566 = vadd.f32 %v3565, %v3535
  %v3567 = vadd.f32 %v3566, %v3536
  %v3568 = vadd.f32 %v3567, %v3537
  %v3569 = vadd.f32 %v3568, %v3538
  %v3570 = vadd.f32 %v3569, %v3539
  %v3571 = vadd.f32 %v3570, %v3540
  %v3572 = vrot.slane %v3571, 4
  %v3573 = vadd.f32 %v3571, %v3572
  %v3574 = vrot.slane %v3573, 2
  %v3575 = vadd.f32 %v3573, %v3574
  %v3576 = vrot.slane %v3575, 1
  %v3577 = vadd.f32 %v3575, %v3576
  %vm3578 = vcmp.lt.f32.partialorder %v3476, 0.0
  %v3579 = vsel %vm3578, %v3247, %v3236
  %vm3580 = vcmp.gt.f32.partialorder %v3476, 0.0
  %v3581 = vsel %vm3580, %v3247, %v3238
  %v3582 = vrcp.pop %v3577
  %v3583 = vmul.f32 %v3476, %v3582
  %v3584 = vsub.f32 %v3247, %v3583
  %vm3585 = vcmp.ge.f32.partialorder %v3584, %v3579
  %vm3586 = vcmp.le.f32.partialorder %v3584, %v3581
  %vm3587 = vmand %vm3585, %vm3586
  %v3588 = vadd.f32 %v3579, %v3581
  %v3589 = vmul.f32 %v3588, 0.5
  %v3590 = vsel %vm3587, %v3584, %v3589
  %v3591 = vsub.f32 %v3590, %v16
  %v3592 = vsub.f32 %v3590, %v17
  %v3593 = vsub.f32 %v3590, %v18
  %v3594 = vsub.f32 %v3590, %v19
  %v3595 = vsub.f32 %v3590, %v20
  %v3596 = vsub.f32 %v3590, %v21
  %v3597 = vsub.f32 %v3590, %v22
  %v3598 = vsub.f32 %v3590, %v23
  %v3599 = vsub.f32 %v3590, %v24
  %v3600 = vsub.f32 %v3590, %v25
  %v3601 = vsub.f32 %v3590, %v26
  %v3602 = vsub.f32 %v3590, %v27
  %v3603 = vsub.f32 %v3590, %v28
  %v3604 = vsub.f32 %v3590, %v29
  %v3605 = vsub.f32 %v3590, %v30
  %v3606 = vsub.f32 %v3590, %v31
  %v3607 = vsub.f32 %v3590, %v32
  %v3608 = vsub.f32 %v3590, %v33
  %v3609 = vsub.f32 %v3590, %v34
  %v3610 = vsub.f32 %v3590, %v35
  %v3611 = vsub.f32 %v3590, %v36
  %v3612 = vsub.f32 %v3590, %v37
  %v3613 = vsub.f32 %v3590, %v38
  %v3614 = vsub.f32 %v3590, %v39
  %v3615 = vsub.f32 %v3590, %v40
  %v3616 = vsub.f32 %v3590, %v41
  %v3617 = vsub.f32 %v3590, %v42
  %v3618 = vsub.f32 %v3590, %v43
  %v3619 = vsub.f32 %v3590, %v44
  %v3620 = vsub.f32 %v3590, %v45
  %v3621 = vsub.f32 %v3590, %v46
  %v3622 = vsub.f32 %v3590, %v47
  %v3623 = vmul.f32 %v3591, %v192
  %v3624 = vmul.f32 %v3592, %v192
  %v3625 = vmul.f32 %v3593, %v192
  %v3626 = vmul.f32 %v3594, %v192
  %v3627 = vmul.f32 %v3595, %v192
  %v3628 = vmul.f32 %v3596, %v192
  %v3629 = vmul.f32 %v3597, %v192
  %v3630 = vmul.f32 %v3598, %v192
  %v3631 = vmul.f32 %v3599, %v192
  %v3632 = vmul.f32 %v3600, %v192
  %v3633 = vmul.f32 %v3601, %v192
  %v3634 = vmul.f32 %v3602, %v192
  %v3635 = vmul.f32 %v3603, %v192
  %v3636 = vmul.f32 %v3604, %v192
  %v3637 = vmul.f32 %v3605, %v192
  %v3638 = vmul.f32 %v3606, %v192
  %v3639 = vmul.f32 %v3607, %v192
  %v3640 = vmul.f32 %v3608, %v192
  %v3641 = vmul.f32 %v3609, %v192
  %v3642 = vmul.f32 %v3610, %v192
  %v3643 = vmul.f32 %v3611, %v192
  %v3644 = vmul.f32 %v3612, %v192
  %v3645 = vmul.f32 %v3613, %v192
  %v3646 = vmul.f32 %v3614, %v192
  %v3647 = vmul.f32 %v3615, %v192
  %v3648 = vmul.f32 %v3616, %v192
  %v3649 = vmul.f32 %v3617, %v192
  %v3650 = vmul.f32 %v3618, %v192
  %v3651 = vmul.f32 %v3619, %v192
  %v3652 = vmul.f32 %v3620, %v192
  %v3653 = vmul.f32 %v3621, %v192
  %v3654 = vmul.f32 %v3622, %v192
  %v3655 = vmul.f32 %v3623, %v3623
  %v3656 = vmul.f32 %v3624, %v3624
  %v3657 = vmul.f32 %v3625, %v3625
  %v3658 = vmul.f32 %v3626, %v3626
  %v3659 = vmul.f32 %v3627, %v3627
  %v3660 = vmul.f32 %v3628, %v3628
  %v3661 = vmul.f32 %v3629, %v3629
  %v3662 = vmul.f32 %v3630, %v3630
  %v3663 = vmul.f32 %v3631, %v3631
  %v3664 = vmul.f32 %v3632, %v3632
  %v3665 = vmul.f32 %v3633, %v3633
  %v3666 = vmul.f32 %v3634, %v3634
  %v3667 = vmul.f32 %v3635, %v3635
  %v3668 = vmul.f32 %v3636, %v3636
  %v3669 = vmul.f32 %v3637, %v3637
  %v3670 = vmul.f32 %v3638, %v3638
  %v3671 = vmul.f32 %v3639, %v3639
  %v3672 = vmul.f32 %v3640, %v3640
  %v3673 = vmul.f32 %v3641, %v3641
  %v3674 = vmul.f32 %v3642, %v3642
  %v3675 = vmul.f32 %v3643, %v3643
  %v3676 = vmul.f32 %v3644, %v3644
  %v3677 = vmul.f32 %v3645, %v3645
  %v3678 = vmul.f32 %v3646, %v3646
  %v3679 = vmul.f32 %v3647, %v3647
  %v3680 = vmul.f32 %v3648, %v3648
  %v3681 = vmul.f32 %v3649, %v3649
  %v3682 = vmul.f32 %v3650, %v3650
  %v3683 = vmul.f32 %v3651, %v3651
  %v3684 = vmul.f32 %v3652, %v3652
  %v3685 = vmul.f32 %v3653, %v3653
  %v3686 = vmul.f32 %v3654, %v3654
  %v3687 = vadd.f32 %v3655, 1.0
  %v3688 = vadd.f32 %v3656, 1.0
  %v3689 = vadd.f32 %v3657, 1.0
  %v3690 = vadd.f32 %v3658, 1.0
  %v3691 = vadd.f32 %v3659, 1.0
  %v3692 = vadd.f32 %v3660, 1.0
  %v3693 = vadd.f32 %v3661, 1.0
  %v3694 = vadd.f32 %v3662, 1.0
  %v3695 = vadd.f32 %v3663, 1.0
  %v3696 = vadd.f32 %v3664, 1.0
  %v3697 = vadd.f32 %v3665, 1.0
  %v3698 = vadd.f32 %v3666, 1.0
  %v3699 = vadd.f32 %v3667, 1.0
  %v3700 = vadd.f32 %v3668, 1.0
  %v3701 = vadd.f32 %v3669, 1.0
  %v3702 = vadd.f32 %v3670, 1.0
  %v3703 = vadd.f32 %v3671, 1.0
  %v3704 = vadd.f32 %v3672, 1.0
  %v3705 = vadd.f32 %v3673, 1.0
  %v3706 = vadd.f32 %v3674, 1.0
  %v3707 = vadd.f32 %v3675, 1.0
  %v3708 = vadd.f32 %v3676, 1.0
  %v3709 = vadd.f32 %v3677, 1.0
  %v3710 = vadd.f32 %v3678, 1.0
  %v3711 = vadd.f32 %v3679, 1.0
  %v3712 = vadd.f32 %v3680, 1.0
  %v3713 = vadd.f32 %v3681, 1.0
  %v3714 = vadd.f32 %v3682, 1.0
  %v3715 = vadd.f32 %v3683, 1.0
  %v3716 = vadd.f32 %v3684, 1.0
  %v3717 = vadd.f32 %v3685, 1.0
  %v3718 = vadd.f32 %v3686, 1.0
  %v3719 = vrsqrt.pop %v3687
  %v3720 = vrsqrt.pop %v3688
  %v3721 = vrsqrt.pop %v3689
  %v3722 = vrsqrt.pop %v3690
  %v3723 = vrsqrt.pop %v3691
  %v3724 = vrsqrt.pop %v3692
  %v3725 = vrsqrt.pop %v3693
  %v3726 = vrsqrt.pop %v3694
  %v3727 = vrsqrt.pop %v3695
  %v3728 = vrsqrt.pop %v3696
  %v3729 = vrsqrt.pop %v3697
  %v3730 = vrsqrt.pop %v3698
  %v3731 = vrsqrt.pop %v3699
  %v3732 = vrsqrt.pop %v3700
  %v3733 = vrsqrt.pop %v3701
  %v3734 = vrsqrt.pop %v3702
  %v3735 = vrsqrt.pop %v3703
  %v3736 = vrsqrt.pop %v3704
  %v3737 = vrsqrt.pop %v3705
  %v3738 = vrsqrt.pop %v3706
  %v3739 = vrsqrt.pop %v3707
  %v3740 = vrsqrt.pop %v3708
  %v3741 = vrsqrt.pop %v3709
  %v3742 = vrsqrt.pop %v3710
  %v3743 = vrsqrt.pop %v3711
  %v3744 = vrsqrt.pop %v3712
  %v3745 = vrsqrt.pop %v3713
  %v3746 = vrsqrt.pop %v3714
  %v3747 = vrsqrt.pop %v3715
  %v3748 = vrsqrt.pop %v3716
  %v3749 = vrsqrt.pop %v3717
  %v3750 = vrsqrt.pop %v3718
  %v3751 = vmul.f32 %v3591, %v3719
  %v3752 = vmul.f32 %v3592, %v3720
  %v3753 = vmul.f32 %v3593, %v3721
  %v3754 = vmul.f32 %v3594, %v3722
  %v3755 = vmul.f32 %v3595, %v3723
  %v3756 = vmul.f32 %v3596, %v3724
  %v3757 = vmul.f32 %v3597, %v3725
  %v3758 = vmul.f32 %v3598, %v3726
  %v3759 = vmul.f32 %v3599, %v3727
  %v3760 = vmul.f32 %v3600, %v3728
  %v3761 = vmul.f32 %v3601, %v3729
  %v3762 = vmul.f32 %v3602, %v3730
  %v3763 = vmul.f32 %v3603, %v3731
  %v3764 = vmul.f32 %v3604, %v3732
  %v3765 = vmul.f32 %v3605, %v3733
  %v3766 = vmul.f32 %v3606, %v3734
  %v3767 = vmul.f32 %v3607, %v3735
  %v3768 = vmul.f32 %v3608, %v3736
  %v3769 = vmul.f32 %v3609, %v3737
  %v3770 = vmul.f32 %v3610, %v3738
  %v3771 = vmul.f32 %v3611, %v3739
  %v3772 = vmul.f32 %v3612, %v3740
  %v3773 = vmul.f32 %v3613, %v3741
  %v3774 = vmul.f32 %v3614, %v3742
  %v3775 = vmul.f32 %v3615, %v3743
  %v3776 = vmul.f32 %v3616, %v3744
  %v3777 = vmul.f32 %v3617, %v3745
  %v3778 = vmul.f32 %v3618, %v3746
  %v3779 = vmul.f32 %v3619, %v3747
  %v3780 = vmul.f32 %v3620, %v3748
  %v3781 = vmul.f32 %v3621, %v3749
  %v3782 = vmul.f32 %v3622, %v3750
  %v3783 = vadd.f32 %v3751, %v3752
  %v3784 = vadd.f32 %v3783, %v3753
  %v3785 = vadd.f32 %v3784, %v3754
  %v3786 = vadd.f32 %v3785, %v3755
  %v3787 = vadd.f32 %v3786, %v3756
  %v3788 = vadd.f32 %v3787, %v3757
  %v3789 = vadd.f32 %v3788, %v3758
  %v3790 = vadd.f32 %v3789, %v3759
  %v3791 = vadd.f32 %v3790, %v3760
  %v3792 = vadd.f32 %v3791, %v3761
  %v3793 = vadd.f32 %v3792, %v3762
  %v3794 = vadd.f32 %v3793, %v3763
  %v3795 = vadd.f32 %v3794, %v3764
  %v3796 = vadd.f32 %v3795, %v3765
  %v3797 = vadd.f32 %v3796, %v3766
  %v3798 = vadd.f32 %v3797, %v3767
  %v3799 = vadd.f32 %v3798, %v3768
  %v3800 = vadd.f32 %v3799, %v3769
  %v3801 = vadd.f32 %v3800, %v3770
  %v3802 = vadd.f32 %v3801, %v3771
  %v3803 = vadd.f32 %v3802, %v3772
  %v3804 = vadd.f32 %v3803, %v3773
  %v3805 = vadd.f32 %v3804, %v3774
  %v3806 = vadd.f32 %v3805, %v3775
  %v3807 = vadd.f32 %v3806, %v3776
  %v3808 = vadd.f32 %v3807, %v3777
  %v3809 = vadd.f32 %v3808, %v3778
  %v3810 = vadd.f32 %v3809, %v3779
  %v3811 = vadd.f32 %v3810, %v3780
  %v3812 = vadd.f32 %v3811, %v3781
  %v3813 = vadd.f32 %v3812, %v3782
  %v3814 = vrot.slane %v3813, 4
  %v3815 = vadd.f32 %v3813, %v3814
  %v3816 = vrot.slane %v3815, 2
  %v3817 = vadd.f32 %v3815, %v3816
  %v3818 = vrot.slane %v3817, 1
  %v3819 = vadd.f32 %v3817, %v3818
  %v3820 = vmul.f32 %v3719, %v3719
  %v3821 = vmul.f32 %v3720, %v3720
  %v3822 = vmul.f32 %v3721, %v3721
  %v3823 = vmul.f32 %v3722, %v3722
  %v3824 = vmul.f32 %v3723, %v3723
  %v3825 = vmul.f32 %v3724, %v3724
  %v3826 = vmul.f32 %v3725, %v3725
  %v3827 = vmul.f32 %v3726, %v3726
  %v3828 = vmul.f32 %v3727, %v3727
  %v3829 = vmul.f32 %v3728, %v3728
  %v3830 = vmul.f32 %v3729, %v3729
  %v3831 = vmul.f32 %v3730, %v3730
  %v3832 = vmul.f32 %v3731, %v3731
  %v3833 = vmul.f32 %v3732, %v3732
  %v3834 = vmul.f32 %v3733, %v3733
  %v3835 = vmul.f32 %v3734, %v3734
  %v3836 = vmul.f32 %v3735, %v3735
  %v3837 = vmul.f32 %v3736, %v3736
  %v3838 = vmul.f32 %v3737, %v3737
  %v3839 = vmul.f32 %v3738, %v3738
  %v3840 = vmul.f32 %v3739, %v3739
  %v3841 = vmul.f32 %v3740, %v3740
  %v3842 = vmul.f32 %v3741, %v3741
  %v3843 = vmul.f32 %v3742, %v3742
  %v3844 = vmul.f32 %v3743, %v3743
  %v3845 = vmul.f32 %v3744, %v3744
  %v3846 = vmul.f32 %v3745, %v3745
  %v3847 = vmul.f32 %v3746, %v3746
  %v3848 = vmul.f32 %v3747, %v3747
  %v3849 = vmul.f32 %v3748, %v3748
  %v3850 = vmul.f32 %v3749, %v3749
  %v3851 = vmul.f32 %v3750, %v3750
  %v3852 = vmul.f32 %v3820, %v3719
  %v3853 = vmul.f32 %v3821, %v3720
  %v3854 = vmul.f32 %v3822, %v3721
  %v3855 = vmul.f32 %v3823, %v3722
  %v3856 = vmul.f32 %v3824, %v3723
  %v3857 = vmul.f32 %v3825, %v3724
  %v3858 = vmul.f32 %v3826, %v3725
  %v3859 = vmul.f32 %v3827, %v3726
  %v3860 = vmul.f32 %v3828, %v3727
  %v3861 = vmul.f32 %v3829, %v3728
  %v3862 = vmul.f32 %v3830, %v3729
  %v3863 = vmul.f32 %v3831, %v3730
  %v3864 = vmul.f32 %v3832, %v3731
  %v3865 = vmul.f32 %v3833, %v3732
  %v3866 = vmul.f32 %v3834, %v3733
  %v3867 = vmul.f32 %v3835, %v3734
  %v3868 = vmul.f32 %v3836, %v3735
  %v3869 = vmul.f32 %v3837, %v3736
  %v3870 = vmul.f32 %v3838, %v3737
  %v3871 = vmul.f32 %v3839, %v3738
  %v3872 = vmul.f32 %v3840, %v3739
  %v3873 = vmul.f32 %v3841, %v3740
  %v3874 = vmul.f32 %v3842, %v3741
  %v3875 = vmul.f32 %v3843, %v3742
  %v3876 = vmul.f32 %v3844, %v3743
  %v3877 = vmul.f32 %v3845, %v3744
  %v3878 = vmul.f32 %v3846, %v3745
  %v3879 = vmul.f32 %v3847, %v3746
  %v3880 = vmul.f32 %v3848, %v3747
  %v3881 = vmul.f32 %v3849, %v3748
  %v3882 = vmul.f32 %v3850, %v3749
  %v3883 = vmul.f32 %v3851, %v3750
  %v3884 = vadd.f32 %v3852, %v3853
  %v3885 = vadd.f32 %v3884, %v3854
  %v3886 = vadd.f32 %v3885, %v3855
  %v3887 = vadd.f32 %v3886, %v3856
  %v3888 = vadd.f32 %v3887, %v3857
  %v3889 = vadd.f32 %v3888, %v3858
  %v3890 = vadd.f32 %v3889, %v3859
  %v3891 = vadd.f32 %v3890, %v3860
  %v3892 = vadd.f32 %v3891, %v3861
  %v3893 = vadd.f32 %v3892, %v3862
  %v3894 = vadd.f32 %v3893, %v3863
  %v3895 = vadd.f32 %v3894, %v3864
  %v3896 = vadd.f32 %v3895, %v3865
  %v3897 = vadd.f32 %v3896, %v3866
  %v3898 = vadd.f32 %v3897, %v3867
  %v3899 = vadd.f32 %v3898, %v3868
  %v3900 = vadd.f32 %v3899, %v3869
  %v3901 = vadd.f32 %v3900, %v3870
  %v3902 = vadd.f32 %v3901, %v3871
  %v3903 = vadd.f32 %v3902, %v3872
  %v3904 = vadd.f32 %v3903, %v3873
  %v3905 = vadd.f32 %v3904, %v3874
  %v3906 = vadd.f32 %v3905, %v3875
  %v3907 = vadd.f32 %v3906, %v3876
  %v3908 = vadd.f32 %v3907, %v3877
  %v3909 = vadd.f32 %v3908, %v3878
  %v3910 = vadd.f32 %v3909, %v3879
  %v3911 = vadd.f32 %v3910, %v3880
  %v3912 = vadd.f32 %v3911, %v3881
  %v3913 = vadd.f32 %v3912, %v3882
  %v3914 = vadd.f32 %v3913, %v3883
  %v3915 = vrot.slane %v3914, 4
  %v3916 = vadd.f32 %v3914, %v3915
  %v3917 = vrot.slane %v3916, 2
  %v3918 = vadd.f32 %v3916, %v3917
  %v3919 = vrot.slane %v3918, 1
  %v3920 = vadd.f32 %v3918, %v3919
  %vm3921 = vcmp.lt.f32.partialorder %v3819, 0.0
  %v3922 = vsel %vm3921, %v3590, %v3579
  %vm3923 = vcmp.gt.f32.partialorder %v3819, 0.0
  %v3924 = vsel %vm3923, %v3590, %v3581
  %v3925 = vrcp.pop %v3920
  %v3926 = vmul.f32 %v3819, %v3925
  %v3927 = vsub.f32 %v3590, %v3926
  %vm3928 = vcmp.ge.f32.partialorder %v3927, %v3922
  %vm3929 = vcmp.le.f32.partialorder %v3927, %v3924
  %vm3930 = vmand %vm3928, %vm3929
  %v3931 = vadd.f32 %v3922, %v3924
  %v3932 = vmul.f32 %v3931, 0.5
  %v3933 = vsel %vm3930, %v3927, %v3932
  %v3934 = vsub.f32 %v3933, %v16
  %v3935 = vsub.f32 %v3933, %v17
  %v3936 = vsub.f32 %v3933, %v18
  %v3937 = vsub.f32 %v3933, %v19
  %v3938 = vsub.f32 %v3933, %v20
  %v3939 = vsub.f32 %v3933, %v21
  %v3940 = vsub.f32 %v3933, %v22
  %v3941 = vsub.f32 %v3933, %v23
  %v3942 = vsub.f32 %v3933, %v24
  %v3943 = vsub.f32 %v3933, %v25
  %v3944 = vsub.f32 %v3933, %v26
  %v3945 = vsub.f32 %v3933, %v27
  %v3946 = vsub.f32 %v3933, %v28
  %v3947 = vsub.f32 %v3933, %v29
  %v3948 = vsub.f32 %v3933, %v30
  %v3949 = vsub.f32 %v3933, %v31
  %v3950 = vsub.f32 %v3933, %v32
  %v3951 = vsub.f32 %v3933, %v33
  %v3952 = vsub.f32 %v3933, %v34
  %v3953 = vsub.f32 %v3933, %v35
  %v3954 = vsub.f32 %v3933, %v36
  %v3955 = vsub.f32 %v3933, %v37
  %v3956 = vsub.f32 %v3933, %v38
  %v3957 = vsub.f32 %v3933, %v39
  %v3958 = vsub.f32 %v3933, %v40
  %v3959 = vsub.f32 %v3933, %v41
  %v3960 = vsub.f32 %v3933, %v42
  %v3961 = vsub.f32 %v3933, %v43
  %v3962 = vsub.f32 %v3933, %v44
  %v3963 = vsub.f32 %v3933, %v45
  %v3964 = vsub.f32 %v3933, %v46
  %v3965 = vsub.f32 %v3933, %v47
  %v3966 = vmul.f32 %v3934, %v192
  %v3967 = vmul.f32 %v3935, %v192
  %v3968 = vmul.f32 %v3936, %v192
  %v3969 = vmul.f32 %v3937, %v192
  %v3970 = vmul.f32 %v3938, %v192
  %v3971 = vmul.f32 %v3939, %v192
  %v3972 = vmul.f32 %v3940, %v192
  %v3973 = vmul.f32 %v3941, %v192
  %v3974 = vmul.f32 %v3942, %v192
  %v3975 = vmul.f32 %v3943, %v192
  %v3976 = vmul.f32 %v3944, %v192
  %v3977 = vmul.f32 %v3945, %v192
  %v3978 = vmul.f32 %v3946, %v192
  %v3979 = vmul.f32 %v3947, %v192
  %v3980 = vmul.f32 %v3948, %v192
  %v3981 = vmul.f32 %v3949, %v192
  %v3982 = vmul.f32 %v3950, %v192
  %v3983 = vmul.f32 %v3951, %v192
  %v3984 = vmul.f32 %v3952, %v192
  %v3985 = vmul.f32 %v3953, %v192
  %v3986 = vmul.f32 %v3954, %v192
  %v3987 = vmul.f32 %v3955, %v192
  %v3988 = vmul.f32 %v3956, %v192
  %v3989 = vmul.f32 %v3957, %v192
  %v3990 = vmul.f32 %v3958, %v192
  %v3991 = vmul.f32 %v3959, %v192
  %v3992 = vmul.f32 %v3960, %v192
  %v3993 = vmul.f32 %v3961, %v192
  %v3994 = vmul.f32 %v3962, %v192
  %v3995 = vmul.f32 %v3963, %v192
  %v3996 = vmul.f32 %v3964, %v192
  %v3997 = vmul.f32 %v3965, %v192
  %v3998 = vmul.f32 %v3966, %v3966
  %v3999 = vmul.f32 %v3967, %v3967
  %v4000 = vmul.f32 %v3968, %v3968
  %v4001 = vmul.f32 %v3969, %v3969
  %v4002 = vmul.f32 %v3970, %v3970
  %v4003 = vmul.f32 %v3971, %v3971
  %v4004 = vmul.f32 %v3972, %v3972
  %v4005 = vmul.f32 %v3973, %v3973
  %v4006 = vmul.f32 %v3974, %v3974
  %v4007 = vmul.f32 %v3975, %v3975
  %v4008 = vmul.f32 %v3976, %v3976
  %v4009 = vmul.f32 %v3977, %v3977
  %v4010 = vmul.f32 %v3978, %v3978
  %v4011 = vmul.f32 %v3979, %v3979
  %v4012 = vmul.f32 %v3980, %v3980
  %v4013 = vmul.f32 %v3981, %v3981
  %v4014 = vmul.f32 %v3982, %v3982
  %v4015 = vmul.f32 %v3983, %v3983
  %v4016 = vmul.f32 %v3984, %v3984
  %v4017 = vmul.f32 %v3985, %v3985
  %v4018 = vmul.f32 %v3986, %v3986
  %v4019 = vmul.f32 %v3987, %v3987
  %v4020 = vmul.f32 %v3988, %v3988
  %v4021 = vmul.f32 %v3989, %v3989
  %v4022 = vmul.f32 %v3990, %v3990
  %v4023 = vmul.f32 %v3991, %v3991
  %v4024 = vmul.f32 %v3992, %v3992
  %v4025 = vmul.f32 %v3993, %v3993
  %v4026 = vmul.f32 %v3994, %v3994
  %v4027 = vmul.f32 %v3995, %v3995
  %v4028 = vmul.f32 %v3996, %v3996
  %v4029 = vmul.f32 %v3997, %v3997
  %v4030 = vadd.f32 %v3998, 1.0
  %v4031 = vadd.f32 %v3999, 1.0
  %v4032 = vadd.f32 %v4000, 1.0
  %v4033 = vadd.f32 %v4001, 1.0
  %v4034 = vadd.f32 %v4002, 1.0
  %v4035 = vadd.f32 %v4003, 1.0
  %v4036 = vadd.f32 %v4004, 1.0
  %v4037 = vadd.f32 %v4005, 1.0
  %v4038 = vadd.f32 %v4006, 1.0
  %v4039 = vadd.f32 %v4007, 1.0
  %v4040 = vadd.f32 %v4008, 1.0
  %v4041 = vadd.f32 %v4009, 1.0
  %v4042 = vadd.f32 %v4010, 1.0
  %v4043 = vadd.f32 %v4011, 1.0
  %v4044 = vadd.f32 %v4012, 1.0
  %v4045 = vadd.f32 %v4013, 1.0
  %v4046 = vadd.f32 %v4014, 1.0
  %v4047 = vadd.f32 %v4015, 1.0
  %v4048 = vadd.f32 %v4016, 1.0
  %v4049 = vadd.f32 %v4017, 1.0
  %v4050 = vadd.f32 %v4018, 1.0
  %v4051 = vadd.f32 %v4019, 1.0
  %v4052 = vadd.f32 %v4020, 1.0
  %v4053 = vadd.f32 %v4021, 1.0
  %v4054 = vadd.f32 %v4022, 1.0
  %v4055 = vadd.f32 %v4023, 1.0
  %v4056 = vadd.f32 %v4024, 1.0
  %v4057 = vadd.f32 %v4025, 1.0
  %v4058 = vadd.f32 %v4026, 1.0
  %v4059 = vadd.f32 %v4027, 1.0
  %v4060 = vadd.f32 %v4028, 1.0
  %v4061 = vadd.f32 %v4029, 1.0
  %v4062 = vrsqrt.pop %v4030
  %v4063 = vrsqrt.pop %v4031
  %v4064 = vrsqrt.pop %v4032
  %v4065 = vrsqrt.pop %v4033
  %v4066 = vrsqrt.pop %v4034
  %v4067 = vrsqrt.pop %v4035
  %v4068 = vrsqrt.pop %v4036
  %v4069 = vrsqrt.pop %v4037
  %v4070 = vrsqrt.pop %v4038
  %v4071 = vrsqrt.pop %v4039
  %v4072 = vrsqrt.pop %v4040
  %v4073 = vrsqrt.pop %v4041
  %v4074 = vrsqrt.pop %v4042
  %v4075 = vrsqrt.pop %v4043
  %v4076 = vrsqrt.pop %v4044
  %v4077 = vrsqrt.pop %v4045
  %v4078 = vrsqrt.pop %v4046
  %v4079 = vrsqrt.pop %v4047
  %v4080 = vrsqrt.pop %v4048
  %v4081 = vrsqrt.pop %v4049
  %v4082 = vrsqrt.pop %v4050
  %v4083 = vrsqrt.pop %v4051
  %v4084 = vrsqrt.pop %v4052
  %v4085 = vrsqrt.pop %v4053
  %v4086 = vrsqrt.pop %v4054
  %v4087 = vrsqrt.pop %v4055
  %v4088 = vrsqrt.pop %v4056
  %v4089 = vrsqrt.pop %v4057
  %v4090 = vrsqrt.pop %v4058
  %v4091 = vrsqrt.pop %v4059
  %v4092 = vrsqrt.pop %v4060
  %v4093 = vrsqrt.pop %v4061
  %v4094 = vmul.f32 %v3934, %v4062
  %v4095 = vmul.f32 %v3935, %v4063
  %v4096 = vmul.f32 %v3936, %v4064
  %v4097 = vmul.f32 %v3937, %v4065
  %v4098 = vmul.f32 %v3938, %v4066
  %v4099 = vmul.f32 %v3939, %v4067
  %v4100 = vmul.f32 %v3940, %v4068
  %v4101 = vmul.f32 %v3941, %v4069
  %v4102 = vmul.f32 %v3942, %v4070
  %v4103 = vmul.f32 %v3943, %v4071
  %v4104 = vmul.f32 %v3944, %v4072
  %v4105 = vmul.f32 %v3945, %v4073
  %v4106 = vmul.f32 %v3946, %v4074
  %v4107 = vmul.f32 %v3947, %v4075
  %v4108 = vmul.f32 %v3948, %v4076
  %v4109 = vmul.f32 %v3949, %v4077
  %v4110 = vmul.f32 %v3950, %v4078
  %v4111 = vmul.f32 %v3951, %v4079
  %v4112 = vmul.f32 %v3952, %v4080
  %v4113 = vmul.f32 %v3953, %v4081
  %v4114 = vmul.f32 %v3954, %v4082
  %v4115 = vmul.f32 %v3955, %v4083
  %v4116 = vmul.f32 %v3956, %v4084
  %v4117 = vmul.f32 %v3957, %v4085
  %v4118 = vmul.f32 %v3958, %v4086
  %v4119 = vmul.f32 %v3959, %v4087
  %v4120 = vmul.f32 %v3960, %v4088
  %v4121 = vmul.f32 %v3961, %v4089
  %v4122 = vmul.f32 %v3962, %v4090
  %v4123 = vmul.f32 %v3963, %v4091
  %v4124 = vmul.f32 %v3964, %v4092
  %v4125 = vmul.f32 %v3965, %v4093
  %v4126 = vadd.f32 %v4094, %v4095
  %v4127 = vadd.f32 %v4126, %v4096
  %v4128 = vadd.f32 %v4127, %v4097
  %v4129 = vadd.f32 %v4128, %v4098
  %v4130 = vadd.f32 %v4129, %v4099
  %v4131 = vadd.f32 %v4130, %v4100
  %v4132 = vadd.f32 %v4131, %v4101
  %v4133 = vadd.f32 %v4132, %v4102
  %v4134 = vadd.f32 %v4133, %v4103
  %v4135 = vadd.f32 %v4134, %v4104
  %v4136 = vadd.f32 %v4135, %v4105
  %v4137 = vadd.f32 %v4136, %v4106
  %v4138 = vadd.f32 %v4137, %v4107
  %v4139 = vadd.f32 %v4138, %v4108
  %v4140 = vadd.f32 %v4139, %v4109
  %v4141 = vadd.f32 %v4140, %v4110
  %v4142 = vadd.f32 %v4141, %v4111
  %v4143 = vadd.f32 %v4142, %v4112
  %v4144 = vadd.f32 %v4143, %v4113
  %v4145 = vadd.f32 %v4144, %v4114
  %v4146 = vadd.f32 %v4145, %v4115
  %v4147 = vadd.f32 %v4146, %v4116
  %v4148 = vadd.f32 %v4147, %v4117
  %v4149 = vadd.f32 %v4148, %v4118
  %v4150 = vadd.f32 %v4149, %v4119
  %v4151 = vadd.f32 %v4150, %v4120
  %v4152 = vadd.f32 %v4151, %v4121
  %v4153 = vadd.f32 %v4152, %v4122
  %v4154 = vadd.f32 %v4153, %v4123
  %v4155 = vadd.f32 %v4154, %v4124
  %v4156 = vadd.f32 %v4155, %v4125
  %v4157 = vrot.slane %v4156, 4
  %v4158 = vadd.f32 %v4156, %v4157
  %v4159 = vrot.slane %v4158, 2
  %v4160 = vadd.f32 %v4158, %v4159
  %v4161 = vrot.slane %v4160, 1
  %v4162 = vadd.f32 %v4160, %v4161
  %v4163 = vmul.f32 %v4062, %v4062
  %v4164 = vmul.f32 %v4063, %v4063
  %v4165 = vmul.f32 %v4064, %v4064
  %v4166 = vmul.f32 %v4065, %v4065
  %v4167 = vmul.f32 %v4066, %v4066
  %v4168 = vmul.f32 %v4067, %v4067
  %v4169 = vmul.f32 %v4068, %v4068
  %v4170 = vmul.f32 %v4069, %v4069
  %v4171 = vmul.f32 %v4070, %v4070
  %v4172 = vmul.f32 %v4071, %v4071
  %v4173 = vmul.f32 %v4072, %v4072
  %v4174 = vmul.f32 %v4073, %v4073
  %v4175 = vmul.f32 %v4074, %v4074
  %v4176 = vmul.f32 %v4075, %v4075
  %v4177 = vmul.f32 %v4076, %v4076
  %v4178 = vmul.f32 %v4077, %v4077
  %v4179 = vmul.f32 %v4078, %v4078
  %v4180 = vmul.f32 %v4079, %v4079
  %v4181 = vmul.f32 %v4080, %v4080
  %v4182 = vmul.f32 %v4081, %v4081
  %v4183 = vmul.f32 %v4082, %v4082
  %v4184 = vmul.f32 %v4083, %v4083
  %v4185 = vmul.f32 %v4084, %v4084
  %v4186 = vmul.f32 %v4085, %v4085
  %v4187 = vmul.f32 %v4086, %v4086
  %v4188 = vmul.f32 %v4087, %v4087
  %v4189 = vmul.f32 %v4088, %v4088
  %v4190 = vmul.f32 %v4089, %v4089
  %v4191 = vmul.f32 %v4090, %v4090
  %v4192 = vmul.f32 %v4091, %v4091
  %v4193 = vmul.f32 %v4092, %v4092
  %v4194 = vmul.f32 %v4093, %v4093
  %v4195 = vmul.f32 %v4163, %v4062
  %v4196 = vmul.f32 %v4164, %v4063
  %v4197 = vmul.f32 %v4165, %v4064
  %v4198 = vmul.f32 %v4166, %v4065
  %v4199 = vmul.f32 %v4167, %v4066
  %v4200 = vmul.f32 %v4168, %v4067
  %v4201 = vmul.f32 %v4169, %v4068
  %v4202 = vmul.f32 %v4170, %v4069
  %v4203 = vmul.f32 %v4171, %v4070
  %v4204 = vmul.f32 %v4172, %v4071
  %v4205 = vmul.f32 %v4173, %v4072
  %v4206 = vmul.f32 %v4174, %v4073
  %v4207 = vmul.f32 %v4175, %v4074
  %v4208 = vmul.f32 %v4176, %v4075
  %v4209 = vmul.f32 %v4177, %v4076
  %v4210 = vmul.f32 %v4178, %v4077
  %v4211 = vmul.f32 %v4179, %v4078
  %v4212 = vmul.f32 %v4180, %v4079
  %v4213 = vmul.f32 %v4181, %v4080
  %v4214 = vmul.f32 %v4182, %v4081
  %v4215 = vmul.f32 %v4183, %v4082
  %v4216 = vmul.f32 %v4184, %v4083
  %v4217 = vmul.f32 %v4185, %v4084
  %v4218 = vmul.f32 %v4186, %v4085
  %v4219 = vmul.f32 %v4187, %v4086
  %v4220 = vmul.f32 %v4188, %v4087
  %v4221 = vmul.f32 %v4189, %v4088
  %v4222 = vmul.f32 %v4190, %v4089
  %v4223 = vmul.f32 %v4191, %v4090
  %v4224 = vmul.f32 %v4192, %v4091
  %v4225 = vmul.f32 %v4193, %v4092
  %v4226 = vmul.f32 %v4194, %v4093
  %v4227 = vadd.f32 %v4195, %v4196
  %v4228 = vadd.f32 %v4227, %v4197
  %v4229 = vadd.f32 %v4228, %v4198
  %v4230 = vadd.f32 %v4229, %v4199
  %v4231 = vadd.f32 %v4230, %v4200
  %v4232 = vadd.f32 %v4231, %v4201
  %v4233 = vadd.f32 %v4232, %v4202
  %v4234 = vadd.f32 %v4233, %v4203
  %v4235 = vadd.f32 %v4234, %v4204
  %v4236 = vadd.f32 %v4235, %v4205
  %v4237 = vadd.f32 %v4236, %v4206
  %v4238 = vadd.f32 %v4237, %v4207
  %v4239 = vadd.f32 %v4238, %v4208
  %v4240 = vadd.f32 %v4239, %v4209
  %v4241 = vadd.f32 %v4240, %v4210
  %v4242 = vadd.f32 %v4241, %v4211
  %v4243 = vadd.f32 %v4242, %v4212
  %v4244 = vadd.f32 %v4243, %v4213
  %v4245 = vadd.f32 %v4244, %v4214
  %v4246 = vadd.f32 %v4245, %v4215
  %v4247 = vadd.f32 %v4246, %v4216
  %v4248 = vadd.f32 %v4247, %v4217
  %v4249 = vadd.f32 %v4248, %v4218
  %v4250 = vadd.f32 %v4249, %v4219
  %v4251 = vadd.f32 %v4250, %v4220
  %v4252 = vadd.f32 %v4251, %v4221
  %v4253 = vadd.f32 %v4252, %v4222
  %v4254 = vadd.f32 %v4253, %v4223
  %v4255 = vadd.f32 %v4254, %v4224
  %v4256 = vadd.f32 %v4255, %v4225
  %v4257 = vadd.f32 %v4256, %v4226
  %v4258 = vrot.slane %v4257, 4
  %v4259 = vadd.f32 %v4257, %v4258
  %v4260 = vrot.slane %v4259, 2
  %v4261 = vadd.f32 %v4259, %v4260
  %v4262 = vrot.slane %v4261, 1
  %v4263 = vadd.f32 %v4261, %v4262
  %vm4264 = vcmp.lt.f32.partialorder %v4162, 0.0
  %v4265 = vsel %vm4264, %v3933, %v3922
  %vm4266 = vcmp.gt.f32.partialorder %v4162, 0.0
  %v4267 = vsel %vm4266, %v3933, %v3924
  %v4268 = vrcp.pop %v4263
  %v4269 = vmul.f32 %v4162, %v4268
  %v4270 = vsub.f32 %v3933, %v4269
  %vm4271 = vcmp.ge.f32.partialorder %v4270, %v4265
  %vm4272 = vcmp.le.f32.partialorder %v4270, %v4267
  %vm4273 = vmand %vm4271, %vm4272
  %v4274 = vadd.f32 %v4265, %v4267
  %v4275 = vmul.f32 %v4274, 0.5
  %v4276 = vsel %vm4273, %v4270, %v4275
  %4277 = vst [vmem:[%s2] sm:$0x1] %v4276
  // Predicated region
  $region10: #{robust_global_pool2d.1} parent=0 // pred_check
    _
  $region11: #{robust_global_pool2d.1} parent=0 // pred_check_branch
    %4279 = sbr.rel (0) target = $region13
  $region12: #{robust_global_pool2d.1} parent=0 // pred_region
    _
  $region13: #{robust_global_pool2d.1} parent=0 // pred_fallthru
    _
  // Predicated region
  $region14: #{robust_global_pool2d.1} parent=0 // pred_check
    _
  $region15: #{robust_global_pool2d.1} parent=0 // pred_check_branch
    %4281 = sbr.rel (0) target = $region17
  $region16: #{robust_global_pool2d.1} parent=0 // pred_region
    _
  $region17: #{robust_global_pool2d.1} parent=0 // pred_fallthru
    _

</llo_original>
